<compile_context>
chip_gen: v5e
topology: v5e:2x2
jax: 0.10.0
libtpu: 0.0.40
codegen_flags: <defaults>
</compile_context>

<pallas_src>
import jax
import jax.numpy as jnp
import numpy as np
from jax.experimental import pallas as pl
from jax.experimental.pallas import tpu as pltpu


MXU_DTYPE = jnp.bfloat16   # MXU operand dtype; accumulation is always f32.


# ------------------------------ Fused kernel --------------------------------

def _make_gru_kernel(T, Bp, H, num_layers):
    """Fused kernel: wavefront-interleaved stacked GRU layers + fc1/relu/fc2."""
    L = num_layers

    def kernel(*refs):
        x_ref = refs[0]                                   # (T*Bp, D) time-major, bf16
        layer_refs = refs[1:1 + 4 * L]                    # per layer: wih, whh, bx, bhn
        w1_ref, b1_ref, w2_ref, b2_ref = refs[1 + 4 * L:5 + 4 * L]
        o_ref = refs[5 + 4 * L]                           # (Bp, O_pad) f32
        gx0_ref = refs[6 + 4 * L]                         # (T*Bp, 3H) f32 scratch

        wih = [layer_refs[4 * l + 0] for l in range(L)]   # (in, 3H) bf16, gate order r|z|n
        whh = [layer_refs[4 * l + 1] for l in range(L)]   # (H, 3H) bf16
        bx  = [layer_refs[4 * l + 2] for l in range(L)]   # (1, 3H) f32  (b_ih + [b_hh_rz, 0])
        bhn = [layer_refs[4 * l + 3] for l in range(L)]   # (1, H)  f32  (b_hn, gated by r)

        # Hoisted layer-0 input projection for all T timesteps (one MXU matmul),
        # with b_ih and the r/z part of b_hh already folded in.
        gx0_ref[...] = (
            jnp.dot(x_ref[...], wih[0][...], preferred_element_type=jnp.float32)
            + bx[0][...])

        # Hoisted bias broadcasts (emitted once, reused every unrolled step).
        bx_b  = [jnp.broadcast_to(bx[l][...], (Bp, 3 * H)) for l in range(1, L)]
        bhn_b = [jnp.broadcast_to(bhn[l][...], (Bp, H)) for l in range(L)]

        def gru_step(l, gx_t, h):
            gh = jnp.dot(h.astype(MXU_DTYPE), whh[l][...],
                         preferred_element_type=jnp.float32)       # (Bp, 3H)
            r = jax.nn.sigmoid(gx_t[:, 0:H] + gh[:, 0:H])
            z = jax.nn.sigmoid(gx_t[:, H:2 * H] + gh[:, H:2 * H])
            n = jnp.tanh(gx_t[:, 2 * H:3 * H] + r * (gh[:, 2 * H:3 * H] + bhn_b[l]))
            return (1.0 - z) * n + z * h

        # Wavefront schedule: at step w, layer l processes timestep t = w - l,
        # so layer l only needs layer l-1's output from the PREVIOUS wavefront
        # step.  All h state stays in vregs as traced values.
        h = [jnp.zeros((Bp, H), jnp.float32) for _ in range(L)]
        prev_out = [None] * L
        for w in range(T + L - 1):
            new_prev = list(prev_out)
            for l in range(L):
                t = w - l
                if 0 <= t < T:
                    if l == 0:
                        gx_t = gx0_ref[pl.ds(t * Bp, Bp), :]        # off critical path
                    else:
                        gx_t = (jnp.dot(prev_out[l - 1].astype(MXU_DTYPE), wih[l][...],
                                        preferred_element_type=jnp.float32)
                                + bx_b[l - 1])
                    h[l] = gru_step(l, gx_t, h[l])
                    new_prev[l] = h[l]
            prev_out = new_prev
        # TODO(synk): inter-layer dropout (p=0.1) is a no-op in eval mode; not applied.

        # FC head on the top layer's final hidden state (== gru_out[:, -1, :]).
        fc_h = (jnp.dot(h[L - 1].astype(MXU_DTYPE), w1_ref[...],
                        preferred_element_type=jnp.float32) + b1_ref[...])
        fc_h = jnp.maximum(fc_h, 0.0)                               # ReLU
        o_ref[...] = (jnp.dot(fc_h.astype(MXU_DTYPE), w2_ref[...],
                              preferred_element_type=jnp.float32)
                      + b2_ref[...]).astype(o_ref.dtype)

    return kernel


# ------------------------------ Wrapper --------------------------------------

@jax.jit
def gru_forward(x, params):
    """x: (B, T, D) batch-first. Eval-mode forward matching the PyTorch module."""
    B, T, D = x.shape
    Bp = max(8, ((B + 7) // 8) * 8)                 # pad batch to the 8-sublane width
    L = len(params["gru"])
    H = params["gru"][0]["whh_t"].shape[0]
    O = params["fc"]["w2_t"].shape[1]
    Op = max(128, ((O + 127) // 128) * 128)         # lane-dense FC2 output

    x_tb = jnp.swapaxes(x, 0, 1).astype(jnp.float32)        # (T, B, D) time-major
    if Bp != B:
        x_tb = jnp.pad(x_tb, ((0, 0), (0, Bp - B), (0, 0)))
    x2d = x_tb.reshape(T * Bp, D).astype(MXU_DTYPE)

    args = [x2d]
    for p in params["gru"]:
        bih, bhh = p["bih"], p["bhh"]                       # (1, 3H) each
        # Fold b_ih and the r/z slice of b_hh into the input-projection bias;
        # keep b_hn separate (it is multiplied by r in the GRU update).
        bx = bih + jnp.concatenate(
            [bhh[:, :2 * H], jnp.zeros((1, H), jnp.float32)], axis=1)
        bhn = bhh[:, 2 * H:]
        args += [p["wih_t"].astype(MXU_DTYPE), p["whh_t"].astype(MXU_DTYPE), bx, bhn]

    fc = params["fc"]
    w2p = jnp.pad(fc["w2_t"], ((0, 0), (0, Op - O)))
    b2p = jnp.pad(fc["b2"], ((0, 0), (0, Op - O)))
    args += [fc["w1_t"].astype(MXU_DTYPE), fc["b1"], w2p.astype(MXU_DTYPE), b2p]

    out = pl.pallas_call(
        _make_gru_kernel(T, Bp, H, L),
        out_shape=jax.ShapeDtypeStruct((Bp, Op), jnp.float32),
        scratch_shapes=[
            pltpu.VMEM((T * Bp, 3 * H), jnp.float32),   # hoisted layer-0 input projection
        ],
    )(*args)
    return out[:B, :O]


# ------------------------------ Parameters ------------------------------------

def init_params(key, input_size, hidden_size, num_layers, fc_size, output_size):
    params = {"gru": [], "fc": {}}
    keys = iter(jax.random.split(key, num_layers * 4 + 4))
    k = 1.0 / np.sqrt(hidden_size)
    for layer in range(num_layers):
        in_size = input_size if layer == 0 else hidden_size
        wih = jax.random.uniform(next(keys), (3 * hidden_size, in_size), jnp.float32, -k, k)
        whh = jax.random.uniform(next(keys), (3 * hidden_size, hidden_size), jnp.float32, -k, k)
        bih = jax.random.uniform(next(keys), (3 * hidden_size,), jnp.float32, -k, k)
        bhh = jax.random.uniform(next(keys), (3 * hidden_size,), jnp.float32, -k, k)
        params["gru"].append({
            "wih_t": wih.T,                 # (in, 3H), gate order r|z|n
            "whh_t": whh.T,                 # (H, 3H)
            "bih": bih.reshape(1, -1),
            "bhh": bhh.reshape(1, -1),
        })
    k1 = 1.0 / np.sqrt(hidden_size)
    w1 = jax.random.uniform(next(keys), (fc_size, hidden_size), jnp.float32, -k1, k1)
    b1 = jax.random.uniform(next(keys), (fc_size,), jnp.float32, -k1, k1)
    k2 = 1.0 / np.sqrt(fc_size)
    w2 = jax.random.uniform(next(keys), (output_size, fc_size), jnp.float32, -k2, k2)
    b2 = jax.random.uniform(next(keys), (output_size,), jnp.float32, -k2, k2)
    params["fc"] = {"w1_t": w1.T, "b1": b1.reshape(1, -1),
                    "w2_t": w2.T, "b2": b2.reshape(1, -1)}
    return params


# ------------------------------ Pure-JAX reference ----------------------------

def _gru_layer_ref(x_btd, wih_t, whh_t, bih, bhh, mxu_dtype):
    B, T, _ = x_btd.shape
    H = whh_t.shape[0]
    gx_all = jnp.einsum("btd,dg->btg", x_btd.astype(mxu_dtype), wih_t.astype(mxu_dtype),
                        preferred_element_type=jnp.float32) + bih      # (B, T, 3H)

    def step(h, gx_t):
        gh = jnp.dot(h.astype(mxu_dtype), whh_t.astype(mxu_dtype),
                     preferred_element_type=jnp.float32) + bhh
        r = jax.nn.sigmoid(gx_t[:, :H] + gh[:, :H])
        z = jax.nn.sigmoid(gx_t[:, H:2 * H] + gh[:, H:2 * H])
        n = jnp.tanh(gx_t[:, 2 * H:] + r * gh[:, 2 * H:])
        h = (1.0 - z) * n + z * h
        return h, h

    h0 = jnp.zeros((B, H), jnp.float32)
    _, hs = jax.lax.scan(step, h0, jnp.swapaxes(gx_all, 0, 1))
    return jnp.swapaxes(hs, 0, 1)                                       # (B, T, H)


def gru_ref(x, params, mxu_dtype=jnp.float32):
    layer_in = x.astype(jnp.float32)
    for p in params["gru"]:
        layer_in = _gru_layer_ref(layer_in, p["wih_t"], p["whh_t"],
                                  p["bih"], p["bhh"], mxu_dtype)
    last = layer_in[:, -1, :]
    fc = params["fc"]
    h = jnp.maximum(jnp.dot(last.astype(mxu_dtype), fc["w1_t"].astype(mxu_dtype),
                            preferred_element_type=jnp.float32) + fc["b1"], 0.0)
    return jnp.dot(h.astype(mxu_dtype), fc["w2_t"].astype(mxu_dtype),
                   preferred_element_type=jnp.float32) + fc["b2"]


# ------------------------------ Main ------------------------------------------

if __name__ == "__main__":
    B, T = 2, 8
    input_size, hidden_size, fc_size, output_size, num_layers = 16, 128, 128, 4, 2

    key = jax.random.PRNGKey(0)
    kx, kp = jax.random.split(key)
    x = jax.random.normal(kx, (B, T, input_size), jnp.float32)
    params = init_params(kp, input_size, hidden_size, num_layers, fc_size, output_size)

    out = jax.block_until_ready(gru_forward(x, params))
    assert out.shape == (B, output_size), out.shape

    # Tight check vs a pure-JAX reference using the same bf16 MXU operands,
    # and a looser check vs the exact f32 PyTorch-semantics reference
    # (slack covers bf16-operand rounding through the 8-step recurrence).
    ref_bf16 = jax.block_until_ready(gru_ref(x, params, MXU_DTYPE))
    ref_f32 = jax.block_until_ready(gru_ref(x, params, jnp.float32))
    np.testing.assert_allclose(np.asarray(out), np.asarray(ref_bf16), rtol=2e-3, atol=2e-4)
    np.testing.assert_allclose(np.asarray(out), np.asarray(ref_f32), rtol=3e-2, atol=3e-2)
    print("KERNEL_OK")
</pallas_src>

<mosaic_0001>
module attributes {stable_mosaic.version = 11 : i64} {
  func.func @kernel(%arg0: memref<64x16xbf16, #tpu.memory_space<vmem>>, %arg1: memref<16x384xbf16, #tpu.memory_space<vmem>>, %arg2: memref<128x384xbf16, #tpu.memory_space<vmem>>, %arg3: memref<1x384xf32, #tpu.memory_space<vmem>>, %arg4: memref<1x128xf32, #tpu.memory_space<vmem>>, %arg5: memref<128x384xbf16, #tpu.memory_space<vmem>>, %arg6: memref<128x384xbf16, #tpu.memory_space<vmem>>, %arg7: memref<1x384xf32, #tpu.memory_space<vmem>>, %arg8: memref<1x128xf32, #tpu.memory_space<vmem>>, %arg9: memref<128x128xbf16, #tpu.memory_space<vmem>>, %arg10: memref<1x128xf32, #tpu.memory_space<vmem>>, %arg11: memref<128x128xbf16, #tpu.memory_space<vmem>>, %arg12: memref<1x128xf32, #tpu.memory_space<vmem>>, %arg13: memref<8x128xf32, #tpu.memory_space<vmem>>, %arg14: memref<64x384xf32, #tpu.memory_space<vmem>>) attributes {dimension_semantics = [], scalar_prefetch = 0 : i64, scratch_operands = 1 : i64, tpu.core_type = #tpu.core_type<tc>} {
    %c0 = arith.constant 0 : index
    %c0_0 = arith.constant 0 : index
    %0 = vector.load %arg0[%c0, %c0_0] : memref<64x16xbf16, #tpu.memory_space<vmem>>, vector<64x16xbf16>
    %c0_1 = arith.constant 0 : index
    %c0_2 = arith.constant 0 : index
    %1 = vector.load %arg1[%c0_1, %c0_2] : memref<16x384xbf16, #tpu.memory_space<vmem>>, vector<16x384xbf16>
    %cst = arith.constant dense<0.000000e+00> : vector<64x384xf32>
    %2 = tpu.matmul %0, %1, %cst {dimension_numbers = #tpu.dot_dimension_numbers<[1], [0], [0], [1], [0, 0, 1, 1], [], []>} : vector<64x16xbf16>, vector<16x384xbf16>, vector<64x384xf32> -> vector<64x384xf32>
    %c0_3 = arith.constant 0 : index
    %c0_4 = arith.constant 0 : index
    %3 = vector.load %arg3[%c0_3, %c0_4] : memref<1x384xf32, #tpu.memory_space<vmem>>, vector<1x384xf32>
    %4 = vector.broadcast %3 : vector<1x384xf32> to vector<64x384xf32>
    %5 = arith.addf %2, %4 : vector<64x384xf32>
    %c0_5 = arith.constant 0 : index
    %c0_6 = arith.constant 0 : index
    %6 = vector.load %arg14[%c0_5, %c0_6] : memref<64x384xf32, #tpu.memory_space<vmem>>, vector<64x384xf32>
    tpu.vector_store %arg14[%c0_5, %c0_6], %5 {strides = array<i32>} : memref<64x384xf32, #tpu.memory_space<vmem>>, vector<64x384xf32>,
    %c0_7 = arith.constant 0 : index
    %c0_8 = arith.constant 0 : index
    %7 = vector.load %arg7[%c0_7, %c0_8] : memref<1x384xf32, #tpu.memory_space<vmem>>, vector<1x384xf32>
    %8 = vector.shape_cast %7 : vector<1x384xf32> to vector<1x384xf32>
    %9 = vector.broadcast %8 : vector<1x384xf32> to vector<8x384xf32>
    %c0_9 = arith.constant 0 : index
    %c0_10 = arith.constant 0 : index
    %10 = vector.load %arg4[%c0_9, %c0_10] : memref<1x128xf32, #tpu.memory_space<vmem>>, vector<1x128xf32>
    %11 = vector.shape_cast %10 : vector<1x128xf32> to vector<1x128xf32>
    %12 = vector.broadcast %11 : vector<1x128xf32> to vector<8x128xf32>
    %c0_11 = arith.constant 0 : index
    %c0_12 = arith.constant 0 : index
    %13 = vector.load %arg8[%c0_11, %c0_12] : memref<1x128xf32, #tpu.memory_space<vmem>>, vector<1x128xf32>
    %14 = vector.shape_cast %13 : vector<1x128xf32> to vector<1x128xf32>
    %15 = vector.broadcast %14 : vector<1x128xf32> to vector<8x128xf32>
    %cst_13 = arith.constant 0.000000e+00 : f32
    %16 = vector.broadcast %cst_13 : f32 to vector<8x128xf32>
    %cst_14 = arith.constant 0.000000e+00 : f32
    %17 = vector.broadcast %cst_14 : f32 to vector<8x128xf32>
    %c0_15 = arith.constant 0 : index
    %c0_16 = arith.constant 0 : index
    %18 = vector.load %arg14[%c0_15, %c0_16] : memref<64x384xf32, #tpu.memory_space<vmem>>, vector<8x384xf32>
    %19 = arith.truncf %16 : vector<8x128xf32> to vector<8x128xbf16>
    %c0_17 = arith.constant 0 : index
    %c0_18 = arith.constant 0 : index
    %20 = vector.load %arg2[%c0_17, %c0_18] : memref<128x384xbf16, #tpu.memory_space<vmem>>, vector<128x384xbf16>
    %cst_19 = arith.constant dense<0.000000e+00> : vector<8x384xf32>
    %21 = tpu.matmul %19, %20, %cst_19 {dimension_numbers = #tpu.dot_dimension_numbers<[1], [0], [0], [1], [0, 0, 1, 1], [], []>} : vector<8x128xbf16>, vector<128x384xbf16>, vector<8x384xf32> -> vector<8x384xf32>
    %22 = vector.extract_strided_slice %18 {offsets = [0, 0], sizes = [8, 128], strides = [1, 1]} : vector<8x384xf32> to vector<8x128xf32>
    %23 = vector.extract_strided_slice %21 {offsets = [0, 0], sizes = [8, 128], strides = [1, 1]} : vector<8x384xf32> to vector<8x128xf32>
    %24 = arith.addf %22, %23 : vector<8x128xf32>
    %25 = arith.negf %24 : vector<8x128xf32>
    %26 = math.exp %25 : vector<8x128xf32>
    %cst_20 = arith.constant 1.000000e+00 : f32
    %27 = vector.broadcast %cst_20 : f32 to vector<8x128xf32>
    %28 = arith.addf %27, %26 : vector<8x128xf32>
    %29 = arith.divf %27, %28 : vector<8x128xf32>
    %30 = vector.extract_strided_slice %18 {offsets = [0, 128], sizes = [8, 128], strides = [1, 1]} : vector<8x384xf32> to vector<8x128xf32>
    %31 = vector.extract_strided_slice %21 {offsets = [0, 128], sizes = [8, 128], strides = [1, 1]} : vector<8x384xf32> to vector<8x128xf32>
    %32 = arith.addf %30, %31 : vector<8x128xf32>
    %33 = arith.negf %32 : vector<8x128xf32>
    %34 = math.exp %33 : vector<8x128xf32>
    %cst_21 = arith.constant 1.000000e+00 : f32
    %35 = vector.broadcast %cst_21 : f32 to vector<8x128xf32>
    %36 = arith.addf %35, %34 : vector<8x128xf32>
    %37 = arith.divf %35, %36 : vector<8x128xf32>
    %38 = vector.extract_strided_slice %18 {offsets = [0, 256], sizes = [8, 128], strides = [1, 1]} : vector<8x384xf32> to vector<8x128xf32>
    %39 = vector.extract_strided_slice %21 {offsets = [0, 256], sizes = [8, 128], strides = [1, 1]} : vector<8x384xf32> to vector<8x128xf32>
    %40 = arith.addf %39, %12 : vector<8x128xf32>
    %41 = arith.mulf %29, %40 : vector<8x128xf32>
    %42 = arith.addf %38, %41 : vector<8x128xf32>
    %43 = math.tanh %42 : vector<8x128xf32>
    %cst_22 = arith.constant 1.000000e+00 : f32
    %44 = vector.broadcast %cst_22 : f32 to vector<8x128xf32>
    %45 = arith.subf %44, %37 : vector<8x128xf32>
    %46 = arith.mulf %45, %43 : vector<8x128xf32>
    %47 = arith.mulf %37, %16 : vector<8x128xf32>
    %48 = arith.addf %46, %47 : vector<8x128xf32>
    %c8 = arith.constant 8 : index
    %c0_23 = arith.constant 0 : index
    %49 = vector.load %arg14[%c8, %c0_23] : memref<64x384xf32, #tpu.memory_space<vmem>>, vector<8x384xf32>
    %50 = arith.truncf %48 : vector<8x128xf32> to vector<8x128xbf16>
    %c0_24 = arith.constant 0 : index
    %c0_25 = arith.constant 0 : index
    %51 = vector.load %arg2[%c0_24, %c0_25] : memref<128x384xbf16, #tpu.memory_space<vmem>>, vector<128x384xbf16>
    %cst_26 = arith.constant dense<0.000000e+00> : vector<8x384xf32>
    %52 = tpu.matmul %50, %51, %cst_26 {dimension_numbers = #tpu.dot_dimension_numbers<[1], [0], [0], [1], [0, 0, 1, 1], [], []>} : vector<8x128xbf16>, vector<128x384xbf16>, vector<8x384xf32> -> vector<8x384xf32>
    %53 = vector.extract_strided_slice %49 {offsets = [0, 0], sizes = [8, 128], strides = [1, 1]} : vector<8x384xf32> to vector<8x128xf32>
    %54 = vector.extract_strided_slice %52 {offsets = [0, 0], sizes = [8, 128], strides = [1, 1]} : vector<8x384xf32> to vector<8x128xf32>
    %55 = arith.addf %53, %54 : vector<8x128xf32>
    %56 = arith.negf %55 : vector<8x128xf32>
    %57 = math.exp %56 : vector<8x128xf32>
    %cst_27 = arith.constant 1.000000e+00 : f32
    %58 = vector.broadcast %cst_27 : f32 to vector<8x128xf32>
    %59 = arith.addf %58, %57 : vector<8x128xf32>
    %60 = arith.divf %58, %59 : vector<8x128xf32>
    %61 = vector.extract_strided_slice %49 {offsets = [0, 128], sizes = [8, 128], strides = [1, 1]} : vector<8x384xf32> to vector<8x128xf32>
    %62 = vector.extract_strided_slice %52 {offsets = [0, 128], sizes = [8, 128], strides = [1, 1]} : vector<8x384xf32> to vector<8x128xf32>
    %63 = arith.addf %61, %62 : vector<8x128xf32>
    %64 = arith.negf %63 : vector<8x128xf32>
    %65 = math.exp %64 : vector<8x128xf32>
    %cst_28 = arith.constant 1.000000e+00 : f32
    %66 = vector.broadcast %cst_28 : f32 to vector<8x128xf32>
    %67 = arith.addf %66, %65 : vector<8x128xf32>
    %68 = arith.divf %66, %67 : vector<8x128xf32>
    %69 = vector.extract_strided_slice %49 {offsets = [0, 256], sizes = [8, 128], strides = [1, 1]} : vector<8x384xf32> to vector<8x128xf32>
    %70 = vector.extract_strided_slice %52 {offsets = [0, 256], sizes = [8, 128], strides = [1, 1]} : vector<8x384xf32> to vector<8x128xf32>
    %71 = arith.addf %70, %12 : vector<8x128xf32>
    %72 = arith.mulf %60, %71 : vector<8x128xf32>
    %73 = arith.addf %69, %72 : vector<8x128xf32>
    %74 = math.tanh %73 : vector<8x128xf32>
    %cst_29 = arith.constant 1.000000e+00 : f32
    %75 = vector.broadcast %cst_29 : f32 to vector<8x128xf32>
    %76 = arith.subf %75, %68 : vector<8x128xf32>
    %77 = arith.mulf %76, %74 : vector<8x128xf32>
    %78 = arith.mulf %68, %48 : vector<8x128xf32>
    %79 = arith.addf %77, %78 : vector<8x128xf32>
    %80 = arith.truncf %48 : vector<8x128xf32> to vector<8x128xbf16>
    %c0_30 = arith.constant 0 : index
    %c0_31 = arith.constant 0 : index
    %81 = vector.load %arg5[%c0_30, %c0_31] : memref<128x384xbf16, #tpu.memory_space<vmem>>, vector<128x384xbf16>
    %cst_32 = arith.constant dense<0.000000e+00> : vector<8x384xf32>
    %82 = tpu.matmul %80, %81, %cst_32 {dimension_numbers = #tpu.dot_dimension_numbers<[1], [0], [0], [1], [0, 0, 1, 1], [], []>} : vector<8x128xbf16>, vector<128x384xbf16>, vector<8x384xf32> -> vector<8x384xf32>
    %83 = arith.addf %82, %9 : vector<8x384xf32>
    %84 = arith.truncf %17 : vector<8x128xf32> to vector<8x128xbf16>
    %c0_33 = arith.constant 0 : index
    %c0_34 = arith.constant 0 : index
    %85 = vector.load %arg6[%c0_33, %c0_34] : memref<128x384xbf16, #tpu.memory_space<vmem>>, vector<128x384xbf16>
    %cst_35 = arith.constant dense<0.000000e+00> : vector<8x384xf32>
    %86 = tpu.matmul %84, %85, %cst_35 {dimension_numbers = #tpu.dot_dimension_numbers<[1], [0], [0], [1], [0, 0, 1, 1], [], []>} : vector<8x128xbf16>, vector<128x384xbf16>, vector<8x384xf32> -> vector<8x384xf32>
    %87 = vector.extract_strided_slice %83 {offsets = [0, 0], sizes = [8, 128], strides = [1, 1]} : vector<8x384xf32> to vector<8x128xf32>
    %88 = vector.extract_strided_slice %86 {offsets = [0, 0], sizes = [8, 128], strides = [1, 1]} : vector<8x384xf32> to vector<8x128xf32>
    %89 = arith.addf %87, %88 : vector<8x128xf32>
    %90 = arith.negf %89 : vector<8x128xf32>
    %91 = math.exp %90 : vector<8x128xf32>
    %cst_36 = arith.constant 1.000000e+00 : f32
    %92 = vector.broadcast %cst_36 : f32 to vector<8x128xf32>
    %93 = arith.addf %92, %91 : vector<8x128xf32>
    %94 = arith.divf %92, %93 : vector<8x128xf32>
    %95 = vector.extract_strided_slice %83 {offsets = [0, 128], sizes = [8, 128], strides = [1, 1]} : vector<8x384xf32> to vector<8x128xf32>
    %96 = vector.extract_strided_slice %86 {offsets = [0, 128], sizes = [8, 128], strides = [1, 1]} : vector<8x384xf32> to vector<8x128xf32>
    %97 = arith.addf %95, %96 : vector<8x128xf32>
    %98 = arith.negf %97 : vector<8x128xf32>
    %99 = math.exp %98 : vector<8x128xf32>
    %cst_37 = arith.constant 1.000000e+00 : f32
    %100 = vector.broadcast %cst_37 : f32 to vector<8x128xf32>
    %101 = arith.addf %100, %99 : vector<8x128xf32>
    %102 = arith.divf %100, %101 : vector<8x128xf32>
    %103 = vector.extract_strided_slice %83 {offsets = [0, 256], sizes = [8, 128], strides = [1, 1]} : vector<8x384xf32> to vector<8x128xf32>
    %104 = vector.extract_strided_slice %86 {offsets = [0, 256], sizes = [8, 128], strides = [1, 1]} : vector<8x384xf32> to vector<8x128xf32>
    %105 = arith.addf %104, %15 : vector<8x128xf32>
    %106 = arith.mulf %94, %105 : vector<8x128xf32>
    %107 = arith.addf %103, %106 : vector<8x128xf32>
    %108 = math.tanh %107 : vector<8x128xf32>
    %cst_38 = arith.constant 1.000000e+00 : f32
    %109 = vector.broadcast %cst_38 : f32 to vector<8x128xf32>
    %110 = arith.subf %109, %102 : vector<8x128xf32>
    %111 = arith.mulf %110, %108 : vector<8x128xf32>
    %112 = arith.mulf %102, %17 : vector<8x128xf32>
    %113 = arith.addf %111, %112 : vector<8x128xf32>
    %c16 = arith.constant 16 : index
    %c0_39 = arith.constant 0 : index
    %114 = vector.load %arg14[%c16, %c0_39] : memref<64x384xf32, #tpu.memory_space<vmem>>, vector<8x384xf32>
    %115 = arith.truncf %79 : vector<8x128xf32> to vector<8x128xbf16>
    %c0_40 = arith.constant 0 : index
    %c0_41 = arith.constant 0 : index
    %116 = vector.load %arg2[%c0_40, %c0_41] : memref<128x384xbf16, #tpu.memory_space<vmem>>, vector<128x384xbf16>
    %cst_42 = arith.constant dense<0.000000e+00> : vector<8x384xf32>
    %117 = tpu.matmul %115, %116, %cst_42 {dimension_numbers = #tpu.dot_dimension_numbers<[1], [0], [0], [1], [0, 0, 1, 1], [], []>} : vector<8x128xbf16>, vector<128x384xbf16>, vector<8x384xf32> -> vector<8x384xf32>
    %118 = vector.extract_strided_slice %114 {offsets = [0, 0], sizes = [8, 128], strides = [1, 1]} : vector<8x384xf32> to vector<8x128xf32>
    %119 = vector.extract_strided_slice %117 {offsets = [0, 0], sizes = [8, 128], strides = [1, 1]} : vector<8x384xf32> to vector<8x128xf32>
    %120 = arith.addf %118, %119 : vector<8x128xf32>
    %121 = arith.negf %120 : vector<8x128xf32>
    %122 = math.exp %121 : vector<8x128xf32>
    %cst_43 = arith.constant 1.000000e+00 : f32
    %123 = vector.broadcast %cst_43 : f32 to vector<8x128xf32>
    %124 = arith.addf %123, %122 : vector<8x128xf32>
    %125 = arith.divf %123, %124 : vector<8x128xf32>
    %126 = vector.extract_strided_slice %114 {offsets = [0, 128], sizes = [8, 128], strides = [1, 1]} : vector<8x384xf32> to vector<8x128xf32>
    %127 = vector.extract_strided_slice %117 {offsets = [0, 128], sizes = [8, 128], strides = [1, 1]} : vector<8x384xf32> to vector<8x128xf32>
    %128 = arith.addf %126, %127 : vector<8x128xf32>
    %129 = arith.negf %128 : vector<8x128xf32>
    %130 = math.exp %129 : vector<8x128xf32>
    %cst_44 = arith.constant 1.000000e+00 : f32
    %131 = vector.broadcast %cst_44 : f32 to vector<8x128xf32>
    %132 = arith.addf %131, %130 : vector<8x128xf32>
    %133 = arith.divf %131, %132 : vector<8x128xf32>
    %134 = vector.extract_strided_slice %114 {offsets = [0, 256], sizes = [8, 128], strides = [1, 1]} : vector<8x384xf32> to vector<8x128xf32>
    %135 = vector.extract_strided_slice %117 {offsets = [0, 256], sizes = [8, 128], strides = [1, 1]} : vector<8x384xf32> to vector<8x128xf32>
    %136 = arith.addf %135, %12 : vector<8x128xf32>
    %137 = arith.mulf %125, %136 : vector<8x128xf32>
    %138 = arith.addf %134, %137 : vector<8x128xf32>
    %139 = math.tanh %138 : vector<8x128xf32>
    %cst_45 = arith.constant 1.000000e+00 : f32
    %140 = vector.broadcast %cst_45 : f32 to vector<8x128xf32>
    %141 = arith.subf %140, %133 : vector<8x128xf32>
    %142 = arith.mulf %141, %139 : vector<8x128xf32>
    %143 = arith.mulf %133, %79 : vector<8x128xf32>
    %144 = arith.addf %142, %143 : vector<8x128xf32>
    %145 = arith.truncf %79 : vector<8x128xf32> to vector<8x128xbf16>
    %c0_46 = arith.constant 0 : index
    %c0_47 = arith.constant 0 : index
    %146 = vector.load %arg5[%c0_46, %c0_47] : memref<128x384xbf16, #tpu.memory_space<vmem>>, vector<128x384xbf16>
    %cst_48 = arith.constant dense<0.000000e+00> : vector<8x384xf32>
    %147 = tpu.matmul %145, %146, %cst_48 {dimension_numbers = #tpu.dot_dimension_numbers<[1], [0], [0], [1], [0, 0, 1, 1], [], []>} : vector<8x128xbf16>, vector<128x384xbf16>, vector<8x384xf32> -> vector<8x384xf32>
    %148 = arith.addf %147, %9 : vector<8x384xf32>
    %149 = arith.truncf %113 : vector<8x128xf32> to vector<8x128xbf16>
    %c0_49 = arith.constant 0 : index
    %c0_50 = arith.constant 0 : index
    %150 = vector.load %arg6[%c0_49, %c0_50] : memref<128x384xbf16, #tpu.memory_space<vmem>>, vector<128x384xbf16>
    %cst_51 = arith.constant dense<0.000000e+00> : vector<8x384xf32>
    %151 = tpu.matmul %149, %150, %cst_51 {dimension_numbers = #tpu.dot_dimension_numbers<[1], [0], [0], [1], [0, 0, 1, 1], [], []>} : vector<8x128xbf16>, vector<128x384xbf16>, vector<8x384xf32> -> vector<8x384xf32>
    %152 = vector.extract_strided_slice %148 {offsets = [0, 0], sizes = [8, 128], strides = [1, 1]} : vector<8x384xf32> to vector<8x128xf32>
    %153 = vector.extract_strided_slice %151 {offsets = [0, 0], sizes = [8, 128], strides = [1, 1]} : vector<8x384xf32> to vector<8x128xf32>
    %154 = arith.addf %152, %153 : vector<8x128xf32>
    %155 = arith.negf %154 : vector<8x128xf32>
    %156 = math.exp %155 : vector<8x128xf32>
    %cst_52 = arith.constant 1.000000e+00 : f32
    %157 = vector.broadcast %cst_52 : f32 to vector<8x128xf32>
    %158 = arith.addf %157, %156 : vector<8x128xf32>
    %159 = arith.divf %157, %158 : vector<8x128xf32>
    %160 = vector.extract_strided_slice %148 {offsets = [0, 128], sizes = [8, 128], strides = [1, 1]} : vector<8x384xf32> to vector<8x128xf32>
    %161 = vector.extract_strided_slice %151 {offsets = [0, 128], sizes = [8, 128], strides = [1, 1]} : vector<8x384xf32> to vector<8x128xf32>
    %162 = arith.addf %160, %161 : vector<8x128xf32>
    %163 = arith.negf %162 : vector<8x128xf32>
    %164 = math.exp %163 : vector<8x128xf32>
    %cst_53 = arith.constant 1.000000e+00 : f32
    %165 = vector.broadcast %cst_53 : f32 to vector<8x128xf32>
    %166 = arith.addf %165, %164 : vector<8x128xf32>
    %167 = arith.divf %165, %166 : vector<8x128xf32>
    %168 = vector.extract_strided_slice %148 {offsets = [0, 256], sizes = [8, 128], strides = [1, 1]} : vector<8x384xf32> to vector<8x128xf32>
    %169 = vector.extract_strided_slice %151 {offsets = [0, 256], sizes = [8, 128], strides = [1, 1]} : vector<8x384xf32> to vector<8x128xf32>
    %170 = arith.addf %169, %15 : vector<8x128xf32>
    %171 = arith.mulf %159, %170 : vector<8x128xf32>
    %172 = arith.addf %168, %171 : vector<8x128xf32>
    %173 = math.tanh %172 : vector<8x128xf32>
    %cst_54 = arith.constant 1.000000e+00 : f32
    %174 = vector.broadcast %cst_54 : f32 to vector<8x128xf32>
    %175 = arith.subf %174, %167 : vector<8x128xf32>
    %176 = arith.mulf %175, %173 : vector<8x128xf32>
    %177 = arith.mulf %167, %113 : vector<8x128xf32>
    %178 = arith.addf %176, %177 : vector<8x128xf32>
    %c24 = arith.constant 24 : index
    %c0_55 = arith.constant 0 : index
    %179 = vector.load %arg14[%c24, %c0_55] : memref<64x384xf32, #tpu.memory_space<vmem>>, vector<8x384xf32>
    %180 = arith.truncf %144 : vector<8x128xf32> to vector<8x128xbf16>
    %c0_56 = arith.constant 0 : index
    %c0_57 = arith.constant 0 : index
    %181 = vector.load %arg2[%c0_56, %c0_57] : memref<128x384xbf16, #tpu.memory_space<vmem>>, vector<128x384xbf16>
    %cst_58 = arith.constant dense<0.000000e+00> : vector<8x384xf32>
    %182 = tpu.matmul %180, %181, %cst_58 {dimension_numbers = #tpu.dot_dimension_numbers<[1], [0], [0], [1], [0, 0, 1, 1], [], []>} : vector<8x128xbf16>, vector<128x384xbf16>, vector<8x384xf32> -> vector<8x384xf32>
    %183 = vector.extract_strided_slice %179 {offsets = [0, 0], sizes = [8, 128], strides = [1, 1]} : vector<8x384xf32> to vector<8x128xf32>
    %184 = vector.extract_strided_slice %182 {offsets = [0, 0], sizes = [8, 128], strides = [1, 1]} : vector<8x384xf32> to vector<8x128xf32>
    %185 = arith.addf %183, %184 : vector<8x128xf32>
    %186 = arith.negf %185 : vector<8x128xf32>
    %187 = math.exp %186 : vector<8x128xf32>
    %cst_59 = arith.constant 1.000000e+00 : f32
    %188 = vector.broadcast %cst_59 : f32 to vector<8x128xf32>
    %189 = arith.addf %188, %187 : vector<8x128xf32>
    %190 = arith.divf %188, %189 : vector<8x128xf32>
    %191 = vector.extract_strided_slice %179 {offsets = [0, 128], sizes = [8, 128], strides = [1, 1]} : vector<8x384xf32> to vector<8x128xf32>
    %192 = vector.extract_strided_slice %182 {offsets = [0, 128], sizes = [8, 128], strides = [1, 1]} : vector<8x384xf32> to vector<8x128xf32>
    %193 = arith.addf %191, %192 : vector<8x128xf32>
    %194 = arith.negf %193 : vector<8x128xf32>
    %195 = math.exp %194 : vector<8x128xf32>
    %cst_60 = arith.constant 1.000000e+00 : f32
    %196 = vector.broadcast %cst_60 : f32 to vector<8x128xf32>
    %197 = arith.addf %196, %195 : vector<8x128xf32>
    %198 = arith.divf %196, %197 : vector<8x128xf32>
    %199 = vector.extract_strided_slice %179 {offsets = [0, 256], sizes = [8, 128], strides = [1, 1]} : vector<8x384xf32> to vector<8x128xf32>
    %200 = vector.extract_strided_slice %182 {offsets = [0, 256], sizes = [8, 128], strides = [1, 1]} : vector<8x384xf32> to vector<8x128xf32>
    %201 = arith.addf %200, %12 : vector<8x128xf32>
    %202 = arith.mulf %190, %201 : vector<8x128xf32>
    %203 = arith.addf %199, %202 : vector<8x128xf32>
    %204 = math.tanh %203 : vector<8x128xf32>
    %cst_61 = arith.constant 1.000000e+00 : f32
    %205 = vector.broadcast %cst_61 : f32 to vector<8x128xf32>
    %206 = arith.subf %205, %198 : vector<8x128xf32>
    %207 = arith.mulf %206, %204 : vector<8x128xf32>
    %208 = arith.mulf %198, %144 : vector<8x128xf32>
    %209 = arith.addf %207, %208 : vector<8x128xf32>
    %210 = arith.truncf %144 : vector<8x128xf32> to vector<8x128xbf16>
    %c0_62 = arith.constant 0 : index
    %c0_63 = arith.constant 0 : index
    %211 = vector.load %arg5[%c0_62, %c0_63] : memref<128x384xbf16, #tpu.memory_space<vmem>>, vector<128x384xbf16>
    %cst_64 = arith.constant dense<0.000000e+00> : vector<8x384xf32>
    %212 = tpu.matmul %210, %211, %cst_64 {dimension_numbers = #tpu.dot_dimension_numbers<[1], [0], [0], [1], [0, 0, 1, 1], [], []>} : vector<8x128xbf16>, vector<128x384xbf16>, vector<8x384xf32> -> vector<8x384xf32>
    %213 = arith.addf %212, %9 : vector<8x384xf32>
    %214 = arith.truncf %178 : vector<8x128xf32> to vector<8x128xbf16>
    %c0_65 = arith.constant 0 : index
    %c0_66 = arith.constant 0 : index
    %215 = vector.load %arg6[%c0_65, %c0_66] : memref<128x384xbf16, #tpu.memory_space<vmem>>, vector<128x384xbf16>
    %cst_67 = arith.constant dense<0.000000e+00> : vector<8x384xf32>
    %216 = tpu.matmul %214, %215, %cst_67 {dimension_numbers = #tpu.dot_dimension_numbers<[1], [0], [0], [1], [0, 0, 1, 1], [], []>} : vector<8x128xbf16>, vector<128x384xbf16>, vector<8x384xf32> -> vector<8x384xf32>
    %217 = vector.extract_strided_slice %213 {offsets = [0, 0], sizes = [8, 128], strides = [1, 1]} : vector<8x384xf32> to vector<8x128xf32>
    %218 = vector.extract_strided_slice %216 {offsets = [0, 0], sizes = [8, 128], strides = [1, 1]} : vector<8x384xf32> to vector<8x128xf32>
    %219 = arith.addf %217, %218 : vector<8x128xf32>
    %220 = arith.negf %219 : vector<8x128xf32>
    %221 = math.exp %220 : vector<8x128xf32>
    %cst_68 = arith.constant 1.000000e+00 : f32
    %222 = vector.broadcast %cst_68 : f32 to vector<8x128xf32>
    %223 = arith.addf %222, %221 : vector<8x128xf32>
    %224 = arith.divf %222, %223 : vector<8x128xf32>
    %225 = vector.extract_strided_slice %213 {offsets = [0, 128], sizes = [8, 128], strides = [1, 1]} : vector<8x384xf32> to vector<8x128xf32>
    %226 = vector.extract_strided_slice %216 {offsets = [0, 128], sizes = [8, 128], strides = [1, 1]} : vector<8x384xf32> to vector<8x128xf32>
    %227 = arith.addf %225, %226 : vector<8x128xf32>
    %228 = arith.negf %227 : vector<8x128xf32>
    %229 = math.exp %228 : vector<8x128xf32>
    %cst_69 = arith.constant 1.000000e+00 : f32
    %230 = vector.broadcast %cst_69 : f32 to vector<8x128xf32>
    %231 = arith.addf %230, %229 : vector<8x128xf32>
    %232 = arith.divf %230, %231 : vector<8x128xf32>
    %233 = vector.extract_strided_slice %213 {offsets = [0, 256], sizes = [8, 128], strides = [1, 1]} : vector<8x384xf32> to vector<8x128xf32>
    %234 = vector.extract_strided_slice %216 {offsets = [0, 256], sizes = [8, 128], strides = [1, 1]} : vector<8x384xf32> to vector<8x128xf32>
    %235 = arith.addf %234, %15 : vector<8x128xf32>
    %236 = arith.mulf %224, %235 : vector<8x128xf32>
    %237 = arith.addf %233, %236 : vector<8x128xf32>
    %238 = math.tanh %237 : vector<8x128xf32>
    %cst_70 = arith.constant 1.000000e+00 : f32
    %239 = vector.broadcast %cst_70 : f32 to vector<8x128xf32>
    %240 = arith.subf %239, %232 : vector<8x128xf32>
    %241 = arith.mulf %240, %238 : vector<8x128xf32>
    %242 = arith.mulf %232, %178 : vector<8x128xf32>
    %243 = arith.addf %241, %242 : vector<8x128xf32>
    %c32 = arith.constant 32 : index
    %c0_71 = arith.constant 0 : index
    %244 = vector.load %arg14[%c32, %c0_71] : memref<64x384xf32, #tpu.memory_space<vmem>>, vector<8x384xf32>
    %245 = arith.truncf %209 : vector<8x128xf32> to vector<8x128xbf16>
    %c0_72 = arith.constant 0 : index
    %c0_73 = arith.constant 0 : index
    %246 = vector.load %arg2[%c0_72, %c0_73] : memref<128x384xbf16, #tpu.memory_space<vmem>>, vector<128x384xbf16>
    %cst_74 = arith.constant dense<0.000000e+00> : vector<8x384xf32>
    %247 = tpu.matmul %245, %246, %cst_74 {dimension_numbers = #tpu.dot_dimension_numbers<[1], [0], [0], [1], [0, 0, 1, 1], [], []>} : vector<8x128xbf16>, vector<128x384xbf16>, vector<8x384xf32> -> vector<8x384xf32>
    %248 = vector.extract_strided_slice %244 {offsets = [0, 0], sizes = [8, 128], strides = [1, 1]} : vector<8x384xf32> to vector<8x128xf32>
    %249 = vector.extract_strided_slice %247 {offsets = [0, 0], sizes = [8, 128], strides = [1, 1]} : vector<8x384xf32> to vector<8x128xf32>
    %250 = arith.addf %248, %249 : vector<8x128xf32>
    %251 = arith.negf %250 : vector<8x128xf32>
    %252 = math.exp %251 : vector<8x128xf32>
    %cst_75 = arith.constant 1.000000e+00 : f32
    %253 = vector.broadcast %cst_75 : f32 to vector<8x128xf32>
    %254 = arith.addf %253, %252 : vector<8x128xf32>
    %255 = arith.divf %253, %254 : vector<8x128xf32>
    %256 = vector.extract_strided_slice %244 {offsets = [0, 128], sizes = [8, 128], strides = [1, 1]} : vector<8x384xf32> to vector<8x128xf32>
    %257 = vector.extract_strided_slice %247 {offsets = [0, 128], sizes = [8, 128], strides = [1, 1]} : vector<8x384xf32> to vector<8x128xf32>
    %258 = arith.addf %256, %257 : vector<8x128xf32>
    %259 = arith.negf %258 : vector<8x128xf32>
    %260 = math.exp %259 : vector<8x128xf32>
    %cst_76 = arith.constant 1.000000e+00 : f32
    %261 = vector.broadcast %cst_76 : f32 to vector<8x128xf32>
    %262 = arith.addf %261, %260 : vector<8x128xf32>
    %263 = arith.divf %261, %262 : vector<8x128xf32>
    %264 = vector.extract_strided_slice %244 {offsets = [0, 256], sizes = [8, 128], strides = [1, 1]} : vector<8x384xf32> to vector<8x128xf32>
    %265 = vector.extract_strided_slice %247 {offsets = [0, 256], sizes = [8, 128], strides = [1, 1]} : vector<8x384xf32> to vector<8x128xf32>
    %266 = arith.addf %265, %12 : vector<8x128xf32>
    %267 = arith.mulf %255, %266 : vector<8x128xf32>
    %268 = arith.addf %264, %267 : vector<8x128xf32>
    %269 = math.tanh %268 : vector<8x128xf32>
    %cst_77 = arith.constant 1.000000e+00 : f32
    %270 = vector.broadcast %cst_77 : f32 to vector<8x128xf32>
    %271 = arith.subf %270, %263 : vector<8x128xf32>
    %272 = arith.mulf %271, %269 : vector<8x128xf32>
    %273 = arith.mulf %263, %209 : vector<8x128xf32>
    %274 = arith.addf %272, %273 : vector<8x128xf32>
    %275 = arith.truncf %209 : vector<8x128xf32> to vector<8x128xbf16>
    %c0_78 = arith.constant 0 : index
    %c0_79 = arith.constant 0 : index
    %276 = vector.load %arg5[%c0_78, %c0_79] : memref<128x384xbf16, #tpu.memory_space<vmem>>, vector<128x384xbf16>
    %cst_80 = arith.constant dense<0.000000e+00> : vector<8x384xf32>
    %277 = tpu.matmul %275, %276, %cst_80 {dimension_numbers = #tpu.dot_dimension_numbers<[1], [0], [0], [1], [0, 0, 1, 1], [], []>} : vector<8x128xbf16>, vector<128x384xbf16>, vector<8x384xf32> -> vector<8x384xf32>
    %278 = arith.addf %277, %9 : vector<8x384xf32>
    %279 = arith.truncf %243 : vector<8x128xf32> to vector<8x128xbf16>
    %c0_81 = arith.constant 0 : index
    %c0_82 = arith.constant 0 : index
    %280 = vector.load %arg6[%c0_81, %c0_82] : memref<128x384xbf16, #tpu.memory_space<vmem>>, vector<128x384xbf16>
    %cst_83 = arith.constant dense<0.000000e+00> : vector<8x384xf32>
    %281 = tpu.matmul %279, %280, %cst_83 {dimension_numbers = #tpu.dot_dimension_numbers<[1], [0], [0], [1], [0, 0, 1, 1], [], []>} : vector<8x128xbf16>, vector<128x384xbf16>, vector<8x384xf32> -> vector<8x384xf32>
    %282 = vector.extract_strided_slice %278 {offsets = [0, 0], sizes = [8, 128], strides = [1, 1]} : vector<8x384xf32> to vector<8x128xf32>
    %283 = vector.extract_strided_slice %281 {offsets = [0, 0], sizes = [8, 128], strides = [1, 1]} : vector<8x384xf32> to vector<8x128xf32>
    %284 = arith.addf %282, %283 : vector<8x128xf32>
    %285 = arith.negf %284 : vector<8x128xf32>
    %286 = math.exp %285 : vector<8x128xf32>
    %cst_84 = arith.constant 1.000000e+00 : f32
    %287 = vector.broadcast %cst_84 : f32 to vector<8x128xf32>
    %288 = arith.addf %287, %286 : vector<8x128xf32>
    %289 = arith.divf %287, %288 : vector<8x128xf32>
    %290 = vector.extract_strided_slice %278 {offsets = [0, 128], sizes = [8, 128], strides = [1, 1]} : vector<8x384xf32> to vector<8x128xf32>
    %291 = vector.extract_strided_slice %281 {offsets = [0, 128], sizes = [8, 128], strides = [1, 1]} : vector<8x384xf32> to vector<8x128xf32>
    %292 = arith.addf %290, %291 : vector<8x128xf32>
    %293 = arith.negf %292 : vector<8x128xf32>
    %294 = math.exp %293 : vector<8x128xf32>
    %cst_85 = arith.constant 1.000000e+00 : f32
    %295 = vector.broadcast %cst_85 : f32 to vector<8x128xf32>
    %296 = arith.addf %295, %294 : vector<8x128xf32>
    %297 = arith.divf %295, %296 : vector<8x128xf32>
    %298 = vector.extract_strided_slice %278 {offsets = [0, 256], sizes = [8, 128], strides = [1, 1]} : vector<8x384xf32> to vector<8x128xf32>
    %299 = vector.extract_strided_slice %281 {offsets = [0, 256], sizes = [8, 128], strides = [1, 1]} : vector<8x384xf32> to vector<8x128xf32>
    %300 = arith.addf %299, %15 : vector<8x128xf32>
    %301 = arith.mulf %289, %300 : vector<8x128xf32>
    %302 = arith.addf %298, %301 : vector<8x128xf32>
    %303 = math.tanh %302 : vector<8x128xf32>
    %cst_86 = arith.constant 1.000000e+00 : f32
    %304 = vector.broadcast %cst_86 : f32 to vector<8x128xf32>
    %305 = arith.subf %304, %297 : vector<8x128xf32>
    %306 = arith.mulf %305, %303 : vector<8x128xf32>
    %307 = arith.mulf %297, %243 : vector<8x128xf32>
    %308 = arith.addf %306, %307 : vector<8x128xf32>
    %c40 = arith.constant 40 : index
    %c0_87 = arith.constant 0 : index
    %309 = vector.load %arg14[%c40, %c0_87] : memref<64x384xf32, #tpu.memory_space<vmem>>, vector<8x384xf32>
    %310 = arith.truncf %274 : vector<8x128xf32> to vector<8x128xbf16>
    %c0_88 = arith.constant 0 : index
    %c0_89 = arith.constant 0 : index
    %311 = vector.load %arg2[%c0_88, %c0_89] : memref<128x384xbf16, #tpu.memory_space<vmem>>, vector<128x384xbf16>
    %cst_90 = arith.constant dense<0.000000e+00> : vector<8x384xf32>
    %312 = tpu.matmul %310, %311, %cst_90 {dimension_numbers = #tpu.dot_dimension_numbers<[1], [0], [0], [1], [0, 0, 1, 1], [], []>} : vector<8x128xbf16>, vector<128x384xbf16>, vector<8x384xf32> -> vector<8x384xf32>
    %313 = vector.extract_strided_slice %309 {offsets = [0, 0], sizes = [8, 128], strides = [1, 1]} : vector<8x384xf32> to vector<8x128xf32>
    %314 = vector.extract_strided_slice %312 {offsets = [0, 0], sizes = [8, 128], strides = [1, 1]} : vector<8x384xf32> to vector<8x128xf32>
    %315 = arith.addf %313, %314 : vector<8x128xf32>
    %316 = arith.negf %315 : vector<8x128xf32>
    %317 = math.exp %316 : vector<8x128xf32>
    %cst_91 = arith.constant 1.000000e+00 : f32
    %318 = vector.broadcast %cst_91 : f32 to vector<8x128xf32>
    %319 = arith.addf %318, %317 : vector<8x128xf32>
    %320 = arith.divf %318, %319 : vector<8x128xf32>
    %321 = vector.extract_strided_slice %309 {offsets = [0, 128], sizes = [8, 128], strides = [1, 1]} : vector<8x384xf32> to vector<8x128xf32>
    %322 = vector.extract_strided_slice %312 {offsets = [0, 128], sizes = [8, 128], strides = [1, 1]} : vector<8x384xf32> to vector<8x128xf32>
    %323 = arith.addf %321, %322 : vector<8x128xf32>
    %324 = arith.negf %323 : vector<8x128xf32>
    %325 = math.exp %324 : vector<8x128xf32>
    %cst_92 = arith.constant 1.000000e+00 : f32
    %326 = vector.broadcast %cst_92 : f32 to vector<8x128xf32>
    %327 = arith.addf %326, %325 : vector<8x128xf32>
    %328 = arith.divf %326, %327 : vector<8x128xf32>
    %329 = vector.extract_strided_slice %309 {offsets = [0, 256], sizes = [8, 128], strides = [1, 1]} : vector<8x384xf32> to vector<8x128xf32>
    %330 = vector.extract_strided_slice %312 {offsets = [0, 256], sizes = [8, 128], strides = [1, 1]} : vector<8x384xf32> to vector<8x128xf32>
    %331 = arith.addf %330, %12 : vector<8x128xf32>
    %332 = arith.mulf %320, %331 : vector<8x128xf32>
    %333 = arith.addf %329, %332 : vector<8x128xf32>
    %334 = math.tanh %333 : vector<8x128xf32>
    %cst_93 = arith.constant 1.000000e+00 : f32
    %335 = vector.broadcast %cst_93 : f32 to vector<8x128xf32>
    %336 = arith.subf %335, %328 : vector<8x128xf32>
    %337 = arith.mulf %336, %334 : vector<8x128xf32>
    %338 = arith.mulf %328, %274 : vector<8x128xf32>
    %339 = arith.addf %337, %338 : vector<8x128xf32>
    %340 = arith.truncf %274 : vector<8x128xf32> to vector<8x128xbf16>
    %c0_94 = arith.constant 0 : index
    %c0_95 = arith.constant 0 : index
    %341 = vector.load %arg5[%c0_94, %c0_95] : memref<128x384xbf16, #tpu.memory_space<vmem>>, vector<128x384xbf16>
    %cst_96 = arith.constant dense<0.000000e+00> : vector<8x384xf32>
    %342 = tpu.matmul %340, %341, %cst_96 {dimension_numbers = #tpu.dot_dimension_numbers<[1], [0], [0], [1], [0, 0, 1, 1], [], []>} : vector<8x128xbf16>, vector<128x384xbf16>, vector<8x384xf32> -> vector<8x384xf32>
    %343 = arith.addf %342, %9 : vector<8x384xf32>
    %344 = arith.truncf %308 : vector<8x128xf32> to vector<8x128xbf16>
    %c0_97 = arith.constant 0 : index
    %c0_98 = arith.constant 0 : index
    %345 = vector.load %arg6[%c0_97, %c0_98] : memref<128x384xbf16, #tpu.memory_space<vmem>>, vector<128x384xbf16>
    %cst_99 = arith.constant dense<0.000000e+00> : vector<8x384xf32>
    %346 = tpu.matmul %344, %345, %cst_99 {dimension_numbers = #tpu.dot_dimension_numbers<[1], [0], [0], [1], [0, 0, 1, 1], [], []>} : vector<8x128xbf16>, vector<128x384xbf16>, vector<8x384xf32> -> vector<8x384xf32>
    %347 = vector.extract_strided_slice %343 {offsets = [0, 0], sizes = [8, 128], strides = [1, 1]} : vector<8x384xf32> to vector<8x128xf32>
    %348 = vector.extract_strided_slice %346 {offsets = [0, 0], sizes = [8, 128], strides = [1, 1]} : vector<8x384xf32> to vector<8x128xf32>
    %349 = arith.addf %347, %348 : vector<8x128xf32>
    %350 = arith.negf %349 : vector<8x128xf32>
    %351 = math.exp %350 : vector<8x128xf32>
    %cst_100 = arith.constant 1.000000e+00 : f32
    %352 = vector.broadcast %cst_100 : f32 to vector<8x128xf32>
    %353 = arith.addf %352, %351 : vector<8x128xf32>
    %354 = arith.divf %352, %353 : vector<8x128xf32>
    %355 = vector.extract_strided_slice %343 {offsets = [0, 128], sizes = [8, 128], strides = [1, 1]} : vector<8x384xf32> to vector<8x128xf32>
    %356 = vector.extract_strided_slice %346 {offsets = [0, 128], sizes = [8, 128], strides = [1, 1]} : vector<8x384xf32> to vector<8x128xf32>
    %357 = arith.addf %355, %356 : vector<8x128xf32>
    %358 = arith.negf %357 : vector<8x128xf32>
    %359 = math.exp %358 : vector<8x128xf32>
    %cst_101 = arith.constant 1.000000e+00 : f32
    %360 = vector.broadcast %cst_101 : f32 to vector<8x128xf32>
    %361 = arith.addf %360, %359 : vector<8x128xf32>
    %362 = arith.divf %360, %361 : vector<8x128xf32>
    %363 = vector.extract_strided_slice %343 {offsets = [0, 256], sizes = [8, 128], strides = [1, 1]} : vector<8x384xf32> to vector<8x128xf32>
    %364 = vector.extract_strided_slice %346 {offsets = [0, 256], sizes = [8, 128], strides = [1, 1]} : vector<8x384xf32> to vector<8x128xf32>
    %365 = arith.addf %364, %15 : vector<8x128xf32>
    %366 = arith.mulf %354, %365 : vector<8x128xf32>
    %367 = arith.addf %363, %366 : vector<8x128xf32>
    %368 = math.tanh %367 : vector<8x128xf32>
    %cst_102 = arith.constant 1.000000e+00 : f32
    %369 = vector.broadcast %cst_102 : f32 to vector<8x128xf32>
    %370 = arith.subf %369, %362 : vector<8x128xf32>
    %371 = arith.mulf %370, %368 : vector<8x128xf32>
    %372 = arith.mulf %362, %308 : vector<8x128xf32>
    %373 = arith.addf %371, %372 : vector<8x128xf32>
    %c48 = arith.constant 48 : index
    %c0_103 = arith.constant 0 : index
    %374 = vector.load %arg14[%c48, %c0_103] : memref<64x384xf32, #tpu.memory_space<vmem>>, vector<8x384xf32>
    %375 = arith.truncf %339 : vector<8x128xf32> to vector<8x128xbf16>
    %c0_104 = arith.constant 0 : index
    %c0_105 = arith.constant 0 : index
    %376 = vector.load %arg2[%c0_104, %c0_105] : memref<128x384xbf16, #tpu.memory_space<vmem>>, vector<128x384xbf16>
    %cst_106 = arith.constant dense<0.000000e+00> : vector<8x384xf32>
    %377 = tpu.matmul %375, %376, %cst_106 {dimension_numbers = #tpu.dot_dimension_numbers<[1], [0], [0], [1], [0, 0, 1, 1], [], []>} : vector<8x128xbf16>, vector<128x384xbf16>, vector<8x384xf32> -> vector<8x384xf32>
    %378 = vector.extract_strided_slice %374 {offsets = [0, 0], sizes = [8, 128], strides = [1, 1]} : vector<8x384xf32> to vector<8x128xf32>
    %379 = vector.extract_strided_slice %377 {offsets = [0, 0], sizes = [8, 128], strides = [1, 1]} : vector<8x384xf32> to vector<8x128xf32>
    %380 = arith.addf %378, %379 : vector<8x128xf32>
    %381 = arith.negf %380 : vector<8x128xf32>
    %382 = math.exp %381 : vector<8x128xf32>
    %cst_107 = arith.constant 1.000000e+00 : f32
    %383 = vector.broadcast %cst_107 : f32 to vector<8x128xf32>
    %384 = arith.addf %383, %382 : vector<8x128xf32>
    %385 = arith.divf %383, %384 : vector<8x128xf32>
    %386 = vector.extract_strided_slice %374 {offsets = [0, 128], sizes = [8, 128], strides = [1, 1]} : vector<8x384xf32> to vector<8x128xf32>
    %387 = vector.extract_strided_slice %377 {offsets = [0, 128], sizes = [8, 128], strides = [1, 1]} : vector<8x384xf32> to vector<8x128xf32>
    %388 = arith.addf %386, %387 : vector<8x128xf32>
    %389 = arith.negf %388 : vector<8x128xf32>
    %390 = math.exp %389 : vector<8x128xf32>
    %cst_108 = arith.constant 1.000000e+00 : f32
    %391 = vector.broadcast %cst_108 : f32 to vector<8x128xf32>
    %392 = arith.addf %391, %390 : vector<8x128xf32>
    %393 = arith.divf %391, %392 : vector<8x128xf32>
    %394 = vector.extract_strided_slice %374 {offsets = [0, 256], sizes = [8, 128], strides = [1, 1]} : vector<8x384xf32> to vector<8x128xf32>
    %395 = vector.extract_strided_slice %377 {offsets = [0, 256], sizes = [8, 128], strides = [1, 1]} : vector<8x384xf32> to vector<8x128xf32>
    %396 = arith.addf %395, %12 : vector<8x128xf32>
    %397 = arith.mulf %385, %396 : vector<8x128xf32>
    %398 = arith.addf %394, %397 : vector<8x128xf32>
    %399 = math.tanh %398 : vector<8x128xf32>
    %cst_109 = arith.constant 1.000000e+00 : f32
    %400 = vector.broadcast %cst_109 : f32 to vector<8x128xf32>
    %401 = arith.subf %400, %393 : vector<8x128xf32>
    %402 = arith.mulf %401, %399 : vector<8x128xf32>
    %403 = arith.mulf %393, %339 : vector<8x128xf32>
    %404 = arith.addf %402, %403 : vector<8x128xf32>
    %405 = arith.truncf %339 : vector<8x128xf32> to vector<8x128xbf16>
    %c0_110 = arith.constant 0 : index
    %c0_111 = arith.constant 0 : index
    %406 = vector.load %arg5[%c0_110, %c0_111] : memref<128x384xbf16, #tpu.memory_space<vmem>>, vector<128x384xbf16>
    %cst_112 = arith.constant dense<0.000000e+00> : vector<8x384xf32>
    %407 = tpu.matmul %405, %406, %cst_112 {dimension_numbers = #tpu.dot_dimension_numbers<[1], [0], [0], [1], [0, 0, 1, 1], [], []>} : vector<8x128xbf16>, vector<128x384xbf16>, vector<8x384xf32> -> vector<8x384xf32>
    %408 = arith.addf %407, %9 : vector<8x384xf32>
    %409 = arith.truncf %373 : vector<8x128xf32> to vector<8x128xbf16>
    %c0_113 = arith.constant 0 : index
    %c0_114 = arith.constant 0 : index
    %410 = vector.load %arg6[%c0_113, %c0_114] : memref<128x384xbf16, #tpu.memory_space<vmem>>, vector<128x384xbf16>
    %cst_115 = arith.constant dense<0.000000e+00> : vector<8x384xf32>
    %411 = tpu.matmul %409, %410, %cst_115 {dimension_numbers = #tpu.dot_dimension_numbers<[1], [0], [0], [1], [0, 0, 1, 1], [], []>} : vector<8x128xbf16>, vector<128x384xbf16>, vector<8x384xf32> -> vector<8x384xf32>
    %412 = vector.extract_strided_slice %408 {offsets = [0, 0], sizes = [8, 128], strides = [1, 1]} : vector<8x384xf32> to vector<8x128xf32>
    %413 = vector.extract_strided_slice %411 {offsets = [0, 0], sizes = [8, 128], strides = [1, 1]} : vector<8x384xf32> to vector<8x128xf32>
    %414 = arith.addf %412, %413 : vector<8x128xf32>
    %415 = arith.negf %414 : vector<8x128xf32>
    %416 = math.exp %415 : vector<8x128xf32>
    %cst_116 = arith.constant 1.000000e+00 : f32
    %417 = vector.broadcast %cst_116 : f32 to vector<8x128xf32>
    %418 = arith.addf %417, %416 : vector<8x128xf32>
    %419 = arith.divf %417, %418 : vector<8x128xf32>
    %420 = vector.extract_strided_slice %408 {offsets = [0, 128], sizes = [8, 128], strides = [1, 1]} : vector<8x384xf32> to vector<8x128xf32>
    %421 = vector.extract_strided_slice %411 {offsets = [0, 128], sizes = [8, 128], strides = [1, 1]} : vector<8x384xf32> to vector<8x128xf32>
    %422 = arith.addf %420, %421 : vector<8x128xf32>
    %423 = arith.negf %422 : vector<8x128xf32>
    %424 = math.exp %423 : vector<8x128xf32>
    %cst_117 = arith.constant 1.000000e+00 : f32
    %425 = vector.broadcast %cst_117 : f32 to vector<8x128xf32>
    %426 = arith.addf %425, %424 : vector<8x128xf32>
    %427 = arith.divf %425, %426 : vector<8x128xf32>
    %428 = vector.extract_strided_slice %408 {offsets = [0, 256], sizes = [8, 128], strides = [1, 1]} : vector<8x384xf32> to vector<8x128xf32>
    %429 = vector.extract_strided_slice %411 {offsets = [0, 256], sizes = [8, 128], strides = [1, 1]} : vector<8x384xf32> to vector<8x128xf32>
    %430 = arith.addf %429, %15 : vector<8x128xf32>
    %431 = arith.mulf %419, %430 : vector<8x128xf32>
    %432 = arith.addf %428, %431 : vector<8x128xf32>
    %433 = math.tanh %432 : vector<8x128xf32>
    %cst_118 = arith.constant 1.000000e+00 : f32
    %434 = vector.broadcast %cst_118 : f32 to vector<8x128xf32>
    %435 = arith.subf %434, %427 : vector<8x128xf32>
    %436 = arith.mulf %435, %433 : vector<8x128xf32>
    %437 = arith.mulf %427, %373 : vector<8x128xf32>
    %438 = arith.addf %436, %437 : vector<8x128xf32>
    %c56 = arith.constant 56 : index
    %c0_119 = arith.constant 0 : index
    %439 = vector.load %arg14[%c56, %c0_119] : memref<64x384xf32, #tpu.memory_space<vmem>>, vector<8x384xf32>
    %440 = arith.truncf %404 : vector<8x128xf32> to vector<8x128xbf16>
    %c0_120 = arith.constant 0 : index
    %c0_121 = arith.constant 0 : index
    %441 = vector.load %arg2[%c0_120, %c0_121] : memref<128x384xbf16, #tpu.memory_space<vmem>>, vector<128x384xbf16>
    %cst_122 = arith.constant dense<0.000000e+00> : vector<8x384xf32>
    %442 = tpu.matmul %440, %441, %cst_122 {dimension_numbers = #tpu.dot_dimension_numbers<[1], [0], [0], [1], [0, 0, 1, 1], [], []>} : vector<8x128xbf16>, vector<128x384xbf16>, vector<8x384xf32> -> vector<8x384xf32>
    %443 = vector.extract_strided_slice %439 {offsets = [0, 0], sizes = [8, 128], strides = [1, 1]} : vector<8x384xf32> to vector<8x128xf32>
    %444 = vector.extract_strided_slice %442 {offsets = [0, 0], sizes = [8, 128], strides = [1, 1]} : vector<8x384xf32> to vector<8x128xf32>
    %445 = arith.addf %443, %444 : vector<8x128xf32>
    %446 = arith.negf %445 : vector<8x128xf32>
    %447 = math.exp %446 : vector<8x128xf32>
    %cst_123 = arith.constant 1.000000e+00 : f32
    %448 = vector.broadcast %cst_123 : f32 to vector<8x128xf32>
    %449 = arith.addf %448, %447 : vector<8x128xf32>
    %450 = arith.divf %448, %449 : vector<8x128xf32>
    %451 = vector.extract_strided_slice %439 {offsets = [0, 128], sizes = [8, 128], strides = [1, 1]} : vector<8x384xf32> to vector<8x128xf32>
    %452 = vector.extract_strided_slice %442 {offsets = [0, 128], sizes = [8, 128], strides = [1, 1]} : vector<8x384xf32> to vector<8x128xf32>
    %453 = arith.addf %451, %452 : vector<8x128xf32>
    %454 = arith.negf %453 : vector<8x128xf32>
    %455 = math.exp %454 : vector<8x128xf32>
    %cst_124 = arith.constant 1.000000e+00 : f32
    %456 = vector.broadcast %cst_124 : f32 to vector<8x128xf32>
    %457 = arith.addf %456, %455 : vector<8x128xf32>
    %458 = arith.divf %456, %457 : vector<8x128xf32>
    %459 = vector.extract_strided_slice %439 {offsets = [0, 256], sizes = [8, 128], strides = [1, 1]} : vector<8x384xf32> to vector<8x128xf32>
    %460 = vector.extract_strided_slice %442 {offsets = [0, 256], sizes = [8, 128], strides = [1, 1]} : vector<8x384xf32> to vector<8x128xf32>
    %461 = arith.addf %460, %12 : vector<8x128xf32>
    %462 = arith.mulf %450, %461 : vector<8x128xf32>
    %463 = arith.addf %459, %462 : vector<8x128xf32>
    %464 = math.tanh %463 : vector<8x128xf32>
    %cst_125 = arith.constant 1.000000e+00 : f32
    %465 = vector.broadcast %cst_125 : f32 to vector<8x128xf32>
    %466 = arith.subf %465, %458 : vector<8x128xf32>
    %467 = arith.mulf %466, %464 : vector<8x128xf32>
    %468 = arith.mulf %458, %404 : vector<8x128xf32>
    %469 = arith.addf %467, %468 : vector<8x128xf32>
    %470 = arith.truncf %404 : vector<8x128xf32> to vector<8x128xbf16>
    %c0_126 = arith.constant 0 : index
    %c0_127 = arith.constant 0 : index
    %471 = vector.load %arg5[%c0_126, %c0_127] : memref<128x384xbf16, #tpu.memory_space<vmem>>, vector<128x384xbf16>
    %cst_128 = arith.constant dense<0.000000e+00> : vector<8x384xf32>
    %472 = tpu.matmul %470, %471, %cst_128 {dimension_numbers = #tpu.dot_dimension_numbers<[1], [0], [0], [1], [0, 0, 1, 1], [], []>} : vector<8x128xbf16>, vector<128x384xbf16>, vector<8x384xf32> -> vector<8x384xf32>
    %473 = arith.addf %472, %9 : vector<8x384xf32>
    %474 = arith.truncf %438 : vector<8x128xf32> to vector<8x128xbf16>
    %c0_129 = arith.constant 0 : index
    %c0_130 = arith.constant 0 : index
    %475 = vector.load %arg6[%c0_129, %c0_130] : memref<128x384xbf16, #tpu.memory_space<vmem>>, vector<128x384xbf16>
    %cst_131 = arith.constant dense<0.000000e+00> : vector<8x384xf32>
    %476 = tpu.matmul %474, %475, %cst_131 {dimension_numbers = #tpu.dot_dimension_numbers<[1], [0], [0], [1], [0, 0, 1, 1], [], []>} : vector<8x128xbf16>, vector<128x384xbf16>, vector<8x384xf32> -> vector<8x384xf32>
    %477 = vector.extract_strided_slice %473 {offsets = [0, 0], sizes = [8, 128], strides = [1, 1]} : vector<8x384xf32> to vector<8x128xf32>
    %478 = vector.extract_strided_slice %476 {offsets = [0, 0], sizes = [8, 128], strides = [1, 1]} : vector<8x384xf32> to vector<8x128xf32>
    %479 = arith.addf %477, %478 : vector<8x128xf32>
    %480 = arith.negf %479 : vector<8x128xf32>
    %481 = math.exp %480 : vector<8x128xf32>
    %cst_132 = arith.constant 1.000000e+00 : f32
    %482 = vector.broadcast %cst_132 : f32 to vector<8x128xf32>
    %483 = arith.addf %482, %481 : vector<8x128xf32>
    %484 = arith.divf %482, %483 : vector<8x128xf32>
    %485 = vector.extract_strided_slice %473 {offsets = [0, 128], sizes = [8, 128], strides = [1, 1]} : vector<8x384xf32> to vector<8x128xf32>
    %486 = vector.extract_strided_slice %476 {offsets = [0, 128], sizes = [8, 128], strides = [1, 1]} : vector<8x384xf32> to vector<8x128xf32>
    %487 = arith.addf %485, %486 : vector<8x128xf32>
    %488 = arith.negf %487 : vector<8x128xf32>
    %489 = math.exp %488 : vector<8x128xf32>
    %cst_133 = arith.constant 1.000000e+00 : f32
    %490 = vector.broadcast %cst_133 : f32 to vector<8x128xf32>
    %491 = arith.addf %490, %489 : vector<8x128xf32>
    %492 = arith.divf %490, %491 : vector<8x128xf32>
    %493 = vector.extract_strided_slice %473 {offsets = [0, 256], sizes = [8, 128], strides = [1, 1]} : vector<8x384xf32> to vector<8x128xf32>
    %494 = vector.extract_strided_slice %476 {offsets = [0, 256], sizes = [8, 128], strides = [1, 1]} : vector<8x384xf32> to vector<8x128xf32>
    %495 = arith.addf %494, %15 : vector<8x128xf32>
    %496 = arith.mulf %484, %495 : vector<8x128xf32>
    %497 = arith.addf %493, %496 : vector<8x128xf32>
    %498 = math.tanh %497 : vector<8x128xf32>
    %cst_134 = arith.constant 1.000000e+00 : f32
    %499 = vector.broadcast %cst_134 : f32 to vector<8x128xf32>
    %500 = arith.subf %499, %492 : vector<8x128xf32>
    %501 = arith.mulf %500, %498 : vector<8x128xf32>
    %502 = arith.mulf %492, %438 : vector<8x128xf32>
    %503 = arith.addf %501, %502 : vector<8x128xf32>
    %504 = arith.truncf %469 : vector<8x128xf32> to vector<8x128xbf16>
    %c0_135 = arith.constant 0 : index
    %c0_136 = arith.constant 0 : index
    %505 = vector.load %arg5[%c0_135, %c0_136] : memref<128x384xbf16, #tpu.memory_space<vmem>>, vector<128x384xbf16>
    %cst_137 = arith.constant dense<0.000000e+00> : vector<8x384xf32>
    %506 = tpu.matmul %504, %505, %cst_137 {dimension_numbers = #tpu.dot_dimension_numbers<[1], [0], [0], [1], [0, 0, 1, 1], [], []>} : vector<8x128xbf16>, vector<128x384xbf16>, vector<8x384xf32> -> vector<8x384xf32>
    %507 = arith.addf %506, %9 : vector<8x384xf32>
    %508 = arith.truncf %503 : vector<8x128xf32> to vector<8x128xbf16>
    %c0_138 = arith.constant 0 : index
    %c0_139 = arith.constant 0 : index
    %509 = vector.load %arg6[%c0_138, %c0_139] : memref<128x384xbf16, #tpu.memory_space<vmem>>, vector<128x384xbf16>
    %cst_140 = arith.constant dense<0.000000e+00> : vector<8x384xf32>
    %510 = tpu.matmul %508, %509, %cst_140 {dimension_numbers = #tpu.dot_dimension_numbers<[1], [0], [0], [1], [0, 0, 1, 1], [], []>} : vector<8x128xbf16>, vector<128x384xbf16>, vector<8x384xf32> -> vector<8x384xf32>
    %511 = vector.extract_strided_slice %507 {offsets = [0, 0], sizes = [8, 128], strides = [1, 1]} : vector<8x384xf32> to vector<8x128xf32>
    %512 = vector.extract_strided_slice %510 {offsets = [0, 0], sizes = [8, 128], strides = [1, 1]} : vector<8x384xf32> to vector<8x128xf32>
    %513 = arith.addf %511, %512 : vector<8x128xf32>
    %514 = arith.negf %513 : vector<8x128xf32>
    %515 = math.exp %514 : vector<8x128xf32>
    %cst_141 = arith.constant 1.000000e+00 : f32
    %516 = vector.broadcast %cst_141 : f32 to vector<8x128xf32>
    %517 = arith.addf %516, %515 : vector<8x128xf32>
    %518 = arith.divf %516, %517 : vector<8x128xf32>
    %519 = vector.extract_strided_slice %507 {offsets = [0, 128], sizes = [8, 128], strides = [1, 1]} : vector<8x384xf32> to vector<8x128xf32>
    %520 = vector.extract_strided_slice %510 {offsets = [0, 128], sizes = [8, 128], strides = [1, 1]} : vector<8x384xf32> to vector<8x128xf32>
    %521 = arith.addf %519, %520 : vector<8x128xf32>
    %522 = arith.negf %521 : vector<8x128xf32>
    %523 = math.exp %522 : vector<8x128xf32>
    %cst_142 = arith.constant 1.000000e+00 : f32
    %524 = vector.broadcast %cst_142 : f32 to vector<8x128xf32>
    %525 = arith.addf %524, %523 : vector<8x128xf32>
    %526 = arith.divf %524, %525 : vector<8x128xf32>
    %527 = vector.extract_strided_slice %507 {offsets = [0, 256], sizes = [8, 128], strides = [1, 1]} : vector<8x384xf32> to vector<8x128xf32>
    %528 = vector.extract_strided_slice %510 {offsets = [0, 256], sizes = [8, 128], strides = [1, 1]} : vector<8x384xf32> to vector<8x128xf32>
    %529 = arith.addf %528, %15 : vector<8x128xf32>
    %530 = arith.mulf %518, %529 : vector<8x128xf32>
    %531 = arith.addf %527, %530 : vector<8x128xf32>
    %532 = math.tanh %531 : vector<8x128xf32>
    %cst_143 = arith.constant 1.000000e+00 : f32
    %533 = vector.broadcast %cst_143 : f32 to vector<8x128xf32>
    %534 = arith.subf %533, %526 : vector<8x128xf32>
    %535 = arith.mulf %534, %532 : vector<8x128xf32>
    %536 = arith.mulf %526, %503 : vector<8x128xf32>
    %537 = arith.addf %535, %536 : vector<8x128xf32>
    %538 = arith.truncf %537 : vector<8x128xf32> to vector<8x128xbf16>
    %c0_144 = arith.constant 0 : index
    %c0_145 = arith.constant 0 : index
    %539 = vector.load %arg9[%c0_144, %c0_145] : memref<128x128xbf16, #tpu.memory_space<vmem>>, vector<128x128xbf16>
    %cst_146 = arith.constant dense<0.000000e+00> : vector<8x128xf32>
    %540 = tpu.matmul %538, %539, %cst_146 {dimension_numbers = #tpu.dot_dimension_numbers<[1], [0], [0], [1], [0, 0, 1, 1], [], []>} : vector<8x128xbf16>, vector<128x128xbf16>, vector<8x128xf32> -> vector<8x128xf32>
    %c0_147 = arith.constant 0 : index
    %c0_148 = arith.constant 0 : index
    %541 = vector.load %arg10[%c0_147, %c0_148] : memref<1x128xf32, #tpu.memory_space<vmem>>, vector<1x128xf32>
    %542 = vector.broadcast %541 : vector<1x128xf32> to vector<8x128xf32>
    %543 = arith.addf %540, %542 : vector<8x128xf32>
    %cst_149 = arith.constant 0.000000e+00 : f32
    %544 = vector.broadcast %cst_149 : f32 to vector<8x128xf32>
    %545 = arith.maximumf %543, %544 : vector<8x128xf32>
    %546 = arith.truncf %545 : vector<8x128xf32> to vector<8x128xbf16>
    %c0_150 = arith.constant 0 : index
    %c0_151 = arith.constant 0 : index
    %547 = vector.load %arg11[%c0_150, %c0_151] : memref<128x128xbf16, #tpu.memory_space<vmem>>, vector<128x128xbf16>
    %cst_152 = arith.constant dense<0.000000e+00> : vector<8x128xf32>
    %548 = tpu.matmul %546, %547, %cst_152 {dimension_numbers = #tpu.dot_dimension_numbers<[1], [0], [0], [1], [0, 0, 1, 1], [], []>} : vector<8x128xbf16>, vector<128x128xbf16>, vector<8x128xf32> -> vector<8x128xf32>
    %c0_153 = arith.constant 0 : index
    %c0_154 = arith.constant 0 : index
    %549 = vector.load %arg12[%c0_153, %c0_154] : memref<1x128xf32, #tpu.memory_space<vmem>>, vector<1x128xf32>
    %550 = vector.broadcast %549 : vector<1x128xf32> to vector<8x128xf32>
    %551 = arith.addf %548, %550 : vector<8x128xf32>
    %c0_155 = arith.constant 0 : index
    %c0_156 = arith.constant 0 : index
    %552 = vector.load %arg13[%c0_155, %c0_156] : memref<8x128xf32, #tpu.memory_space<vmem>>, vector<8x128xf32>
    tpu.vector_store %arg13[%c0_155, %c0_156], %551 {strides = array<i32>} : memref<8x128xf32, #tpu.memory_space<vmem>>, vector<8x128xf32>,
    return
  }
}

</mosaic_0001>

<llo_original>
// kernel: gru_forward.1
$region0: #{gru_forward.1}
  #allocation0 [shape = 'u32[]', space=smem, size = 0x4, offset = 0x4, fixed_abs, tag = 'smem constant byte address 0x4 - core index']
  #allocation1 [shape = 'u32[72,128]{1,0:T(1,128)}', space=vmem, size = 0x9000, scoped, tag = 'internal scratch']
  #allocation2 [shape = 'f32[64,384]{1,0:T(8,128)}', space=vmem, size = 0x18000, scoped, tag = 'scratch operand']
  %s0 = inlined_call_operand.vmem [shape: bf16[64,16], index: 0, kind: input, shape index: {}]
  %s1 = inlined_call_operand.vmem [shape: bf16[16,384], index: 1, kind: input, shape index: {}]
  %s2 = inlined_call_operand.vmem [shape: bf16[128,384], index: 2, kind: input, shape index: {}]
  %s3 = inlined_call_operand.vmem [shape: f32[1,384], index: 3, kind: input, shape index: {}]
  %s4 = inlined_call_operand.vmem [shape: f32[1,128], index: 4, kind: input, shape index: {}]
  %s5 = inlined_call_operand.vmem [shape: bf16[128,384], index: 5, kind: input, shape index: {}]
  %s6 = inlined_call_operand.vmem [shape: bf16[128,384], index: 6, kind: input, shape index: {}]
  %s7 = inlined_call_operand.vmem [shape: f32[1,384], index: 7, kind: input, shape index: {}]
  %s8 = inlined_call_operand.vmem [shape: f32[1,128], index: 8, kind: input, shape index: {}]
  %s9 = inlined_call_operand.vmem [shape: bf16[128,128], index: 9, kind: input, shape index: {}]
  %s10 = inlined_call_operand.vmem [shape: f32[1,128], index: 10, kind: input, shape index: {}]
  %s11 = inlined_call_operand.vmem [shape: bf16[128,128], index: 11, kind: input, shape index: {}]
  %s12 = inlined_call_operand.vmem [shape: f32[1,128], index: 12, kind: input, shape index: {}]
  %s13 = inlined_call_operand.vmem [shape: f32[8,128], index: 13, kind: output, shape index: {}]
  %s14 = sld [smem:[#allocation0]]
  $region62: #{gru_forward.1} parent=0
    _
  %s16 = ssub.s32 1, %s14
  %s17 = scalar_select 0, %s16, %s14
  // Predicated region
  $region2: #{gru_forward.1} parent=0 // pred_check
    _
  $region3: #{gru_forward.1} parent=0 // pred_check_branch
    %19 = sbr.rel (0) target = $region5
  $region4: #{gru_forward.1} parent=0 // pred_region
    _
  $region5: #{gru_forward.1} parent=0 // pred_fallthru
    _
  // Predicated region
  $region6: #{gru_forward.1} parent=0 // pred_check
    _
  $region7: #{gru_forward.1} parent=0 // pred_check_branch
    %21 = sbr.rel (0) target = $region9
  $region8: #{gru_forward.1} parent=0 // pred_region
    _
  $region9: #{gru_forward.1} parent=0 // pred_fallthru
    _
  // Predicated region
  $region10: #{gru_forward.1} parent=0 // pred_check
    _
  $region11: #{gru_forward.1} parent=0 // pred_check_branch
    %23 = sbr.rel (0) target = $region13
  $region12: #{gru_forward.1} parent=0 // pred_region
    _
  $region13: #{gru_forward.1} parent=0 // pred_fallthru
    _
  // Predicated region
  $region14: #{gru_forward.1} parent=0 // pred_check
    _
  $region15: #{gru_forward.1} parent=0 // pred_check_branch
    %25 = sbr.rel (0) target = $region17
  $region16: #{gru_forward.1} parent=0 // pred_region
    _
  $region17: #{gru_forward.1} parent=0 // pred_fallthru
    _
  // Predicated region
  $region18: #{gru_forward.1} parent=0 // pred_check
    _
  $region19: #{gru_forward.1} parent=0 // pred_check_branch
    %27 = sbr.rel (0) target = $region21
  $region20: #{gru_forward.1} parent=0 // pred_region
    _
  $region21: #{gru_forward.1} parent=0 // pred_fallthru
    _
  // Predicated region
  $region22: #{gru_forward.1} parent=0 // pred_check
    _
  $region23: #{gru_forward.1} parent=0 // pred_check_branch
    %29 = sbr.rel (0) target = $region25
  $region24: #{gru_forward.1} parent=0 // pred_region
    _
  $region25: #{gru_forward.1} parent=0 // pred_fallthru
    _
  // Predicated region
  $region26: #{gru_forward.1} parent=0 // pred_check
    _
  $region27: #{gru_forward.1} parent=0 // pred_check_branch
    %31 = sbr.rel (0) target = $region29
  $region28: #{gru_forward.1} parent=0 // pred_region
    _
  $region29: #{gru_forward.1} parent=0 // pred_fallthru
    _
  // Predicated region
  $region30: #{gru_forward.1} parent=0 // pred_check
    _
  $region31: #{gru_forward.1} parent=0 // pred_check_branch
    %33 = sbr.rel (0) target = $region33
  $region32: #{gru_forward.1} parent=0 // pred_region
    _
  $region33: #{gru_forward.1} parent=0 // pred_fallthru
    _
  // Predicated region
  $region34: #{gru_forward.1} parent=0 // pred_check
    _
  $region35: #{gru_forward.1} parent=0 // pred_check_branch
    %35 = sbr.rel (0) target = $region37
  $region36: #{gru_forward.1} parent=0 // pred_region
    _
  $region37: #{gru_forward.1} parent=0 // pred_fallthru
    _
  // Predicated region
  $region38: #{gru_forward.1} parent=0 // pred_check
    _
  $region39: #{gru_forward.1} parent=0 // pred_check_branch
    %37 = sbr.rel (0) target = $region41
  $region40: #{gru_forward.1} parent=0 // pred_region
    _
  $region41: #{gru_forward.1} parent=0 // pred_fallthru
    _
  // Predicated region
  $region42: #{gru_forward.1} parent=0 // pred_check
    _
  $region43: #{gru_forward.1} parent=0 // pred_check_branch
    %39 = sbr.rel (0) target = $region45
  $region44: #{gru_forward.1} parent=0 // pred_region
    _
  $region45: #{gru_forward.1} parent=0 // pred_fallthru
    _
  // Predicated region
  $region46: #{gru_forward.1} parent=0 // pred_check
    _
  $region47: #{gru_forward.1} parent=0 // pred_check_branch
    %41 = sbr.rel (0) target = $region49
  $region48: #{gru_forward.1} parent=0 // pred_region
    _
  $region49: #{gru_forward.1} parent=0 // pred_fallthru
    _
  // Predicated region
  $region50: #{gru_forward.1} parent=0 // pred_check
    _
  $region51: #{gru_forward.1} parent=0 // pred_check_branch
    %43 = sbr.rel (0) target = $region53
  $region52: #{gru_forward.1} parent=0 // pred_region
    _
  $region53: #{gru_forward.1} parent=0 // pred_fallthru
    _
  %v45 = vld [vmem:[%s0] sm:$0xf]
  %v46 = vld [vmem:[%s0 + $0x4] sm:$0xf]
  %v47 = vld [vmem:[%s0 + $0x8] sm:$0xf]
  %v48 = vld [vmem:[%s0 + $0xc] sm:$0xf]
  %v49 = vld [vmem:[%s0 + $0x10] sm:$0xf]
  %v50 = vld [vmem:[%s0 + $0x14] sm:$0xf]
  %v51 = vld [vmem:[%s0 + $0x18] sm:$0xf]
  %v52 = vld [vmem:[%s0 + $0x1c] sm:$0xf]
  %v53 = vld [vmem:[%s1] sm:$0xff]
  %v54 = vld [vmem:[%s1 + $0x8] sm:$0xf]
  %v55 = vld [vmem:[%s1 + $0xc] sm:$0xff]
  %v56 = vld [vmem:[%s1 + $0x14] sm:$0xf]
  %v57 = vld [vmem:[%s3] sm:$0x7]
  %v59 = vperm.slane %v57, 0
  %v60 = vperm.slane %v57, 1
  %v61 = vperm.slane %v57, 2
  %v73 = vunpack.c.l.b16 %v45
  %v74 = vunpack.c.l.b16 %v46
  %v75 = vunpack.c.l.b16 %v47
  %v76 = vunpack.c.l.b16 %v48
  %v77 = vunpack.c.l.b16 %v49
  %v78 = vunpack.c.l.b16 %v50
  %v79 = vunpack.c.l.b16 %v51
  %v80 = vunpack.c.l.b16 %v52
  %v81 = vpack.c.b16 %v74, %v73
  %v82 = vpack.c.b16 %v76, %v75
  %v83 = vpack.c.b16 %v78, %v77
  %v84 = vpack.c.b16 %v80, %v79
  %v89 = vunpack.c.l.b16 %v53
  %v90 = vunpack.c.h.b16 %v53
  %v91 = vunpack.c.l.b16 %v54
  %v92 = vunpack.c.l.b16 %v55
  %v93 = vunpack.c.h.b16 %v55
  %v94 = vunpack.c.l.b16 %v56
  %v95 = vpack.c.b16 %v92, %v89
  %v96 = vpack.c.b16 %v93, %v90
  %v97 = vpack.c.b16 %v94, %v91
  %vm101 = vcmask 130048
  %v103 = vsel %vm101, %v81, 0
  %v106 = vsel %vm101, %v82, 0
  %v109 = vsel %vm101, %v83, 0
  %v112 = vsel %vm101, %v84, 0
  %114 = vmatpush.bf16.msra.mxu0 0
  %115 = vmatpush.bf16.msra.mxu0 0
  %116 = vmatpush.bf16.msra.mxu0 0
  %117 = vmatpush.bf16.msra.mxu0 0
  %118 = vmatpush.bf16.msra.mxu0 0
  %119 = vmatpush.bf16.msra.mxu0 0
  %120 = vmatpush.bf16.msra.mxu0 0
  %121 = vmatpush.bf16.msra.mxu0 %v95
  %122 = vmatmul.bf16.gmra.mxu0 %v103
  %v123 = vpop.f32.mrf.mxu0
  %v124 = vadd.f32 %v59, %v123
  %v125 = vpop.f32.mrf.mxu0
  %v126 = vadd.f32 %v59, %v125
  %127 = vmatmul.bf16.gmra.mxu0 %v106
  %v128 = vpop.f32.mrf.mxu0
  %v129 = vadd.f32 %v59, %v128
  %v130 = vpop.f32.mrf.mxu0
  %v131 = vadd.f32 %v59, %v130
  %132 = vmatmul.bf16.gmra.mxu0 %v109
  %v133 = vpop.f32.mrf.mxu0
  %v134 = vadd.f32 %v59, %v133
  %v135 = vpop.f32.mrf.mxu0
  %v136 = vadd.f32 %v59, %v135
  %137 = vmatmul.bf16.gmra.mxu0 %v112
  %v138 = vpop.f32.mrf.mxu0
  %v139 = vadd.f32 %v59, %v138
  %v140 = vpop.f32.mrf.mxu0
  %v141 = vadd.f32 %v59, %v140
  %142 = vdwg.mxu0
  %143 = vmatpush.bf16.msra.mxu0 0
  %144 = vmatpush.bf16.msra.mxu0 0
  %145 = vmatpush.bf16.msra.mxu0 0
  %146 = vmatpush.bf16.msra.mxu0 0
  %147 = vmatpush.bf16.msra.mxu0 0
  %148 = vmatpush.bf16.msra.mxu0 0
  %149 = vmatpush.bf16.msra.mxu0 0
  %150 = vmatpush.bf16.msra.mxu0 %v96
  %151 = vmatmul.bf16.gmra.mxu0 %v103
  %v152 = vpop.f32.mrf.mxu0
  %v153 = vadd.f32 %v60, %v152
  %v154 = vpop.f32.mrf.mxu0
  %v155 = vadd.f32 %v60, %v154
  %156 = vmatmul.bf16.gmra.mxu0 %v106
  %v157 = vpop.f32.mrf.mxu0
  %v158 = vadd.f32 %v60, %v157
  %v159 = vpop.f32.mrf.mxu0
  %v160 = vadd.f32 %v60, %v159
  %161 = vmatmul.bf16.gmra.mxu0 %v109
  %v162 = vpop.f32.mrf.mxu0
  %v163 = vadd.f32 %v60, %v162
  %v164 = vpop.f32.mrf.mxu0
  %v165 = vadd.f32 %v60, %v164
  %166 = vmatmul.bf16.gmra.mxu0 %v112
  %v167 = vpop.f32.mrf.mxu0
  %v168 = vadd.f32 %v60, %v167
  %v169 = vpop.f32.mrf.mxu0
  %v170 = vadd.f32 %v60, %v169
  %171 = vdwg.mxu0
  %172 = vmatpush.bf16.msra.mxu0 0
  %173 = vmatpush.bf16.msra.mxu0 0
  %174 = vmatpush.bf16.msra.mxu0 0
  %175 = vmatpush.bf16.msra.mxu0 0
  %176 = vmatpush.bf16.msra.mxu0 0
  %177 = vmatpush.bf16.msra.mxu0 0
  %178 = vmatpush.bf16.msra.mxu0 0
  %179 = vmatpush.bf16.msra.mxu0 %v97
  %180 = vmatmul.bf16.gmra.mxu0 %v103
  %v181 = vpop.f32.mrf.mxu0
  %v182 = vadd.f32 %v61, %v181
  %v183 = vpop.f32.mrf.mxu0
  %v184 = vadd.f32 %v61, %v183
  %185 = vmatmul.bf16.gmra.mxu0 %v106
  %v186 = vpop.f32.mrf.mxu0
  %v187 = vadd.f32 %v61, %v186
  %v188 = vpop.f32.mrf.mxu0
  %v189 = vadd.f32 %v61, %v188
  %190 = vmatmul.bf16.gmra.mxu0 %v109
  %v191 = vpop.f32.mrf.mxu0
  %v192 = vadd.f32 %v61, %v191
  %v193 = vpop.f32.mrf.mxu0
  %v194 = vadd.f32 %v61, %v193
  %195 = vmatmul.bf16.gmra.mxu0 %v112
  %v196 = vpop.f32.mrf.mxu0
  %v197 = vadd.f32 %v61, %v196
  %v198 = vpop.f32.mrf.mxu0
  %v199 = vadd.f32 %v61, %v198
  %200 = vdwg.mxu0
  %201 = vst [vmem:[#allocation2] sm:$0xff] %v124
  %202 = vst [vmem:[#allocation2 + $0x8] sm:$0xff] %v153
  %203 = vst [vmem:[#allocation2 + $0x10] sm:$0xff] %v182
  %204 = vst [vmem:[#allocation2 + $0x18] sm:$0xff] %v126
  %205 = vst [vmem:[#allocation2 + $0x20] sm:$0xff] %v155
  %206 = vst [vmem:[#allocation2 + $0x28] sm:$0xff] %v184
  %207 = vst [vmem:[#allocation2 + $0x30] sm:$0xff] %v129
  %208 = vst [vmem:[#allocation2 + $0x38] sm:$0xff] %v158
  %209 = vst [vmem:[#allocation2 + $0x40] sm:$0xff] %v187
  %210 = vst [vmem:[#allocation2 + $0x48] sm:$0xff] %v131
  %211 = vst [vmem:[#allocation2 + $0x50] sm:$0xff] %v160
  %212 = vst [vmem:[#allocation2 + $0x58] sm:$0xff] %v189
  %213 = vst [vmem:[#allocation2 + $0x60] sm:$0xff] %v134
  %214 = vst [vmem:[#allocation2 + $0x68] sm:$0xff] %v163
  %215 = vst [vmem:[#allocation2 + $0x70] sm:$0xff] %v192
  %216 = vst [vmem:[#allocation2 + $0x78] sm:$0xff] %v136
  %217 = vst [vmem:[#allocation2 + $0x80] sm:$0xff] %v165
  %218 = vst [vmem:[#allocation2 + $0x88] sm:$0xff] %v194
  %219 = vst [vmem:[#allocation2 + $0x90] sm:$0xff] %v139
  %220 = vst [vmem:[#allocation2 + $0x98] sm:$0xff] %v168
  %221 = vst [vmem:[#allocation2 + $0xa0] sm:$0xff] %v197
  %222 = vst [vmem:[#allocation2 + $0xa8] sm:$0xff] %v141
  %223 = vst [vmem:[#allocation2 + $0xb0] sm:$0xff] %v170
  %224 = vst [vmem:[#allocation2 + $0xb8] sm:$0xff] %v199
  %v225 = vld [vmem:[%s7] sm:$0x7]
  %v227 = vperm.slane %v225, 0
  %v228 = vperm.slane %v225, 1
  %v229 = vperm.slane %v225, 2
  %v233 = vld [vmem:[%s4] sm:$0x1]
  %v235 = vperm.slane %v233, 0
  %v237 = vld [vmem:[%s8] sm:$0x1]
  %v239 = vperm.slane %v237, 0
  %v241 = vld [vmem:[#allocation2] sm:$0xff]
  %v242 = vld [vmem:[#allocation2 + $0x8] sm:$0xff]
  %v243 = vld [vmem:[#allocation2 + $0x10] sm:$0xff]
  %v244 = vld [vmem:[%s2] sm:$0xff]
  %v245 = vld [vmem:[%s2 + $0x8] sm:$0xf]
  %v246 = vld [vmem:[%s2 + $0xc] sm:$0xff]
  %v247 = vld [vmem:[%s2 + $0x14] sm:$0xf]
  %v248 = vld [vmem:[%s2 + $0x18] sm:$0xff]
  %v249 = vld [vmem:[%s2 + $0x20] sm:$0xf]
  %v250 = vld [vmem:[%s2 + $0x24] sm:$0xff]
  %v251 = vld [vmem:[%s2 + $0x2c] sm:$0xf]
  %v252 = vld [vmem:[%s2 + $0x30] sm:$0xff]
  %v253 = vld [vmem:[%s2 + $0x38] sm:$0xf]
  %v254 = vld [vmem:[%s2 + $0x3c] sm:$0xff]
  %v255 = vld [vmem:[%s2 + $0x44] sm:$0xf]
  %v256 = vld [vmem:[%s2 + $0x48] sm:$0xff]
  %v257 = vld [vmem:[%s2 + $0x50] sm:$0xf]
  %v258 = vld [vmem:[%s2 + $0x54] sm:$0xff]
  %v259 = vld [vmem:[%s2 + $0x5c] sm:$0xf]
  %v260 = vld [vmem:[%s2 + $0x60] sm:$0xff]
  %v261 = vld [vmem:[%s2 + $0x68] sm:$0xf]
  %v262 = vld [vmem:[%s2 + $0x6c] sm:$0xff]
  %v263 = vld [vmem:[%s2 + $0x74] sm:$0xf]
  %v264 = vld [vmem:[%s2 + $0x78] sm:$0xff]
  %v265 = vld [vmem:[%s2 + $0x80] sm:$0xf]
  %v266 = vld [vmem:[%s2 + $0x84] sm:$0xff]
  %v267 = vld [vmem:[%s2 + $0x8c] sm:$0xf]
  %v268 = vld [vmem:[%s2 + $0x90] sm:$0xff]
  %v269 = vld [vmem:[%s2 + $0x98] sm:$0xf]
  %v270 = vld [vmem:[%s2 + $0x9c] sm:$0xff]
  %v271 = vld [vmem:[%s2 + $0xa4] sm:$0xf]
  %v272 = vld [vmem:[%s2 + $0xa8] sm:$0xff]
  %v273 = vld [vmem:[%s2 + $0xb0] sm:$0xf]
  %v274 = vld [vmem:[%s2 + $0xb4] sm:$0xff]
  %v275 = vld [vmem:[%s2 + $0xbc] sm:$0xf]
  %v308 = vunpack.c.l.b16 %v244
  %v309 = vunpack.c.h.b16 %v244
  %v310 = vunpack.c.l.b16 %v245
  %v311 = vunpack.c.l.b16 %v246
  %v312 = vunpack.c.h.b16 %v246
  %v313 = vunpack.c.l.b16 %v247
  %v314 = vunpack.c.l.b16 %v248
  %v315 = vunpack.c.h.b16 %v248
  %v316 = vunpack.c.l.b16 %v249
  %v317 = vunpack.c.l.b16 %v250
  %v318 = vunpack.c.h.b16 %v250
  %v319 = vunpack.c.l.b16 %v251
  %v320 = vunpack.c.l.b16 %v252
  %v321 = vunpack.c.h.b16 %v252
  %v322 = vunpack.c.l.b16 %v253
  %v323 = vunpack.c.l.b16 %v254
  %v324 = vunpack.c.h.b16 %v254
  %v325 = vunpack.c.l.b16 %v255
  %v326 = vunpack.c.l.b16 %v256
  %v327 = vunpack.c.h.b16 %v256
  %v328 = vunpack.c.l.b16 %v257
  %v329 = vunpack.c.l.b16 %v258
  %v330 = vunpack.c.h.b16 %v258
  %v331 = vunpack.c.l.b16 %v259
  %v332 = vunpack.c.l.b16 %v260
  %v333 = vunpack.c.h.b16 %v260
  %v334 = vunpack.c.l.b16 %v261
  %v335 = vunpack.c.l.b16 %v262
  %v336 = vunpack.c.h.b16 %v262
  %v337 = vunpack.c.l.b16 %v263
  %v338 = vunpack.c.l.b16 %v264
  %v339 = vunpack.c.h.b16 %v264
  %v340 = vunpack.c.l.b16 %v265
  %v341 = vunpack.c.l.b16 %v266
  %v342 = vunpack.c.h.b16 %v266
  %v343 = vunpack.c.l.b16 %v267
  %v344 = vunpack.c.l.b16 %v268
  %v345 = vunpack.c.h.b16 %v268
  %v346 = vunpack.c.l.b16 %v269
  %v347 = vunpack.c.l.b16 %v270
  %v348 = vunpack.c.h.b16 %v270
  %v349 = vunpack.c.l.b16 %v271
  %v350 = vunpack.c.l.b16 %v272
  %v351 = vunpack.c.h.b16 %v272
  %v352 = vunpack.c.l.b16 %v273
  %v353 = vunpack.c.l.b16 %v274
  %v354 = vunpack.c.h.b16 %v274
  %v355 = vunpack.c.l.b16 %v275
  %v356 = vpack.c.b16 %v311, %v308
  %v357 = vpack.c.b16 %v312, %v309
  %v358 = vpack.c.b16 %v313, %v310
  %v359 = vpack.c.b16 %v317, %v314
  %v360 = vpack.c.b16 %v318, %v315
  %v361 = vpack.c.b16 %v319, %v316
  %v362 = vpack.c.b16 %v323, %v320
  %v363 = vpack.c.b16 %v324, %v321
  %v364 = vpack.c.b16 %v325, %v322
  %v365 = vpack.c.b16 %v329, %v326
  %v366 = vpack.c.b16 %v330, %v327
  %v367 = vpack.c.b16 %v331, %v328
  %v368 = vpack.c.b16 %v335, %v332
  %v369 = vpack.c.b16 %v336, %v333
  %v370 = vpack.c.b16 %v337, %v334
  %v371 = vpack.c.b16 %v341, %v338
  %v372 = vpack.c.b16 %v342, %v339
  %v373 = vpack.c.b16 %v343, %v340
  %v374 = vpack.c.b16 %v347, %v344
  %v375 = vpack.c.b16 %v348, %v345
  %v376 = vpack.c.b16 %v349, %v346
  %v377 = vpack.c.b16 %v353, %v350
  %v378 = vpack.c.b16 %v354, %v351
  %v379 = vpack.c.b16 %v355, %v352
  %404 = vmatpush.bf16.msra.mxu0 %v377
  %405 = vmatpush.bf16.msra.mxu0 %v374
  %406 = vmatpush.bf16.msra.mxu0 %v371
  %407 = vmatpush.bf16.msra.mxu0 %v368
  %408 = vmatpush.bf16.msra.mxu0 %v365
  %409 = vmatpush.bf16.msra.mxu0 %v362
  %410 = vmatpush.bf16.msra.mxu0 %v359
  %411 = vmatpush.bf16.msra.mxu0 %v356
  %412 = vmatmul.bf16.gmra.mxu0 0
  %v413 = vpop.f32.mrf.mxu0
  %v414 = vadd.f32 0.0, %v413
  %v415 = vpop.f32.mrf.mxu0
  %416 = vdwg.mxu0
  %417 = vmatpush.bf16.msra.mxu0 %v378
  %418 = vmatpush.bf16.msra.mxu0 %v375
  %419 = vmatpush.bf16.msra.mxu0 %v372
  %420 = vmatpush.bf16.msra.mxu0 %v369
  %421 = vmatpush.bf16.msra.mxu0 %v366
  %422 = vmatpush.bf16.msra.mxu0 %v363
  %423 = vmatpush.bf16.msra.mxu0 %v360
  %424 = vmatpush.bf16.msra.mxu0 %v357
  %425 = vmatmul.bf16.gmra.mxu0 0
  %v426 = vpop.f32.mrf.mxu0
  %v427 = vadd.f32 0.0, %v426
  %v428 = vpop.f32.mrf.mxu0
  %429 = vdwg.mxu0
  %430 = vmatpush.bf16.msra.mxu0 %v379
  %431 = vmatpush.bf16.msra.mxu0 %v376
  %432 = vmatpush.bf16.msra.mxu0 %v373
  %433 = vmatpush.bf16.msra.mxu0 %v370
  %434 = vmatpush.bf16.msra.mxu0 %v367
  %435 = vmatpush.bf16.msra.mxu0 %v364
  %436 = vmatpush.bf16.msra.mxu0 %v361
  %437 = vmatpush.bf16.msra.mxu0 %v358
  %438 = vmatmul.bf16.gmra.mxu0 0
  %v439 = vpop.f32.mrf.mxu0
  %v440 = vadd.f32 0.0, %v439
  %v441 = vpop.f32.mrf.mxu0
  %442 = vdwg.mxu0
  %v443 = vadd.f32 %v241, %v414
  %v444 = vxor.u32 %v443, 2147483648
  %v445 = vmul.f32 %v444, 1.442695
  %v446 = vpow.pop %v445
  %v447 = vadd.f32 %v446, 1.0
  %v448 = vrcp.pop %v447
  %v449 = vmul.f32 %v447, %v448
  %v450 = vsub.f32 1.0, %v449
  %v451 = vmul.f32 %v448, %v450
  %v452 = vadd.f32 %v448, %v451
  %vm453 = vweird.f32 %v447
  %vm454 = vweird.f32 %v448
  %vm455 = vmor %vm453, %vm454
  %v456 = vsel %vm455, %v448, %v452
  %v457 = vand.u32 2147483647, %v447
  %vm458 = vcmp.eq.f32.partialorder %v457, 8.507059e+37
  %v459 = vand.u32 %v447, 2147483648
  %v460 = vor.u32 1.1754944e-38, %v459
  %v461 = vsel %vm458, %v460, %v456
  %v462 = vmul.f32 1.0, %v461
  %v463 = vadd.f32 %v242, %v427
  %v464 = vxor.u32 %v463, 2147483648
  %v465 = vmul.f32 %v464, 1.442695
  %v466 = vpow.pop %v465
  %v467 = vadd.f32 %v466, 1.0
  %v468 = vrcp.pop %v467
  %v469 = vmul.f32 %v467, %v468
  %v470 = vsub.f32 1.0, %v469
  %v471 = vmul.f32 %v468, %v470
  %v472 = vadd.f32 %v468, %v471
  %vm473 = vweird.f32 %v467
  %vm474 = vweird.f32 %v468
  %vm475 = vmor %vm473, %vm474
  %v476 = vsel %vm475, %v468, %v472
  %v477 = vand.u32 2147483647, %v467
  %vm478 = vcmp.eq.f32.partialorder %v477, 8.507059e+37
  %v479 = vand.u32 %v467, 2147483648
  %v480 = vor.u32 1.1754944e-38, %v479
  %v481 = vsel %vm478, %v480, %v476
  %v482 = vmul.f32 1.0, %v481
  %v483 = vadd.f32 %v440, %v235
  %v484 = vmul.f32 %v462, %v483
  %v485 = vadd.f32 %v243, %v484
  %v486 = vtanh.pop %v485
  %v487 = vsub.f32 1.0, %v482
  %v488 = vmul.f32 %v487, %v486
  %v489 = vmul.f32 %v482, 0.0
  %v490 = vadd.f32 %v488, %v489
  %v491 = vld [vmem:[#allocation2 + $0x18] sm:$0xff]
  %v492 = vld [vmem:[#allocation2 + $0x20] sm:$0xff]
  %v493 = vld [vmem:[#allocation2 + $0x28] sm:$0xff]
  %v494 = vpack.c.bf16 %v490, %v490
  %495 = vmatpush.bf16.msra.mxu0 %v377
  %496 = vmatpush.bf16.msra.mxu0 %v374
  %497 = vmatpush.bf16.msra.mxu0 %v371
  %498 = vmatpush.bf16.msra.mxu0 %v368
  %499 = vmatpush.bf16.msra.mxu0 %v365
  %500 = vmatpush.bf16.msra.mxu0 %v362
  %501 = vmatpush.bf16.msra.mxu0 %v359
  %502 = vmatpush.bf16.msra.mxu0 %v356
  %503 = vmatmul.bf16.gmra.mxu0 %v494
  %v504 = vpop.f32.mrf.mxu0
  %v505 = vadd.f32 0.0, %v504
  %v506 = vpop.f32.mrf.mxu0
  %507 = vdwg.mxu0
  %508 = vmatpush.bf16.msra.mxu0 %v378
  %509 = vmatpush.bf16.msra.mxu0 %v375
  %510 = vmatpush.bf16.msra.mxu0 %v372
  %511 = vmatpush.bf16.msra.mxu0 %v369
  %512 = vmatpush.bf16.msra.mxu0 %v366
  %513 = vmatpush.bf16.msra.mxu0 %v363
  %514 = vmatpush.bf16.msra.mxu0 %v360
  %515 = vmatpush.bf16.msra.mxu0 %v357
  %516 = vmatmul.bf16.gmra.mxu0 %v494
  %v517 = vpop.f32.mrf.mxu0
  %v518 = vadd.f32 0.0, %v517
  %v519 = vpop.f32.mrf.mxu0
  %520 = vdwg.mxu0
  %521 = vmatpush.bf16.msra.mxu0 %v379
  %522 = vmatpush.bf16.msra.mxu0 %v376
  %523 = vmatpush.bf16.msra.mxu0 %v373
  %524 = vmatpush.bf16.msra.mxu0 %v370
  %525 = vmatpush.bf16.msra.mxu0 %v367
  %526 = vmatpush.bf16.msra.mxu0 %v364
  %527 = vmatpush.bf16.msra.mxu0 %v361
  %528 = vmatpush.bf16.msra.mxu0 %v358
  %529 = vmatmul.bf16.gmra.mxu0 %v494
  %v530 = vpop.f32.mrf.mxu0
  %v531 = vadd.f32 0.0, %v530
  %v532 = vpop.f32.mrf.mxu0
  %533 = vdwg.mxu0
  %v534 = vadd.f32 %v491, %v505
  %v535 = vxor.u32 %v534, 2147483648
  %v536 = vmul.f32 %v535, 1.442695
  %v537 = vpow.pop %v536
  %v538 = vadd.f32 %v537, 1.0
  %v539 = vrcp.pop %v538
  %v540 = vmul.f32 %v538, %v539
  %v541 = vsub.f32 1.0, %v540
  %v542 = vmul.f32 %v539, %v541
  %v543 = vadd.f32 %v539, %v542
  %vm544 = vweird.f32 %v538
  %vm545 = vweird.f32 %v539
  %vm546 = vmor %vm544, %vm545
  %v547 = vsel %vm546, %v539, %v543
  %v548 = vand.u32 2147483647, %v538
  %vm549 = vcmp.eq.f32.partialorder %v548, 8.507059e+37
  %v550 = vand.u32 %v538, 2147483648
  %v551 = vor.u32 1.1754944e-38, %v550
  %v552 = vsel %vm549, %v551, %v547
  %v553 = vmul.f32 1.0, %v552
  %v554 = vadd.f32 %v492, %v518
  %v555 = vxor.u32 %v554, 2147483648
  %v556 = vmul.f32 %v555, 1.442695
  %v557 = vpow.pop %v556
  %v558 = vadd.f32 %v557, 1.0
  %v559 = vrcp.pop %v558
  %v560 = vmul.f32 %v558, %v559
  %v561 = vsub.f32 1.0, %v560
  %v562 = vmul.f32 %v559, %v561
  %v563 = vadd.f32 %v559, %v562
  %vm564 = vweird.f32 %v558
  %vm565 = vweird.f32 %v559
  %vm566 = vmor %vm564, %vm565
  %v567 = vsel %vm566, %v559, %v563
  %v568 = vand.u32 2147483647, %v558
  %vm569 = vcmp.eq.f32.partialorder %v568, 8.507059e+37
  %v570 = vand.u32 %v558, 2147483648
  %v571 = vor.u32 1.1754944e-38, %v570
  %v572 = vsel %vm569, %v571, %v567
  %v573 = vmul.f32 1.0, %v572
  %v574 = vadd.f32 %v531, %v235
  %v575 = vmul.f32 %v553, %v574
  %v576 = vadd.f32 %v493, %v575
  %v577 = vtanh.pop %v576
  %v578 = vsub.f32 1.0, %v573
  %v579 = vmul.f32 %v578, %v577
  %v580 = vmul.f32 %v573, %v490
  %v581 = vadd.f32 %v579, %v580
  %v582 = vld [vmem:[%s5] sm:$0xff]
  %v583 = vld [vmem:[%s5 + $0x8] sm:$0xf]
  %v584 = vld [vmem:[%s5 + $0xc] sm:$0xff]
  %v585 = vld [vmem:[%s5 + $0x14] sm:$0xf]
  %v586 = vld [vmem:[%s5 + $0x18] sm:$0xff]
  %v587 = vld [vmem:[%s5 + $0x20] sm:$0xf]
  %v588 = vld [vmem:[%s5 + $0x24] sm:$0xff]
  %v589 = vld [vmem:[%s5 + $0x2c] sm:$0xf]
  %v590 = vld [vmem:[%s5 + $0x30] sm:$0xff]
  %v591 = vld [vmem:[%s5 + $0x38] sm:$0xf]
  %v592 = vld [vmem:[%s5 + $0x3c] sm:$0xff]
  %v593 = vld [vmem:[%s5 + $0x44] sm:$0xf]
  %v594 = vld [vmem:[%s5 + $0x48] sm:$0xff]
  %v595 = vld [vmem:[%s5 + $0x50] sm:$0xf]
  %v596 = vld [vmem:[%s5 + $0x54] sm:$0xff]
  %v597 = vld [vmem:[%s5 + $0x5c] sm:$0xf]
  %v598 = vld [vmem:[%s5 + $0x60] sm:$0xff]
  %v599 = vld [vmem:[%s5 + $0x68] sm:$0xf]
  %v600 = vld [vmem:[%s5 + $0x6c] sm:$0xff]
  %v601 = vld [vmem:[%s5 + $0x74] sm:$0xf]
  %v602 = vld [vmem:[%s5 + $0x78] sm:$0xff]
  %v603 = vld [vmem:[%s5 + $0x80] sm:$0xf]
  %v604 = vld [vmem:[%s5 + $0x84] sm:$0xff]
  %v605 = vld [vmem:[%s5 + $0x8c] sm:$0xf]
  %v606 = vld [vmem:[%s5 + $0x90] sm:$0xff]
  %v607 = vld [vmem:[%s5 + $0x98] sm:$0xf]
  %v608 = vld [vmem:[%s5 + $0x9c] sm:$0xff]
  %v609 = vld [vmem:[%s5 + $0xa4] sm:$0xf]
  %v610 = vld [vmem:[%s5 + $0xa8] sm:$0xff]
  %v611 = vld [vmem:[%s5 + $0xb0] sm:$0xf]
  %v612 = vld [vmem:[%s5 + $0xb4] sm:$0xff]
  %v613 = vld [vmem:[%s5 + $0xbc] sm:$0xf]
  %v646 = vunpack.c.l.b16 %v582
  %v647 = vunpack.c.h.b16 %v582
  %v648 = vunpack.c.l.b16 %v583
  %v649 = vunpack.c.l.b16 %v584
  %v650 = vunpack.c.h.b16 %v584
  %v651 = vunpack.c.l.b16 %v585
  %v652 = vunpack.c.l.b16 %v586
  %v653 = vunpack.c.h.b16 %v586
  %v654 = vunpack.c.l.b16 %v587
  %v655 = vunpack.c.l.b16 %v588
  %v656 = vunpack.c.h.b16 %v588
  %v657 = vunpack.c.l.b16 %v589
  %v658 = vunpack.c.l.b16 %v590
  %v659 = vunpack.c.h.b16 %v590
  %v660 = vunpack.c.l.b16 %v591
  %v661 = vunpack.c.l.b16 %v592
  %v662 = vunpack.c.h.b16 %v592
  %v663 = vunpack.c.l.b16 %v593
  %v664 = vunpack.c.l.b16 %v594
  %v665 = vunpack.c.h.b16 %v594
  %v666 = vunpack.c.l.b16 %v595
  %v667 = vunpack.c.l.b16 %v596
  %v668 = vunpack.c.h.b16 %v596
  %v669 = vunpack.c.l.b16 %v597
  %v670 = vunpack.c.l.b16 %v598
  %v671 = vunpack.c.h.b16 %v598
  %v672 = vunpack.c.l.b16 %v599
  %v673 = vunpack.c.l.b16 %v600
  %v674 = vunpack.c.h.b16 %v600
  %v675 = vunpack.c.l.b16 %v601
  %v676 = vunpack.c.l.b16 %v602
  %v677 = vunpack.c.h.b16 %v602
  %v678 = vunpack.c.l.b16 %v603
  %v679 = vunpack.c.l.b16 %v604
  %v680 = vunpack.c.h.b16 %v604
  %v681 = vunpack.c.l.b16 %v605
  %v682 = vunpack.c.l.b16 %v606
  %v683 = vunpack.c.h.b16 %v606
  %v684 = vunpack.c.l.b16 %v607
  %v685 = vunpack.c.l.b16 %v608
  %v686 = vunpack.c.h.b16 %v608
  %v687 = vunpack.c.l.b16 %v609
  %v688 = vunpack.c.l.b16 %v610
  %v689 = vunpack.c.h.b16 %v610
  %v690 = vunpack.c.l.b16 %v611
  %v691 = vunpack.c.l.b16 %v612
  %v692 = vunpack.c.h.b16 %v612
  %v693 = vunpack.c.l.b16 %v613
  %v694 = vpack.c.b16 %v649, %v646
  %v695 = vpack.c.b16 %v650, %v647
  %v696 = vpack.c.b16 %v651, %v648
  %v697 = vpack.c.b16 %v655, %v652
  %v698 = vpack.c.b16 %v656, %v653
  %v699 = vpack.c.b16 %v657, %v654
  %v700 = vpack.c.b16 %v661, %v658
  %v701 = vpack.c.b16 %v662, %v659
  %v702 = vpack.c.b16 %v663, %v660
  %v703 = vpack.c.b16 %v667, %v664
  %v704 = vpack.c.b16 %v668, %v665
  %v705 = vpack.c.b16 %v669, %v666
  %v706 = vpack.c.b16 %v673, %v670
  %v707 = vpack.c.b16 %v674, %v671
  %v708 = vpack.c.b16 %v675, %v672
  %v709 = vpack.c.b16 %v679, %v676
  %v710 = vpack.c.b16 %v680, %v677
  %v711 = vpack.c.b16 %v681, %v678
  %v712 = vpack.c.b16 %v685, %v682
  %v713 = vpack.c.b16 %v686, %v683
  %v714 = vpack.c.b16 %v687, %v684
  %v715 = vpack.c.b16 %v691, %v688
  %v716 = vpack.c.b16 %v692, %v689
  %v717 = vpack.c.b16 %v693, %v690
  %742 = vmatpush.bf16.msra.mxu0 %v715
  %743 = vmatpush.bf16.msra.mxu0 %v712
  %744 = vmatpush.bf16.msra.mxu0 %v709
  %745 = vmatpush.bf16.msra.mxu0 %v706
  %746 = vmatpush.bf16.msra.mxu0 %v703
  %747 = vmatpush.bf16.msra.mxu0 %v700
  %748 = vmatpush.bf16.msra.mxu0 %v697
  %749 = vmatpush.bf16.msra.mxu0 %v694
  %750 = vmatmul.bf16.gmra.mxu0 %v494
  %v751 = vpop.f32.mrf.mxu0
  %v752 = vadd.f32 %v227, %v751
  %v753 = vpop.f32.mrf.mxu0
  %754 = vdwg.mxu0
  %755 = vmatpush.bf16.msra.mxu0 %v716
  %756 = vmatpush.bf16.msra.mxu0 %v713
  %757 = vmatpush.bf16.msra.mxu0 %v710
  %758 = vmatpush.bf16.msra.mxu0 %v707
  %759 = vmatpush.bf16.msra.mxu0 %v704
  %760 = vmatpush.bf16.msra.mxu0 %v701
  %761 = vmatpush.bf16.msra.mxu0 %v698
  %762 = vmatpush.bf16.msra.mxu0 %v695
  %763 = vmatmul.bf16.gmra.mxu0 %v494
  %v764 = vpop.f32.mrf.mxu0
  %v765 = vadd.f32 %v228, %v764
  %v766 = vpop.f32.mrf.mxu0
  %767 = vdwg.mxu0
  %768 = vmatpush.bf16.msra.mxu0 %v717
  %769 = vmatpush.bf16.msra.mxu0 %v714
  %770 = vmatpush.bf16.msra.mxu0 %v711
  %771 = vmatpush.bf16.msra.mxu0 %v708
  %772 = vmatpush.bf16.msra.mxu0 %v705
  %773 = vmatpush.bf16.msra.mxu0 %v702
  %774 = vmatpush.bf16.msra.mxu0 %v699
  %775 = vmatpush.bf16.msra.mxu0 %v696
  %776 = vmatmul.bf16.gmra.mxu0 %v494
  %v777 = vpop.f32.mrf.mxu0
  %v778 = vadd.f32 %v229, %v777
  %v779 = vpop.f32.mrf.mxu0
  %780 = vdwg.mxu0
  %v781 = vld [vmem:[%s6] sm:$0xff]
  %v782 = vld [vmem:[%s6 + $0x8] sm:$0xf]
  %v783 = vld [vmem:[%s6 + $0xc] sm:$0xff]
  %v784 = vld [vmem:[%s6 + $0x14] sm:$0xf]
  %v785 = vld [vmem:[%s6 + $0x18] sm:$0xff]
  %v786 = vld [vmem:[%s6 + $0x20] sm:$0xf]
  %v787 = vld [vmem:[%s6 + $0x24] sm:$0xff]
  %v788 = vld [vmem:[%s6 + $0x2c] sm:$0xf]
  %v789 = vld [vmem:[%s6 + $0x30] sm:$0xff]
  %v790 = vld [vmem:[%s6 + $0x38] sm:$0xf]
  %v791 = vld [vmem:[%s6 + $0x3c] sm:$0xff]
  %v792 = vld [vmem:[%s6 + $0x44] sm:$0xf]
  %v793 = vld [vmem:[%s6 + $0x48] sm:$0xff]
  %v794 = vld [vmem:[%s6 + $0x50] sm:$0xf]
  %v795 = vld [vmem:[%s6 + $0x54] sm:$0xff]
  %v796 = vld [vmem:[%s6 + $0x5c] sm:$0xf]
  %v797 = vld [vmem:[%s6 + $0x60] sm:$0xff]
  %v798 = vld [vmem:[%s6 + $0x68] sm:$0xf]
  %v799 = vld [vmem:[%s6 + $0x6c] sm:$0xff]
  %v800 = vld [vmem:[%s6 + $0x74] sm:$0xf]
  %v801 = vld [vmem:[%s6 + $0x78] sm:$0xff]
  %v802 = vld [vmem:[%s6 + $0x80] sm:$0xf]
  %v803 = vld [vmem:[%s6 + $0x84] sm:$0xff]
  %v804 = vld [vmem:[%s6 + $0x8c] sm:$0xf]
  %v805 = vld [vmem:[%s6 + $0x90] sm:$0xff]
  %v806 = vld [vmem:[%s6 + $0x98] sm:$0xf]
  %v807 = vld [vmem:[%s6 + $0x9c] sm:$0xff]
  %v808 = vld [vmem:[%s6 + $0xa4] sm:$0xf]
  %v809 = vld [vmem:[%s6 + $0xa8] sm:$0xff]
  %v810 = vld [vmem:[%s6 + $0xb0] sm:$0xf]
  %v811 = vld [vmem:[%s6 + $0xb4] sm:$0xff]
  %v812 = vld [vmem:[%s6 + $0xbc] sm:$0xf]
  %v845 = vunpack.c.l.b16 %v781
  %v846 = vunpack.c.h.b16 %v781
  %v847 = vunpack.c.l.b16 %v782
  %v848 = vunpack.c.l.b16 %v783
  %v849 = vunpack.c.h.b16 %v783
  %v850 = vunpack.c.l.b16 %v784
  %v851 = vunpack.c.l.b16 %v785
  %v852 = vunpack.c.h.b16 %v785
  %v853 = vunpack.c.l.b16 %v786
  %v854 = vunpack.c.l.b16 %v787
  %v855 = vunpack.c.h.b16 %v787
  %v856 = vunpack.c.l.b16 %v788
  %v857 = vunpack.c.l.b16 %v789
  %v858 = vunpack.c.h.b16 %v789
  %v859 = vunpack.c.l.b16 %v790
  %v860 = vunpack.c.l.b16 %v791
  %v861 = vunpack.c.h.b16 %v791
  %v862 = vunpack.c.l.b16 %v792
  %v863 = vunpack.c.l.b16 %v793
  %v864 = vunpack.c.h.b16 %v793
  %v865 = vunpack.c.l.b16 %v794
  %v866 = vunpack.c.l.b16 %v795
  %v867 = vunpack.c.h.b16 %v795
  %v868 = vunpack.c.l.b16 %v796
  %v869 = vunpack.c.l.b16 %v797
  %v870 = vunpack.c.h.b16 %v797
  %v871 = vunpack.c.l.b16 %v798
  %v872 = vunpack.c.l.b16 %v799
  %v873 = vunpack.c.h.b16 %v799
  %v874 = vunpack.c.l.b16 %v800
  %v875 = vunpack.c.l.b16 %v801
  %v876 = vunpack.c.h.b16 %v801
  %v877 = vunpack.c.l.b16 %v802
  %v878 = vunpack.c.l.b16 %v803
  %v879 = vunpack.c.h.b16 %v803
  %v880 = vunpack.c.l.b16 %v804
  %v881 = vunpack.c.l.b16 %v805
  %v882 = vunpack.c.h.b16 %v805
  %v883 = vunpack.c.l.b16 %v806
  %v884 = vunpack.c.l.b16 %v807
  %v885 = vunpack.c.h.b16 %v807
  %v886 = vunpack.c.l.b16 %v808
  %v887 = vunpack.c.l.b16 %v809
  %v888 = vunpack.c.h.b16 %v809
  %v889 = vunpack.c.l.b16 %v810
  %v890 = vunpack.c.l.b16 %v811
  %v891 = vunpack.c.h.b16 %v811
  %v892 = vunpack.c.l.b16 %v812
  %v893 = vpack.c.b16 %v848, %v845
  %v894 = vpack.c.b16 %v849, %v846
  %v895 = vpack.c.b16 %v850, %v847
  %v896 = vpack.c.b16 %v854, %v851
  %v897 = vpack.c.b16 %v855, %v852
  %v898 = vpack.c.b16 %v856, %v853
  %v899 = vpack.c.b16 %v860, %v857
  %v900 = vpack.c.b16 %v861, %v858
  %v901 = vpack.c.b16 %v862, %v859
  %v902 = vpack.c.b16 %v866, %v863
  %v903 = vpack.c.b16 %v867, %v864
  %v904 = vpack.c.b16 %v868, %v865
  %v905 = vpack.c.b16 %v872, %v869
  %v906 = vpack.c.b16 %v873, %v870
  %v907 = vpack.c.b16 %v874, %v871
  %v908 = vpack.c.b16 %v878, %v875
  %v909 = vpack.c.b16 %v879, %v876
  %v910 = vpack.c.b16 %v880, %v877
  %v911 = vpack.c.b16 %v884, %v881
  %v912 = vpack.c.b16 %v885, %v882
  %v913 = vpack.c.b16 %v886, %v883
  %v914 = vpack.c.b16 %v890, %v887
  %v915 = vpack.c.b16 %v891, %v888
  %v916 = vpack.c.b16 %v892, %v889
  %941 = vmatpush.bf16.msra.mxu0 %v914
  %942 = vmatpush.bf16.msra.mxu0 %v911
  %943 = vmatpush.bf16.msra.mxu0 %v908
  %944 = vmatpush.bf16.msra.mxu0 %v905
  %945 = vmatpush.bf16.msra.mxu0 %v902
  %946 = vmatpush.bf16.msra.mxu0 %v899
  %947 = vmatpush.bf16.msra.mxu0 %v896
  %948 = vmatpush.bf16.msra.mxu0 %v893
  %949 = vmatmul.bf16.gmra.mxu0 0
  %v950 = vpop.f32.mrf.mxu0
  %v951 = vadd.f32 0.0, %v950
  %v952 = vpop.f32.mrf.mxu0
  %953 = vdwg.mxu0
  %954 = vmatpush.bf16.msra.mxu0 %v915
  %955 = vmatpush.bf16.msra.mxu0 %v912
  %956 = vmatpush.bf16.msra.mxu0 %v909
  %957 = vmatpush.bf16.msra.mxu0 %v906
  %958 = vmatpush.bf16.msra.mxu0 %v903
  %959 = vmatpush.bf16.msra.mxu0 %v900
  %960 = vmatpush.bf16.msra.mxu0 %v897
  %961 = vmatpush.bf16.msra.mxu0 %v894
  %962 = vmatmul.bf16.gmra.mxu0 0
  %v963 = vpop.f32.mrf.mxu0
  %v964 = vadd.f32 0.0, %v963
  %v965 = vpop.f32.mrf.mxu0
  %966 = vdwg.mxu0
  %967 = vmatpush.bf16.msra.mxu0 %v916
  %968 = vmatpush.bf16.msra.mxu0 %v913
  %969 = vmatpush.bf16.msra.mxu0 %v910
  %970 = vmatpush.bf16.msra.mxu0 %v907
  %971 = vmatpush.bf16.msra.mxu0 %v904
  %972 = vmatpush.bf16.msra.mxu0 %v901
  %973 = vmatpush.bf16.msra.mxu0 %v898
  %974 = vmatpush.bf16.msra.mxu0 %v895
  %975 = vmatmul.bf16.gmra.mxu0 0
  %v976 = vpop.f32.mrf.mxu0
  %v977 = vadd.f32 0.0, %v976
  %v978 = vpop.f32.mrf.mxu0
  %979 = vdwg.mxu0
  %v980 = vadd.f32 %v752, %v951
  %v981 = vxor.u32 %v980, 2147483648
  %v982 = vmul.f32 %v981, 1.442695
  %v983 = vpow.pop %v982
  %v984 = vadd.f32 %v983, 1.0
  %v985 = vrcp.pop %v984
  %v986 = vmul.f32 %v984, %v985
  %v987 = vsub.f32 1.0, %v986
  %v988 = vmul.f32 %v985, %v987
  %v989 = vadd.f32 %v985, %v988
  %vm990 = vweird.f32 %v984
  %vm991 = vweird.f32 %v985
  %vm992 = vmor %vm990, %vm991
  %v993 = vsel %vm992, %v985, %v989
  %v994 = vand.u32 2147483647, %v984
  %vm995 = vcmp.eq.f32.partialorder %v994, 8.507059e+37
  %v996 = vand.u32 %v984, 2147483648
  %v997 = vor.u32 1.1754944e-38, %v996
  %v998 = vsel %vm995, %v997, %v993
  %v999 = vmul.f32 1.0, %v998
  %v1000 = vadd.f32 %v765, %v964
  %v1001 = vxor.u32 %v1000, 2147483648
  %v1002 = vmul.f32 %v1001, 1.442695
  %v1003 = vpow.pop %v1002
  %v1004 = vadd.f32 %v1003, 1.0
  %v1005 = vrcp.pop %v1004
  %v1006 = vmul.f32 %v1004, %v1005
  %v1007 = vsub.f32 1.0, %v1006
  %v1008 = vmul.f32 %v1005, %v1007
  %v1009 = vadd.f32 %v1005, %v1008
  %vm1010 = vweird.f32 %v1004
  %vm1011 = vweird.f32 %v1005
  %vm1012 = vmor %vm1010, %vm1011
  %v1013 = vsel %vm1012, %v1005, %v1009
  %v1014 = vand.u32 2147483647, %v1004
  %vm1015 = vcmp.eq.f32.partialorder %v1014, 8.507059e+37
  %v1016 = vand.u32 %v1004, 2147483648
  %v1017 = vor.u32 1.1754944e-38, %v1016
  %v1018 = vsel %vm1015, %v1017, %v1013
  %v1019 = vmul.f32 1.0, %v1018
  %v1020 = vadd.f32 %v977, %v239
  %v1021 = vmul.f32 %v999, %v1020
  %v1022 = vadd.f32 %v778, %v1021
  %v1023 = vtanh.pop %v1022
  %v1024 = vsub.f32 1.0, %v1019
  %v1025 = vmul.f32 %v1024, %v1023
  %v1026 = vmul.f32 %v1019, 0.0
  %v1027 = vadd.f32 %v1025, %v1026
  %v1028 = vld [vmem:[#allocation2 + $0x30] sm:$0xff]
  %v1029 = vld [vmem:[#allocation2 + $0x38] sm:$0xff]
  %v1030 = vld [vmem:[#allocation2 + $0x40] sm:$0xff]
  %v1031 = vpack.c.bf16 %v581, %v581
  %1032 = vmatpush.bf16.msra.mxu0 %v377
  %1033 = vmatpush.bf16.msra.mxu0 %v374
  %1034 = vmatpush.bf16.msra.mxu0 %v371
  %1035 = vmatpush.bf16.msra.mxu0 %v368
  %1036 = vmatpush.bf16.msra.mxu0 %v365
  %1037 = vmatpush.bf16.msra.mxu0 %v362
  %1038 = vmatpush.bf16.msra.mxu0 %v359
  %1039 = vmatpush.bf16.msra.mxu0 %v356
  %1040 = vmatmul.bf16.gmra.mxu0 %v1031
  %v1041 = vpop.f32.mrf.mxu0
  %v1042 = vadd.f32 0.0, %v1041
  %v1043 = vpop.f32.mrf.mxu0
  %1044 = vdwg.mxu0
  %1045 = vmatpush.bf16.msra.mxu0 %v378
  %1046 = vmatpush.bf16.msra.mxu0 %v375
  %1047 = vmatpush.bf16.msra.mxu0 %v372
  %1048 = vmatpush.bf16.msra.mxu0 %v369
  %1049 = vmatpush.bf16.msra.mxu0 %v366
  %1050 = vmatpush.bf16.msra.mxu0 %v363
  %1051 = vmatpush.bf16.msra.mxu0 %v360
  %1052 = vmatpush.bf16.msra.mxu0 %v357
  %1053 = vmatmul.bf16.gmra.mxu0 %v1031
  %v1054 = vpop.f32.mrf.mxu0
  %v1055 = vadd.f32 0.0, %v1054
  %v1056 = vpop.f32.mrf.mxu0
  %1057 = vdwg.mxu0
  %1058 = vmatpush.bf16.msra.mxu0 %v379
  %1059 = vmatpush.bf16.msra.mxu0 %v376
  %1060 = vmatpush.bf16.msra.mxu0 %v373
  %1061 = vmatpush.bf16.msra.mxu0 %v370
  %1062 = vmatpush.bf16.msra.mxu0 %v367
  %1063 = vmatpush.bf16.msra.mxu0 %v364
  %1064 = vmatpush.bf16.msra.mxu0 %v361
  %1065 = vmatpush.bf16.msra.mxu0 %v358
  %1066 = vmatmul.bf16.gmra.mxu0 %v1031
  %v1067 = vpop.f32.mrf.mxu0
  %v1068 = vadd.f32 0.0, %v1067
  %v1069 = vpop.f32.mrf.mxu0
  %1070 = vdwg.mxu0
  %v1071 = vadd.f32 %v1028, %v1042
  %v1072 = vxor.u32 %v1071, 2147483648
  %v1073 = vmul.f32 %v1072, 1.442695
  %v1074 = vpow.pop %v1073
  %v1075 = vadd.f32 %v1074, 1.0
  %v1076 = vrcp.pop %v1075
  %v1077 = vmul.f32 %v1075, %v1076
  %v1078 = vsub.f32 1.0, %v1077
  %v1079 = vmul.f32 %v1076, %v1078
  %v1080 = vadd.f32 %v1076, %v1079
  %vm1081 = vweird.f32 %v1075
  %vm1082 = vweird.f32 %v1076
  %vm1083 = vmor %vm1081, %vm1082
  %v1084 = vsel %vm1083, %v1076, %v1080
  %v1085 = vand.u32 2147483647, %v1075
  %vm1086 = vcmp.eq.f32.partialorder %v1085, 8.507059e+37
  %v1087 = vand.u32 %v1075, 2147483648
  %v1088 = vor.u32 1.1754944e-38, %v1087
  %v1089 = vsel %vm1086, %v1088, %v1084
  %v1090 = vmul.f32 1.0, %v1089
  %v1091 = vadd.f32 %v1029, %v1055
  %v1092 = vxor.u32 %v1091, 2147483648
  %v1093 = vmul.f32 %v1092, 1.442695
  %v1094 = vpow.pop %v1093
  %v1095 = vadd.f32 %v1094, 1.0
  %v1096 = vrcp.pop %v1095
  %v1097 = vmul.f32 %v1095, %v1096
  %v1098 = vsub.f32 1.0, %v1097
  %v1099 = vmul.f32 %v1096, %v1098
  %v1100 = vadd.f32 %v1096, %v1099
  %vm1101 = vweird.f32 %v1095
  %vm1102 = vweird.f32 %v1096
  %vm1103 = vmor %vm1101, %vm1102
  %v1104 = vsel %vm1103, %v1096, %v1100
  %v1105 = vand.u32 2147483647, %v1095
  %vm1106 = vcmp.eq.f32.partialorder %v1105, 8.507059e+37
  %v1107 = vand.u32 %v1095, 2147483648
  %v1108 = vor.u32 1.1754944e-38, %v1107
  %v1109 = vsel %vm1106, %v1108, %v1104
  %v1110 = vmul.f32 1.0, %v1109
  %v1111 = vadd.f32 %v1068, %v235
  %v1112 = vmul.f32 %v1090, %v1111
  %v1113 = vadd.f32 %v1030, %v1112
  %v1114 = vtanh.pop %v1113
  %v1115 = vsub.f32 1.0, %v1110
  %v1116 = vmul.f32 %v1115, %v1114
  %v1117 = vmul.f32 %v1110, %v581
  %v1118 = vadd.f32 %v1116, %v1117
  %1119 = vmatpush.bf16.msra.mxu0 %v715
  %1120 = vmatpush.bf16.msra.mxu0 %v712
  %1121 = vmatpush.bf16.msra.mxu0 %v709
  %1122 = vmatpush.bf16.msra.mxu0 %v706
  %1123 = vmatpush.bf16.msra.mxu0 %v703
  %1124 = vmatpush.bf16.msra.mxu0 %v700
  %1125 = vmatpush.bf16.msra.mxu0 %v697
  %1126 = vmatpush.bf16.msra.mxu0 %v694
  %1127 = vmatmul.bf16.gmra.mxu0 %v1031
  %v1128 = vpop.f32.mrf.mxu0
  %v1129 = vadd.f32 %v227, %v1128
  %v1130 = vpop.f32.mrf.mxu0
  %1131 = vdwg.mxu0
  %1132 = vmatpush.bf16.msra.mxu0 %v716
  %1133 = vmatpush.bf16.msra.mxu0 %v713
  %1134 = vmatpush.bf16.msra.mxu0 %v710
  %1135 = vmatpush.bf16.msra.mxu0 %v707
  %1136 = vmatpush.bf16.msra.mxu0 %v704
  %1137 = vmatpush.bf16.msra.mxu0 %v701
  %1138 = vmatpush.bf16.msra.mxu0 %v698
  %1139 = vmatpush.bf16.msra.mxu0 %v695
  %1140 = vmatmul.bf16.gmra.mxu0 %v1031
  %v1141 = vpop.f32.mrf.mxu0
  %v1142 = vadd.f32 %v228, %v1141
  %v1143 = vpop.f32.mrf.mxu0
  %1144 = vdwg.mxu0
  %1145 = vmatpush.bf16.msra.mxu0 %v717
  %1146 = vmatpush.bf16.msra.mxu0 %v714
  %1147 = vmatpush.bf16.msra.mxu0 %v711
  %1148 = vmatpush.bf16.msra.mxu0 %v708
  %1149 = vmatpush.bf16.msra.mxu0 %v705
  %1150 = vmatpush.bf16.msra.mxu0 %v702
  %1151 = vmatpush.bf16.msra.mxu0 %v699
  %1152 = vmatpush.bf16.msra.mxu0 %v696
  %1153 = vmatmul.bf16.gmra.mxu0 %v1031
  %v1154 = vpop.f32.mrf.mxu0
  %v1155 = vadd.f32 %v229, %v1154
  %v1156 = vpop.f32.mrf.mxu0
  %1157 = vdwg.mxu0
  %v1158 = vpack.c.bf16 %v1027, %v1027
  %1159 = vmatpush.bf16.msra.mxu0 %v914
  %1160 = vmatpush.bf16.msra.mxu0 %v911
  %1161 = vmatpush.bf16.msra.mxu0 %v908
  %1162 = vmatpush.bf16.msra.mxu0 %v905
  %1163 = vmatpush.bf16.msra.mxu0 %v902
  %1164 = vmatpush.bf16.msra.mxu0 %v899
  %1165 = vmatpush.bf16.msra.mxu0 %v896
  %1166 = vmatpush.bf16.msra.mxu0 %v893
  %1167 = vmatmul.bf16.gmra.mxu0 %v1158
  %v1168 = vpop.f32.mrf.mxu0
  %v1169 = vadd.f32 0.0, %v1168
  %v1170 = vpop.f32.mrf.mxu0
  %1171 = vdwg.mxu0
  %1172 = vmatpush.bf16.msra.mxu0 %v915
  %1173 = vmatpush.bf16.msra.mxu0 %v912
  %1174 = vmatpush.bf16.msra.mxu0 %v909
  %1175 = vmatpush.bf16.msra.mxu0 %v906
  %1176 = vmatpush.bf16.msra.mxu0 %v903
  %1177 = vmatpush.bf16.msra.mxu0 %v900
  %1178 = vmatpush.bf16.msra.mxu0 %v897
  %1179 = vmatpush.bf16.msra.mxu0 %v894
  %1180 = vmatmul.bf16.gmra.mxu0 %v1158
  %v1181 = vpop.f32.mrf.mxu0
  %v1182 = vadd.f32 0.0, %v1181
  %v1183 = vpop.f32.mrf.mxu0
  %1184 = vdwg.mxu0
  %1185 = vmatpush.bf16.msra.mxu0 %v916
  %1186 = vmatpush.bf16.msra.mxu0 %v913
  %1187 = vmatpush.bf16.msra.mxu0 %v910
  %1188 = vmatpush.bf16.msra.mxu0 %v907
  %1189 = vmatpush.bf16.msra.mxu0 %v904
  %1190 = vmatpush.bf16.msra.mxu0 %v901
  %1191 = vmatpush.bf16.msra.mxu0 %v898
  %1192 = vmatpush.bf16.msra.mxu0 %v895
  %1193 = vmatmul.bf16.gmra.mxu0 %v1158
  %v1194 = vpop.f32.mrf.mxu0
  %v1195 = vadd.f32 0.0, %v1194
  %v1196 = vpop.f32.mrf.mxu0
  %1197 = vdwg.mxu0
  %v1198 = vadd.f32 %v1129, %v1169
  %v1199 = vxor.u32 %v1198, 2147483648
  %v1200 = vmul.f32 %v1199, 1.442695
  %v1201 = vpow.pop %v1200
  %v1202 = vadd.f32 %v1201, 1.0
  %v1203 = vrcp.pop %v1202
  %v1204 = vmul.f32 %v1202, %v1203
  %v1205 = vsub.f32 1.0, %v1204
  %v1206 = vmul.f32 %v1203, %v1205
  %v1207 = vadd.f32 %v1203, %v1206
  %vm1208 = vweird.f32 %v1202
  %vm1209 = vweird.f32 %v1203
  %vm1210 = vmor %vm1208, %vm1209
  %v1211 = vsel %vm1210, %v1203, %v1207
  %v1212 = vand.u32 2147483647, %v1202
  %vm1213 = vcmp.eq.f32.partialorder %v1212, 8.507059e+37
  %v1214 = vand.u32 %v1202, 2147483648
  %v1215 = vor.u32 1.1754944e-38, %v1214
  %v1216 = vsel %vm1213, %v1215, %v1211
  %v1217 = vmul.f32 1.0, %v1216
  %v1218 = vadd.f32 %v1142, %v1182
  %v1219 = vxor.u32 %v1218, 2147483648
  %v1220 = vmul.f32 %v1219, 1.442695
  %v1221 = vpow.pop %v1220
  %v1222 = vadd.f32 %v1221, 1.0
  %v1223 = vrcp.pop %v1222
  %v1224 = vmul.f32 %v1222, %v1223
  %v1225 = vsub.f32 1.0, %v1224
  %v1226 = vmul.f32 %v1223, %v1225
  %v1227 = vadd.f32 %v1223, %v1226
  %vm1228 = vweird.f32 %v1222
  %vm1229 = vweird.f32 %v1223
  %vm1230 = vmor %vm1228, %vm1229
  %v1231 = vsel %vm1230, %v1223, %v1227
  %v1232 = vand.u32 2147483647, %v1222
  %vm1233 = vcmp.eq.f32.partialorder %v1232, 8.507059e+37
  %v1234 = vand.u32 %v1222, 2147483648
  %v1235 = vor.u32 1.1754944e-38, %v1234
  %v1236 = vsel %vm1233, %v1235, %v1231
  %v1237 = vmul.f32 1.0, %v1236
  %v1238 = vadd.f32 %v1195, %v239
  %v1239 = vmul.f32 %v1217, %v1238
  %v1240 = vadd.f32 %v1155, %v1239
  %v1241 = vtanh.pop %v1240
  %v1242 = vsub.f32 1.0, %v1237
  %v1243 = vmul.f32 %v1242, %v1241
  %v1244 = vmul.f32 %v1237, %v1027
  %v1245 = vadd.f32 %v1243, %v1244
  %v1246 = vld [vmem:[#allocation2 + $0x48] sm:$0xff]
  %v1247 = vld [vmem:[#allocation2 + $0x50] sm:$0xff]
  %v1248 = vld [vmem:[#allocation2 + $0x58] sm:$0xff]
  %v1249 = vpack.c.bf16 %v1118, %v1118
  %1250 = vmatpush.bf16.msra.mxu0 %v377
  %1251 = vmatpush.bf16.msra.mxu0 %v374
  %1252 = vmatpush.bf16.msra.mxu0 %v371
  %1253 = vmatpush.bf16.msra.mxu0 %v368
  %1254 = vmatpush.bf16.msra.mxu0 %v365
  %1255 = vmatpush.bf16.msra.mxu0 %v362
  %1256 = vmatpush.bf16.msra.mxu0 %v359
  %1257 = vmatpush.bf16.msra.mxu0 %v356
  %1258 = vmatmul.bf16.gmra.mxu0 %v1249
  %v1259 = vpop.f32.mrf.mxu0
  %v1260 = vadd.f32 0.0, %v1259
  %v1261 = vpop.f32.mrf.mxu0
  %1262 = vdwg.mxu0
  %1263 = vmatpush.bf16.msra.mxu0 %v378
  %1264 = vmatpush.bf16.msra.mxu0 %v375
  %1265 = vmatpush.bf16.msra.mxu0 %v372
  %1266 = vmatpush.bf16.msra.mxu0 %v369
  %1267 = vmatpush.bf16.msra.mxu0 %v366
  %1268 = vmatpush.bf16.msra.mxu0 %v363
  %1269 = vmatpush.bf16.msra.mxu0 %v360
  %1270 = vmatpush.bf16.msra.mxu0 %v357
  %1271 = vmatmul.bf16.gmra.mxu0 %v1249
  %v1272 = vpop.f32.mrf.mxu0
  %v1273 = vadd.f32 0.0, %v1272
  %v1274 = vpop.f32.mrf.mxu0
  %1275 = vdwg.mxu0
  %1276 = vmatpush.bf16.msra.mxu0 %v379
  %1277 = vmatpush.bf16.msra.mxu0 %v376
  %1278 = vmatpush.bf16.msra.mxu0 %v373
  %1279 = vmatpush.bf16.msra.mxu0 %v370
  %1280 = vmatpush.bf16.msra.mxu0 %v367
  %1281 = vmatpush.bf16.msra.mxu0 %v364
  %1282 = vmatpush.bf16.msra.mxu0 %v361
  %1283 = vmatpush.bf16.msra.mxu0 %v358
  %1284 = vmatmul.bf16.gmra.mxu0 %v1249
  %v1285 = vpop.f32.mrf.mxu0
  %v1286 = vadd.f32 0.0, %v1285
  %v1287 = vpop.f32.mrf.mxu0
  %1288 = vdwg.mxu0
  %v1289 = vadd.f32 %v1246, %v1260
  %v1290 = vxor.u32 %v1289, 2147483648
  %v1291 = vmul.f32 %v1290, 1.442695
  %v1292 = vpow.pop %v1291
  %v1293 = vadd.f32 %v1292, 1.0
  %v1294 = vrcp.pop %v1293
  %v1295 = vmul.f32 %v1293, %v1294
  %v1296 = vsub.f32 1.0, %v1295
  %v1297 = vmul.f32 %v1294, %v1296
  %v1298 = vadd.f32 %v1294, %v1297
  %vm1299 = vweird.f32 %v1293
  %vm1300 = vweird.f32 %v1294
  %vm1301 = vmor %vm1299, %vm1300
  %v1302 = vsel %vm1301, %v1294, %v1298
  %v1303 = vand.u32 2147483647, %v1293
  %vm1304 = vcmp.eq.f32.partialorder %v1303, 8.507059e+37
  %v1305 = vand.u32 %v1293, 2147483648
  %v1306 = vor.u32 1.1754944e-38, %v1305
  %v1307 = vsel %vm1304, %v1306, %v1302
  %v1308 = vmul.f32 1.0, %v1307
  %v1309 = vadd.f32 %v1247, %v1273
  %v1310 = vxor.u32 %v1309, 2147483648
  %v1311 = vmul.f32 %v1310, 1.442695
  %v1312 = vpow.pop %v1311
  %v1313 = vadd.f32 %v1312, 1.0
  %v1314 = vrcp.pop %v1313
  %v1315 = vmul.f32 %v1313, %v1314
  %v1316 = vsub.f32 1.0, %v1315
  %v1317 = vmul.f32 %v1314, %v1316
  %v1318 = vadd.f32 %v1314, %v1317
  %vm1319 = vweird.f32 %v1313
  %vm1320 = vweird.f32 %v1314
  %vm1321 = vmor %vm1319, %vm1320
  %v1322 = vsel %vm1321, %v1314, %v1318
  %v1323 = vand.u32 2147483647, %v1313
  %vm1324 = vcmp.eq.f32.partialorder %v1323, 8.507059e+37
  %v1325 = vand.u32 %v1313, 2147483648
  %v1326 = vor.u32 1.1754944e-38, %v1325
  %v1327 = vsel %vm1324, %v1326, %v1322
  %v1328 = vmul.f32 1.0, %v1327
  %v1329 = vadd.f32 %v1286, %v235
  %v1330 = vmul.f32 %v1308, %v1329
  %v1331 = vadd.f32 %v1248, %v1330
  %v1332 = vtanh.pop %v1331
  %v1333 = vsub.f32 1.0, %v1328
  %v1334 = vmul.f32 %v1333, %v1332
  %v1335 = vmul.f32 %v1328, %v1118
  %v1336 = vadd.f32 %v1334, %v1335
  %1337 = vmatpush.bf16.msra.mxu0 %v715
  %1338 = vmatpush.bf16.msra.mxu0 %v712
  %1339 = vmatpush.bf16.msra.mxu0 %v709
  %1340 = vmatpush.bf16.msra.mxu0 %v706
  %1341 = vmatpush.bf16.msra.mxu0 %v703
  %1342 = vmatpush.bf16.msra.mxu0 %v700
  %1343 = vmatpush.bf16.msra.mxu0 %v697
  %1344 = vmatpush.bf16.msra.mxu0 %v694
  %1345 = vmatmul.bf16.gmra.mxu0 %v1249
  %v1346 = vpop.f32.mrf.mxu0
  %v1347 = vadd.f32 %v227, %v1346
  %v1348 = vpop.f32.mrf.mxu0
  %1349 = vdwg.mxu0
  %1350 = vmatpush.bf16.msra.mxu0 %v716
  %1351 = vmatpush.bf16.msra.mxu0 %v713
  %1352 = vmatpush.bf16.msra.mxu0 %v710
  %1353 = vmatpush.bf16.msra.mxu0 %v707
  %1354 = vmatpush.bf16.msra.mxu0 %v704
  %1355 = vmatpush.bf16.msra.mxu0 %v701
  %1356 = vmatpush.bf16.msra.mxu0 %v698
  %1357 = vmatpush.bf16.msra.mxu0 %v695
  %1358 = vmatmul.bf16.gmra.mxu0 %v1249
  %v1359 = vpop.f32.mrf.mxu0
  %v1360 = vadd.f32 %v228, %v1359
  %v1361 = vpop.f32.mrf.mxu0
  %1362 = vdwg.mxu0
  %1363 = vmatpush.bf16.msra.mxu0 %v717
  %1364 = vmatpush.bf16.msra.mxu0 %v714
  %1365 = vmatpush.bf16.msra.mxu0 %v711
  %1366 = vmatpush.bf16.msra.mxu0 %v708
  %1367 = vmatpush.bf16.msra.mxu0 %v705
  %1368 = vmatpush.bf16.msra.mxu0 %v702
  %1369 = vmatpush.bf16.msra.mxu0 %v699
  %1370 = vmatpush.bf16.msra.mxu0 %v696
  %1371 = vmatmul.bf16.gmra.mxu0 %v1249
  %v1372 = vpop.f32.mrf.mxu0
  %v1373 = vadd.f32 %v229, %v1372
  %v1374 = vpop.f32.mrf.mxu0
  %1375 = vdwg.mxu0
  %v1376 = vpack.c.bf16 %v1245, %v1245
  %1377 = vmatpush.bf16.msra.mxu0 %v914
  %1378 = vmatpush.bf16.msra.mxu0 %v911
  %1379 = vmatpush.bf16.msra.mxu0 %v908
  %1380 = vmatpush.bf16.msra.mxu0 %v905
  %1381 = vmatpush.bf16.msra.mxu0 %v902
  %1382 = vmatpush.bf16.msra.mxu0 %v899
  %1383 = vmatpush.bf16.msra.mxu0 %v896
  %1384 = vmatpush.bf16.msra.mxu0 %v893
  %1385 = vmatmul.bf16.gmra.mxu0 %v1376
  %v1386 = vpop.f32.mrf.mxu0
  %v1387 = vadd.f32 0.0, %v1386
  %v1388 = vpop.f32.mrf.mxu0
  %1389 = vdwg.mxu0
  %1390 = vmatpush.bf16.msra.mxu0 %v915
  %1391 = vmatpush.bf16.msra.mxu0 %v912
  %1392 = vmatpush.bf16.msra.mxu0 %v909
  %1393 = vmatpush.bf16.msra.mxu0 %v906
  %1394 = vmatpush.bf16.msra.mxu0 %v903
  %1395 = vmatpush.bf16.msra.mxu0 %v900
  %1396 = vmatpush.bf16.msra.mxu0 %v897
  %1397 = vmatpush.bf16.msra.mxu0 %v894
  %1398 = vmatmul.bf16.gmra.mxu0 %v1376
  %v1399 = vpop.f32.mrf.mxu0
  %v1400 = vadd.f32 0.0, %v1399
  %v1401 = vpop.f32.mrf.mxu0
  %1402 = vdwg.mxu0
  %1403 = vmatpush.bf16.msra.mxu0 %v916
  %1404 = vmatpush.bf16.msra.mxu0 %v913
  %1405 = vmatpush.bf16.msra.mxu0 %v910
  %1406 = vmatpush.bf16.msra.mxu0 %v907
  %1407 = vmatpush.bf16.msra.mxu0 %v904
  %1408 = vmatpush.bf16.msra.mxu0 %v901
  %1409 = vmatpush.bf16.msra.mxu0 %v898
  %1410 = vmatpush.bf16.msra.mxu0 %v895
  %1411 = vmatmul.bf16.gmra.mxu0 %v1376
  %v1412 = vpop.f32.mrf.mxu0
  %v1413 = vadd.f32 0.0, %v1412
  %v1414 = vpop.f32.mrf.mxu0
  %1415 = vdwg.mxu0
  %v1416 = vadd.f32 %v1347, %v1387
  %v1417 = vxor.u32 %v1416, 2147483648
  %v1418 = vmul.f32 %v1417, 1.442695
  %v1419 = vpow.pop %v1418
  %v1420 = vadd.f32 %v1419, 1.0
  %v1421 = vrcp.pop %v1420
  %v1422 = vmul.f32 %v1420, %v1421
  %v1423 = vsub.f32 1.0, %v1422
  %v1424 = vmul.f32 %v1421, %v1423
  %v1425 = vadd.f32 %v1421, %v1424
  %vm1426 = vweird.f32 %v1420
  %vm1427 = vweird.f32 %v1421
  %vm1428 = vmor %vm1426, %vm1427
  %v1429 = vsel %vm1428, %v1421, %v1425
  %v1430 = vand.u32 2147483647, %v1420
  %vm1431 = vcmp.eq.f32.partialorder %v1430, 8.507059e+37
  %v1432 = vand.u32 %v1420, 2147483648
  %v1433 = vor.u32 1.1754944e-38, %v1432
  %v1434 = vsel %vm1431, %v1433, %v1429
  %v1435 = vmul.f32 1.0, %v1434
  %v1436 = vadd.f32 %v1360, %v1400
  %v1437 = vxor.u32 %v1436, 2147483648
  %v1438 = vmul.f32 %v1437, 1.442695
  %v1439 = vpow.pop %v1438
  %v1440 = vadd.f32 %v1439, 1.0
  %v1441 = vrcp.pop %v1440
  %v1442 = vmul.f32 %v1440, %v1441
  %v1443 = vsub.f32 1.0, %v1442
  %v1444 = vmul.f32 %v1441, %v1443
  %v1445 = vadd.f32 %v1441, %v1444
  %vm1446 = vweird.f32 %v1440
  %vm1447 = vweird.f32 %v1441
  %vm1448 = vmor %vm1446, %vm1447
  %v1449 = vsel %vm1448, %v1441, %v1445
  %v1450 = vand.u32 2147483647, %v1440
  %vm1451 = vcmp.eq.f32.partialorder %v1450, 8.507059e+37
  %v1452 = vand.u32 %v1440, 2147483648
  %v1453 = vor.u32 1.1754944e-38, %v1452
  %v1454 = vsel %vm1451, %v1453, %v1449
  %v1455 = vmul.f32 1.0, %v1454
  %v1456 = vadd.f32 %v1413, %v239
  %v1457 = vmul.f32 %v1435, %v1456
  %v1458 = vadd.f32 %v1373, %v1457
  %v1459 = vtanh.pop %v1458
  %v1460 = vsub.f32 1.0, %v1455
  %v1461 = vmul.f32 %v1460, %v1459
  %v1462 = vmul.f32 %v1455, %v1245
  %v1463 = vadd.f32 %v1461, %v1462
  %v1464 = vld [vmem:[#allocation2 + $0x60] sm:$0xff]
  %v1465 = vld [vmem:[#allocation2 + $0x68] sm:$0xff]
  %v1466 = vld [vmem:[#allocation2 + $0x70] sm:$0xff]
  %v1467 = vpack.c.bf16 %v1336, %v1336
  %1468 = vmatpush.bf16.msra.mxu0 %v377
  %1469 = vmatpush.bf16.msra.mxu0 %v374
  %1470 = vmatpush.bf16.msra.mxu0 %v371
  %1471 = vmatpush.bf16.msra.mxu0 %v368
  %1472 = vmatpush.bf16.msra.mxu0 %v365
  %1473 = vmatpush.bf16.msra.mxu0 %v362
  %1474 = vmatpush.bf16.msra.mxu0 %v359
  %1475 = vmatpush.bf16.msra.mxu0 %v356
  %1476 = vmatmul.bf16.gmra.mxu0 %v1467
  %v1477 = vpop.f32.mrf.mxu0
  %v1478 = vadd.f32 0.0, %v1477
  %v1479 = vpop.f32.mrf.mxu0
  %1480 = vdwg.mxu0
  %1481 = vmatpush.bf16.msra.mxu0 %v378
  %1482 = vmatpush.bf16.msra.mxu0 %v375
  %1483 = vmatpush.bf16.msra.mxu0 %v372
  %1484 = vmatpush.bf16.msra.mxu0 %v369
  %1485 = vmatpush.bf16.msra.mxu0 %v366
  %1486 = vmatpush.bf16.msra.mxu0 %v363
  %1487 = vmatpush.bf16.msra.mxu0 %v360
  %1488 = vmatpush.bf16.msra.mxu0 %v357
  %1489 = vmatmul.bf16.gmra.mxu0 %v1467
  %v1490 = vpop.f32.mrf.mxu0
  %v1491 = vadd.f32 0.0, %v1490
  %v1492 = vpop.f32.mrf.mxu0
  %1493 = vdwg.mxu0
  %1494 = vmatpush.bf16.msra.mxu0 %v379
  %1495 = vmatpush.bf16.msra.mxu0 %v376
  %1496 = vmatpush.bf16.msra.mxu0 %v373
  %1497 = vmatpush.bf16.msra.mxu0 %v370
  %1498 = vmatpush.bf16.msra.mxu0 %v367
  %1499 = vmatpush.bf16.msra.mxu0 %v364
  %1500 = vmatpush.bf16.msra.mxu0 %v361
  %1501 = vmatpush.bf16.msra.mxu0 %v358
  %1502 = vmatmul.bf16.gmra.mxu0 %v1467
  %v1503 = vpop.f32.mrf.mxu0
  %v1504 = vadd.f32 0.0, %v1503
  %v1505 = vpop.f32.mrf.mxu0
  %1506 = vdwg.mxu0
  %v1507 = vadd.f32 %v1464, %v1478
  %v1508 = vxor.u32 %v1507, 2147483648
  %v1509 = vmul.f32 %v1508, 1.442695
  %v1510 = vpow.pop %v1509
  %v1511 = vadd.f32 %v1510, 1.0
  %v1512 = vrcp.pop %v1511
  %v1513 = vmul.f32 %v1511, %v1512
  %v1514 = vsub.f32 1.0, %v1513
  %v1515 = vmul.f32 %v1512, %v1514
  %v1516 = vadd.f32 %v1512, %v1515
  %vm1517 = vweird.f32 %v1511
  %vm1518 = vweird.f32 %v1512
  %vm1519 = vmor %vm1517, %vm1518
  %v1520 = vsel %vm1519, %v1512, %v1516
  %v1521 = vand.u32 2147483647, %v1511
  %vm1522 = vcmp.eq.f32.partialorder %v1521, 8.507059e+37
  %v1523 = vand.u32 %v1511, 2147483648
  %v1524 = vor.u32 1.1754944e-38, %v1523
  %v1525 = vsel %vm1522, %v1524, %v1520
  %v1526 = vmul.f32 1.0, %v1525
  %v1527 = vadd.f32 %v1465, %v1491
  %v1528 = vxor.u32 %v1527, 2147483648
  %v1529 = vmul.f32 %v1528, 1.442695
  %v1530 = vpow.pop %v1529
  %v1531 = vadd.f32 %v1530, 1.0
  %v1532 = vrcp.pop %v1531
  %v1533 = vmul.f32 %v1531, %v1532
  %v1534 = vsub.f32 1.0, %v1533
  %v1535 = vmul.f32 %v1532, %v1534
  %v1536 = vadd.f32 %v1532, %v1535
  %vm1537 = vweird.f32 %v1531
  %vm1538 = vweird.f32 %v1532
  %vm1539 = vmor %vm1537, %vm1538
  %v1540 = vsel %vm1539, %v1532, %v1536
  %v1541 = vand.u32 2147483647, %v1531
  %vm1542 = vcmp.eq.f32.partialorder %v1541, 8.507059e+37
  %v1543 = vand.u32 %v1531, 2147483648
  %v1544 = vor.u32 1.1754944e-38, %v1543
  %v1545 = vsel %vm1542, %v1544, %v1540
  %v1546 = vmul.f32 1.0, %v1545
  %v1547 = vadd.f32 %v1504, %v235
  %v1548 = vmul.f32 %v1526, %v1547
  %v1549 = vadd.f32 %v1466, %v1548
  %v1550 = vtanh.pop %v1549
  %v1551 = vsub.f32 1.0, %v1546
  %v1552 = vmul.f32 %v1551, %v1550
  %v1553 = vmul.f32 %v1546, %v1336
  %v1554 = vadd.f32 %v1552, %v1553
  %1555 = vmatpush.bf16.msra.mxu0 %v715
  %1556 = vmatpush.bf16.msra.mxu0 %v712
  %1557 = vmatpush.bf16.msra.mxu0 %v709
  %1558 = vmatpush.bf16.msra.mxu0 %v706
  %1559 = vmatpush.bf16.msra.mxu0 %v703
  %1560 = vmatpush.bf16.msra.mxu0 %v700
  %1561 = vmatpush.bf16.msra.mxu0 %v697
  %1562 = vmatpush.bf16.msra.mxu0 %v694
  %1563 = vmatmul.bf16.gmra.mxu0 %v1467
  %v1564 = vpop.f32.mrf.mxu0
  %v1565 = vadd.f32 %v227, %v1564
  %v1566 = vpop.f32.mrf.mxu0
  %1567 = vdwg.mxu0
  %1568 = vmatpush.bf16.msra.mxu0 %v716
  %1569 = vmatpush.bf16.msra.mxu0 %v713
  %1570 = vmatpush.bf16.msra.mxu0 %v710
  %1571 = vmatpush.bf16.msra.mxu0 %v707
  %1572 = vmatpush.bf16.msra.mxu0 %v704
  %1573 = vmatpush.bf16.msra.mxu0 %v701
  %1574 = vmatpush.bf16.msra.mxu0 %v698
  %1575 = vmatpush.bf16.msra.mxu0 %v695
  %1576 = vmatmul.bf16.gmra.mxu0 %v1467
  %v1577 = vpop.f32.mrf.mxu0
  %v1578 = vadd.f32 %v228, %v1577
  %v1579 = vpop.f32.mrf.mxu0
  %1580 = vdwg.mxu0
  %1581 = vmatpush.bf16.msra.mxu0 %v717
  %1582 = vmatpush.bf16.msra.mxu0 %v714
  %1583 = vmatpush.bf16.msra.mxu0 %v711
  %1584 = vmatpush.bf16.msra.mxu0 %v708
  %1585 = vmatpush.bf16.msra.mxu0 %v705
  %1586 = vmatpush.bf16.msra.mxu0 %v702
  %1587 = vmatpush.bf16.msra.mxu0 %v699
  %1588 = vmatpush.bf16.msra.mxu0 %v696
  %1589 = vmatmul.bf16.gmra.mxu0 %v1467
  %v1590 = vpop.f32.mrf.mxu0
  %v1591 = vadd.f32 %v229, %v1590
  %v1592 = vpop.f32.mrf.mxu0
  %1593 = vdwg.mxu0
  %v1594 = vpack.c.bf16 %v1463, %v1463
  %1595 = vmatpush.bf16.msra.mxu0 %v914
  %1596 = vmatpush.bf16.msra.mxu0 %v911
  %1597 = vmatpush.bf16.msra.mxu0 %v908
  %1598 = vmatpush.bf16.msra.mxu0 %v905
  %1599 = vmatpush.bf16.msra.mxu0 %v902
  %1600 = vmatpush.bf16.msra.mxu0 %v899
  %1601 = vmatpush.bf16.msra.mxu0 %v896
  %1602 = vmatpush.bf16.msra.mxu0 %v893
  %1603 = vmatmul.bf16.gmra.mxu0 %v1594
  %v1604 = vpop.f32.mrf.mxu0
  %v1605 = vadd.f32 0.0, %v1604
  %v1606 = vpop.f32.mrf.mxu0
  %1607 = vdwg.mxu0
  %1608 = vmatpush.bf16.msra.mxu0 %v915
  %1609 = vmatpush.bf16.msra.mxu0 %v912
  %1610 = vmatpush.bf16.msra.mxu0 %v909
  %1611 = vmatpush.bf16.msra.mxu0 %v906
  %1612 = vmatpush.bf16.msra.mxu0 %v903
  %1613 = vmatpush.bf16.msra.mxu0 %v900
  %1614 = vmatpush.bf16.msra.mxu0 %v897
  %1615 = vmatpush.bf16.msra.mxu0 %v894
  %1616 = vmatmul.bf16.gmra.mxu0 %v1594
  %v1617 = vpop.f32.mrf.mxu0
  %v1618 = vadd.f32 0.0, %v1617
  %v1619 = vpop.f32.mrf.mxu0
  %1620 = vdwg.mxu0
  %1621 = vmatpush.bf16.msra.mxu0 %v916
  %1622 = vmatpush.bf16.msra.mxu0 %v913
  %1623 = vmatpush.bf16.msra.mxu0 %v910
  %1624 = vmatpush.bf16.msra.mxu0 %v907
  %1625 = vmatpush.bf16.msra.mxu0 %v904
  %1626 = vmatpush.bf16.msra.mxu0 %v901
  %1627 = vmatpush.bf16.msra.mxu0 %v898
  %1628 = vmatpush.bf16.msra.mxu0 %v895
  %1629 = vmatmul.bf16.gmra.mxu0 %v1594
  %v1630 = vpop.f32.mrf.mxu0
  %v1631 = vadd.f32 0.0, %v1630
  %v1632 = vpop.f32.mrf.mxu0
  %1633 = vdwg.mxu0
  %v1634 = vadd.f32 %v1565, %v1605
  %v1635 = vxor.u32 %v1634, 2147483648
  %v1636 = vmul.f32 %v1635, 1.442695
  %v1637 = vpow.pop %v1636
  %v1638 = vadd.f32 %v1637, 1.0
  %v1639 = vrcp.pop %v1638
  %v1640 = vmul.f32 %v1638, %v1639
  %v1641 = vsub.f32 1.0, %v1640
  %v1642 = vmul.f32 %v1639, %v1641
  %v1643 = vadd.f32 %v1639, %v1642
  %vm1644 = vweird.f32 %v1638
  %vm1645 = vweird.f32 %v1639
  %vm1646 = vmor %vm1644, %vm1645
  %v1647 = vsel %vm1646, %v1639, %v1643
  %v1648 = vand.u32 2147483647, %v1638
  %vm1649 = vcmp.eq.f32.partialorder %v1648, 8.507059e+37
  %v1650 = vand.u32 %v1638, 2147483648
  %v1651 = vor.u32 1.1754944e-38, %v1650
  %v1652 = vsel %vm1649, %v1651, %v1647
  %v1653 = vmul.f32 1.0, %v1652
  %v1654 = vadd.f32 %v1578, %v1618
  %v1655 = vxor.u32 %v1654, 2147483648
  %v1656 = vmul.f32 %v1655, 1.442695
  %v1657 = vpow.pop %v1656
  %v1658 = vadd.f32 %v1657, 1.0
  %v1659 = vrcp.pop %v1658
  %v1660 = vmul.f32 %v1658, %v1659
  %v1661 = vsub.f32 1.0, %v1660
  %v1662 = vmul.f32 %v1659, %v1661
  %v1663 = vadd.f32 %v1659, %v1662
  %vm1664 = vweird.f32 %v1658
  %vm1665 = vweird.f32 %v1659
  %vm1666 = vmor %vm1664, %vm1665
  %v1667 = vsel %vm1666, %v1659, %v1663
  %v1668 = vand.u32 2147483647, %v1658
  %vm1669 = vcmp.eq.f32.partialorder %v1668, 8.507059e+37
  %v1670 = vand.u32 %v1658, 2147483648
  %v1671 = vor.u32 1.1754944e-38, %v1670
  %v1672 = vsel %vm1669, %v1671, %v1667
  %v1673 = vmul.f32 1.0, %v1672
  %v1674 = vadd.f32 %v1631, %v239
  %v1675 = vmul.f32 %v1653, %v1674
  %v1676 = vadd.f32 %v1591, %v1675
  %v1677 = vtanh.pop %v1676
  %v1678 = vsub.f32 1.0, %v1673
  %v1679 = vmul.f32 %v1678, %v1677
  %v1680 = vmul.f32 %v1673, %v1463
  %v1681 = vadd.f32 %v1679, %v1680
  %v1682 = vld [vmem:[#allocation2 + $0x78] sm:$0xff]
  %v1683 = vld [vmem:[#allocation2 + $0x80] sm:$0xff]
  %v1684 = vld [vmem:[#allocation2 + $0x88] sm:$0xff]
  %v1685 = vpack.c.bf16 %v1554, %v1554
  %1686 = vmatpush.bf16.msra.mxu0 %v377
  %1687 = vmatpush.bf16.msra.mxu0 %v374
  %1688 = vmatpush.bf16.msra.mxu0 %v371
  %1689 = vmatpush.bf16.msra.mxu0 %v368
  %1690 = vmatpush.bf16.msra.mxu0 %v365
  %1691 = vmatpush.bf16.msra.mxu0 %v362
  %1692 = vmatpush.bf16.msra.mxu0 %v359
  %1693 = vmatpush.bf16.msra.mxu0 %v356
  %1694 = vmatmul.bf16.gmra.mxu0 %v1685
  %v1695 = vpop.f32.mrf.mxu0
  %v1696 = vadd.f32 0.0, %v1695
  %v1697 = vpop.f32.mrf.mxu0
  %1698 = vdwg.mxu0
  %1699 = vmatpush.bf16.msra.mxu0 %v378
  %1700 = vmatpush.bf16.msra.mxu0 %v375
  %1701 = vmatpush.bf16.msra.mxu0 %v372
  %1702 = vmatpush.bf16.msra.mxu0 %v369
  %1703 = vmatpush.bf16.msra.mxu0 %v366
  %1704 = vmatpush.bf16.msra.mxu0 %v363
  %1705 = vmatpush.bf16.msra.mxu0 %v360
  %1706 = vmatpush.bf16.msra.mxu0 %v357
  %1707 = vmatmul.bf16.gmra.mxu0 %v1685
  %v1708 = vpop.f32.mrf.mxu0
  %v1709 = vadd.f32 0.0, %v1708
  %v1710 = vpop.f32.mrf.mxu0
  %1711 = vdwg.mxu0
  %1712 = vmatpush.bf16.msra.mxu0 %v379
  %1713 = vmatpush.bf16.msra.mxu0 %v376
  %1714 = vmatpush.bf16.msra.mxu0 %v373
  %1715 = vmatpush.bf16.msra.mxu0 %v370
  %1716 = vmatpush.bf16.msra.mxu0 %v367
  %1717 = vmatpush.bf16.msra.mxu0 %v364
  %1718 = vmatpush.bf16.msra.mxu0 %v361
  %1719 = vmatpush.bf16.msra.mxu0 %v358
  %1720 = vmatmul.bf16.gmra.mxu0 %v1685
  %v1721 = vpop.f32.mrf.mxu0
  %v1722 = vadd.f32 0.0, %v1721
  %v1723 = vpop.f32.mrf.mxu0
  %1724 = vdwg.mxu0
  %v1725 = vadd.f32 %v1682, %v1696
  %v1726 = vxor.u32 %v1725, 2147483648
  %v1727 = vmul.f32 %v1726, 1.442695
  %v1728 = vpow.pop %v1727
  %v1729 = vadd.f32 %v1728, 1.0
  %v1730 = vrcp.pop %v1729
  %v1731 = vmul.f32 %v1729, %v1730
  %v1732 = vsub.f32 1.0, %v1731
  %v1733 = vmul.f32 %v1730, %v1732
  %v1734 = vadd.f32 %v1730, %v1733
  %vm1735 = vweird.f32 %v1729
  %vm1736 = vweird.f32 %v1730
  %vm1737 = vmor %vm1735, %vm1736
  %v1738 = vsel %vm1737, %v1730, %v1734
  %v1739 = vand.u32 2147483647, %v1729
  %vm1740 = vcmp.eq.f32.partialorder %v1739, 8.507059e+37
  %v1741 = vand.u32 %v1729, 2147483648
  %v1742 = vor.u32 1.1754944e-38, %v1741
  %v1743 = vsel %vm1740, %v1742, %v1738
  %v1744 = vmul.f32 1.0, %v1743
  %v1745 = vadd.f32 %v1683, %v1709
  %v1746 = vxor.u32 %v1745, 2147483648
  %v1747 = vmul.f32 %v1746, 1.442695
  %v1748 = vpow.pop %v1747
  %v1749 = vadd.f32 %v1748, 1.0
  %v1750 = vrcp.pop %v1749
  %v1751 = vmul.f32 %v1749, %v1750
  %v1752 = vsub.f32 1.0, %v1751
  %v1753 = vmul.f32 %v1750, %v1752
  %v1754 = vadd.f32 %v1750, %v1753
  %vm1755 = vweird.f32 %v1749
  %vm1756 = vweird.f32 %v1750
  %vm1757 = vmor %vm1755, %vm1756
  %v1758 = vsel %vm1757, %v1750, %v1754
  %v1759 = vand.u32 2147483647, %v1749
  %vm1760 = vcmp.eq.f32.partialorder %v1759, 8.507059e+37
  %v1761 = vand.u32 %v1749, 2147483648
  %v1762 = vor.u32 1.1754944e-38, %v1761
  %v1763 = vsel %vm1760, %v1762, %v1758
  %v1764 = vmul.f32 1.0, %v1763
  %v1765 = vadd.f32 %v1722, %v235
  %v1766 = vmul.f32 %v1744, %v1765
  %v1767 = vadd.f32 %v1684, %v1766
  %v1768 = vtanh.pop %v1767
  %v1769 = vsub.f32 1.0, %v1764
  %v1770 = vmul.f32 %v1769, %v1768
  %v1771 = vmul.f32 %v1764, %v1554
  %v1772 = vadd.f32 %v1770, %v1771
  %1773 = vmatpush.bf16.msra.mxu0 %v715
  %1774 = vmatpush.bf16.msra.mxu0 %v712
  %1775 = vmatpush.bf16.msra.mxu0 %v709
  %1776 = vmatpush.bf16.msra.mxu0 %v706
  %1777 = vmatpush.bf16.msra.mxu0 %v703
  %1778 = vmatpush.bf16.msra.mxu0 %v700
  %1779 = vmatpush.bf16.msra.mxu0 %v697
  %1780 = vmatpush.bf16.msra.mxu0 %v694
  %1781 = vmatmul.bf16.gmra.mxu0 %v1685
  %v1782 = vpop.f32.mrf.mxu0
  %v1783 = vadd.f32 %v227, %v1782
  %v1784 = vpop.f32.mrf.mxu0
  %1785 = vdwg.mxu0
  %1786 = vmatpush.bf16.msra.mxu0 %v716
  %1787 = vmatpush.bf16.msra.mxu0 %v713
  %1788 = vmatpush.bf16.msra.mxu0 %v710
  %1789 = vmatpush.bf16.msra.mxu0 %v707
  %1790 = vmatpush.bf16.msra.mxu0 %v704
  %1791 = vmatpush.bf16.msra.mxu0 %v701
  %1792 = vmatpush.bf16.msra.mxu0 %v698
  %1793 = vmatpush.bf16.msra.mxu0 %v695
  %1794 = vmatmul.bf16.gmra.mxu0 %v1685
  %v1795 = vpop.f32.mrf.mxu0
  %v1796 = vadd.f32 %v228, %v1795
  %v1797 = vpop.f32.mrf.mxu0
  %1798 = vdwg.mxu0
  %1799 = vmatpush.bf16.msra.mxu0 %v717
  %1800 = vmatpush.bf16.msra.mxu0 %v714
  %1801 = vmatpush.bf16.msra.mxu0 %v711
  %1802 = vmatpush.bf16.msra.mxu0 %v708
  %1803 = vmatpush.bf16.msra.mxu0 %v705
  %1804 = vmatpush.bf16.msra.mxu0 %v702
  %1805 = vmatpush.bf16.msra.mxu0 %v699
  %1806 = vmatpush.bf16.msra.mxu0 %v696
  %1807 = vmatmul.bf16.gmra.mxu0 %v1685
  %v1808 = vpop.f32.mrf.mxu0
  %v1809 = vadd.f32 %v229, %v1808
  %v1810 = vpop.f32.mrf.mxu0
  %1811 = vdwg.mxu0
  %v1812 = vpack.c.bf16 %v1681, %v1681
  %1813 = vmatpush.bf16.msra.mxu0 %v914
  %1814 = vmatpush.bf16.msra.mxu0 %v911
  %1815 = vmatpush.bf16.msra.mxu0 %v908
  %1816 = vmatpush.bf16.msra.mxu0 %v905
  %1817 = vmatpush.bf16.msra.mxu0 %v902
  %1818 = vmatpush.bf16.msra.mxu0 %v899
  %1819 = vmatpush.bf16.msra.mxu0 %v896
  %1820 = vmatpush.bf16.msra.mxu0 %v893
  %1821 = vmatmul.bf16.gmra.mxu0 %v1812
  %v1822 = vpop.f32.mrf.mxu0
  %v1823 = vadd.f32 0.0, %v1822
  %v1824 = vpop.f32.mrf.mxu0
  %1825 = vdwg.mxu0
  %1826 = vmatpush.bf16.msra.mxu0 %v915
  %1827 = vmatpush.bf16.msra.mxu0 %v912
  %1828 = vmatpush.bf16.msra.mxu0 %v909
  %1829 = vmatpush.bf16.msra.mxu0 %v906
  %1830 = vmatpush.bf16.msra.mxu0 %v903
  %1831 = vmatpush.bf16.msra.mxu0 %v900
  %1832 = vmatpush.bf16.msra.mxu0 %v897
  %1833 = vmatpush.bf16.msra.mxu0 %v894
  %1834 = vmatmul.bf16.gmra.mxu0 %v1812
  %v1835 = vpop.f32.mrf.mxu0
  %v1836 = vadd.f32 0.0, %v1835
  %v1837 = vpop.f32.mrf.mxu0
  %1838 = vdwg.mxu0
  %1839 = vmatpush.bf16.msra.mxu0 %v916
  %1840 = vmatpush.bf16.msra.mxu0 %v913
  %1841 = vmatpush.bf16.msra.mxu0 %v910
  %1842 = vmatpush.bf16.msra.mxu0 %v907
  %1843 = vmatpush.bf16.msra.mxu0 %v904
  %1844 = vmatpush.bf16.msra.mxu0 %v901
  %1845 = vmatpush.bf16.msra.mxu0 %v898
  %1846 = vmatpush.bf16.msra.mxu0 %v895
  %1847 = vmatmul.bf16.gmra.mxu0 %v1812
  %v1848 = vpop.f32.mrf.mxu0
  %v1849 = vadd.f32 0.0, %v1848
  %v1850 = vpop.f32.mrf.mxu0
  %1851 = vdwg.mxu0
  %v1852 = vadd.f32 %v1783, %v1823
  %v1853 = vxor.u32 %v1852, 2147483648
  %v1854 = vmul.f32 %v1853, 1.442695
  %v1855 = vpow.pop %v1854
  %v1856 = vadd.f32 %v1855, 1.0
  %v1857 = vrcp.pop %v1856
  %v1858 = vmul.f32 %v1856, %v1857
  %v1859 = vsub.f32 1.0, %v1858
  %v1860 = vmul.f32 %v1857, %v1859
  %v1861 = vadd.f32 %v1857, %v1860
  %vm1862 = vweird.f32 %v1856
  %vm1863 = vweird.f32 %v1857
  %vm1864 = vmor %vm1862, %vm1863
  %v1865 = vsel %vm1864, %v1857, %v1861
  %v1866 = vand.u32 2147483647, %v1856
  %vm1867 = vcmp.eq.f32.partialorder %v1866, 8.507059e+37
  %v1868 = vand.u32 %v1856, 2147483648
  %v1869 = vor.u32 1.1754944e-38, %v1868
  %v1870 = vsel %vm1867, %v1869, %v1865
  %v1871 = vmul.f32 1.0, %v1870
  %v1872 = vadd.f32 %v1796, %v1836
  %v1873 = vxor.u32 %v1872, 2147483648
  %v1874 = vmul.f32 %v1873, 1.442695
  %v1875 = vpow.pop %v1874
  %v1876 = vadd.f32 %v1875, 1.0
  %v1877 = vrcp.pop %v1876
  %v1878 = vmul.f32 %v1876, %v1877
  %v1879 = vsub.f32 1.0, %v1878
  %v1880 = vmul.f32 %v1877, %v1879
  %v1881 = vadd.f32 %v1877, %v1880
  %vm1882 = vweird.f32 %v1876
  %vm1883 = vweird.f32 %v1877
  %vm1884 = vmor %vm1882, %vm1883
  %v1885 = vsel %vm1884, %v1877, %v1881
  %v1886 = vand.u32 2147483647, %v1876
  %vm1887 = vcmp.eq.f32.partialorder %v1886, 8.507059e+37
  %v1888 = vand.u32 %v1876, 2147483648
  %v1889 = vor.u32 1.1754944e-38, %v1888
  %v1890 = vsel %vm1887, %v1889, %v1885
  %v1891 = vmul.f32 1.0, %v1890
  %v1892 = vadd.f32 %v1849, %v239
  %v1893 = vmul.f32 %v1871, %v1892
  %v1894 = vadd.f32 %v1809, %v1893
  %v1895 = vtanh.pop %v1894
  %v1896 = vsub.f32 1.0, %v1891
  %v1897 = vmul.f32 %v1896, %v1895
  %v1898 = vmul.f32 %v1891, %v1681
  %v1899 = vadd.f32 %v1897, %v1898
  %v1900 = vld [vmem:[#allocation2 + $0x90] sm:$0xff]
  %v1901 = vld [vmem:[#allocation2 + $0x98] sm:$0xff]
  %v1902 = vld [vmem:[#allocation2 + $0xa0] sm:$0xff]
  %v1903 = vpack.c.bf16 %v1772, %v1772
  %1904 = vmatpush.bf16.msra.mxu0 %v377
  %1905 = vmatpush.bf16.msra.mxu0 %v374
  %1906 = vmatpush.bf16.msra.mxu0 %v371
  %1907 = vmatpush.bf16.msra.mxu0 %v368
  %1908 = vmatpush.bf16.msra.mxu0 %v365
  %1909 = vmatpush.bf16.msra.mxu0 %v362
  %1910 = vmatpush.bf16.msra.mxu0 %v359
  %1911 = vmatpush.bf16.msra.mxu0 %v356
  %1912 = vmatmul.bf16.gmra.mxu0 %v1903
  %v1913 = vpop.f32.mrf.mxu0
  %v1914 = vadd.f32 0.0, %v1913
  %v1915 = vpop.f32.mrf.mxu0
  %1916 = vdwg.mxu0
  %1917 = vmatpush.bf16.msra.mxu0 %v378
  %1918 = vmatpush.bf16.msra.mxu0 %v375
  %1919 = vmatpush.bf16.msra.mxu0 %v372
  %1920 = vmatpush.bf16.msra.mxu0 %v369
  %1921 = vmatpush.bf16.msra.mxu0 %v366
  %1922 = vmatpush.bf16.msra.mxu0 %v363
  %1923 = vmatpush.bf16.msra.mxu0 %v360
  %1924 = vmatpush.bf16.msra.mxu0 %v357
  %1925 = vmatmul.bf16.gmra.mxu0 %v1903
  %v1926 = vpop.f32.mrf.mxu0
  %v1927 = vadd.f32 0.0, %v1926
  %v1928 = vpop.f32.mrf.mxu0
  %1929 = vdwg.mxu0
  %1930 = vmatpush.bf16.msra.mxu0 %v379
  %1931 = vmatpush.bf16.msra.mxu0 %v376
  %1932 = vmatpush.bf16.msra.mxu0 %v373
  %1933 = vmatpush.bf16.msra.mxu0 %v370
  %1934 = vmatpush.bf16.msra.mxu0 %v367
  %1935 = vmatpush.bf16.msra.mxu0 %v364
  %1936 = vmatpush.bf16.msra.mxu0 %v361
  %1937 = vmatpush.bf16.msra.mxu0 %v358
  %1938 = vmatmul.bf16.gmra.mxu0 %v1903
  %v1939 = vpop.f32.mrf.mxu0
  %v1940 = vadd.f32 0.0, %v1939
  %v1941 = vpop.f32.mrf.mxu0
  %1942 = vdwg.mxu0
  %v1943 = vadd.f32 %v1900, %v1914
  %v1944 = vxor.u32 %v1943, 2147483648
  %v1945 = vmul.f32 %v1944, 1.442695
  %v1946 = vpow.pop %v1945
  %v1947 = vadd.f32 %v1946, 1.0
  %v1948 = vrcp.pop %v1947
  %v1949 = vmul.f32 %v1947, %v1948
  %v1950 = vsub.f32 1.0, %v1949
  %v1951 = vmul.f32 %v1948, %v1950
  %v1952 = vadd.f32 %v1948, %v1951
  %vm1953 = vweird.f32 %v1947
  %vm1954 = vweird.f32 %v1948
  %vm1955 = vmor %vm1953, %vm1954
  %v1956 = vsel %vm1955, %v1948, %v1952
  %v1957 = vand.u32 2147483647, %v1947
  %vm1958 = vcmp.eq.f32.partialorder %v1957, 8.507059e+37
  %v1959 = vand.u32 %v1947, 2147483648
  %v1960 = vor.u32 1.1754944e-38, %v1959
  %v1961 = vsel %vm1958, %v1960, %v1956
  %v1962 = vmul.f32 1.0, %v1961
  %v1963 = vadd.f32 %v1901, %v1927
  %v1964 = vxor.u32 %v1963, 2147483648
  %v1965 = vmul.f32 %v1964, 1.442695
  %v1966 = vpow.pop %v1965
  %v1967 = vadd.f32 %v1966, 1.0
  %v1968 = vrcp.pop %v1967
  %v1969 = vmul.f32 %v1967, %v1968
  %v1970 = vsub.f32 1.0, %v1969
  %v1971 = vmul.f32 %v1968, %v1970
  %v1972 = vadd.f32 %v1968, %v1971
  %vm1973 = vweird.f32 %v1967
  %vm1974 = vweird.f32 %v1968
  %vm1975 = vmor %vm1973, %vm1974
  %v1976 = vsel %vm1975, %v1968, %v1972
  %v1977 = vand.u32 2147483647, %v1967
  %vm1978 = vcmp.eq.f32.partialorder %v1977, 8.507059e+37
  %v1979 = vand.u32 %v1967, 2147483648
  %v1980 = vor.u32 1.1754944e-38, %v1979
  %v1981 = vsel %vm1978, %v1980, %v1976
  %v1982 = vmul.f32 1.0, %v1981
  %v1983 = vadd.f32 %v1940, %v235
  %v1984 = vmul.f32 %v1962, %v1983
  %v1985 = vadd.f32 %v1902, %v1984
  %v1986 = vtanh.pop %v1985
  %v1987 = vsub.f32 1.0, %v1982
  %v1988 = vmul.f32 %v1987, %v1986
  %v1989 = vmul.f32 %v1982, %v1772
  %v1990 = vadd.f32 %v1988, %v1989
  %1991 = vmatpush.bf16.msra.mxu0 %v715
  %1992 = vmatpush.bf16.msra.mxu0 %v712
  %1993 = vmatpush.bf16.msra.mxu0 %v709
  %1994 = vmatpush.bf16.msra.mxu0 %v706
  %1995 = vmatpush.bf16.msra.mxu0 %v703
  %1996 = vmatpush.bf16.msra.mxu0 %v700
  %1997 = vmatpush.bf16.msra.mxu0 %v697
  %1998 = vmatpush.bf16.msra.mxu0 %v694
  %1999 = vmatmul.bf16.gmra.mxu0 %v1903
  %v2000 = vpop.f32.mrf.mxu0
  %v2001 = vadd.f32 %v227, %v2000
  %v2002 = vpop.f32.mrf.mxu0
  %2003 = vdwg.mxu0
  %2004 = vmatpush.bf16.msra.mxu0 %v716
  %2005 = vmatpush.bf16.msra.mxu0 %v713
  %2006 = vmatpush.bf16.msra.mxu0 %v710
  %2007 = vmatpush.bf16.msra.mxu0 %v707
  %2008 = vmatpush.bf16.msra.mxu0 %v704
  %2009 = vmatpush.bf16.msra.mxu0 %v701
  %2010 = vmatpush.bf16.msra.mxu0 %v698
  %2011 = vmatpush.bf16.msra.mxu0 %v695
  %2012 = vmatmul.bf16.gmra.mxu0 %v1903
  %v2013 = vpop.f32.mrf.mxu0
  %v2014 = vadd.f32 %v228, %v2013
  %v2015 = vpop.f32.mrf.mxu0
  %2016 = vdwg.mxu0
  %2017 = vmatpush.bf16.msra.mxu0 %v717
  %2018 = vmatpush.bf16.msra.mxu0 %v714
  %2019 = vmatpush.bf16.msra.mxu0 %v711
  %2020 = vmatpush.bf16.msra.mxu0 %v708
  %2021 = vmatpush.bf16.msra.mxu0 %v705
  %2022 = vmatpush.bf16.msra.mxu0 %v702
  %2023 = vmatpush.bf16.msra.mxu0 %v699
  %2024 = vmatpush.bf16.msra.mxu0 %v696
  %2025 = vmatmul.bf16.gmra.mxu0 %v1903
  %v2026 = vpop.f32.mrf.mxu0
  %v2027 = vadd.f32 %v229, %v2026
  %v2028 = vpop.f32.mrf.mxu0
  %2029 = vdwg.mxu0
  %v2030 = vpack.c.bf16 %v1899, %v1899
  %2031 = vmatpush.bf16.msra.mxu0 %v914
  %2032 = vmatpush.bf16.msra.mxu0 %v911
  %2033 = vmatpush.bf16.msra.mxu0 %v908
  %2034 = vmatpush.bf16.msra.mxu0 %v905
  %2035 = vmatpush.bf16.msra.mxu0 %v902
  %2036 = vmatpush.bf16.msra.mxu0 %v899
  %2037 = vmatpush.bf16.msra.mxu0 %v896
  %2038 = vmatpush.bf16.msra.mxu0 %v893
  %2039 = vmatmul.bf16.gmra.mxu0 %v2030
  %v2040 = vpop.f32.mrf.mxu0
  %v2041 = vadd.f32 0.0, %v2040
  %v2042 = vpop.f32.mrf.mxu0
  %2043 = vdwg.mxu0
  %2044 = vmatpush.bf16.msra.mxu0 %v915
  %2045 = vmatpush.bf16.msra.mxu0 %v912
  %2046 = vmatpush.bf16.msra.mxu0 %v909
  %2047 = vmatpush.bf16.msra.mxu0 %v906
  %2048 = vmatpush.bf16.msra.mxu0 %v903
  %2049 = vmatpush.bf16.msra.mxu0 %v900
  %2050 = vmatpush.bf16.msra.mxu0 %v897
  %2051 = vmatpush.bf16.msra.mxu0 %v894
  %2052 = vmatmul.bf16.gmra.mxu0 %v2030
  %v2053 = vpop.f32.mrf.mxu0
  %v2054 = vadd.f32 0.0, %v2053
  %v2055 = vpop.f32.mrf.mxu0
  %2056 = vdwg.mxu0
  %2057 = vmatpush.bf16.msra.mxu0 %v916
  %2058 = vmatpush.bf16.msra.mxu0 %v913
  %2059 = vmatpush.bf16.msra.mxu0 %v910
  %2060 = vmatpush.bf16.msra.mxu0 %v907
  %2061 = vmatpush.bf16.msra.mxu0 %v904
  %2062 = vmatpush.bf16.msra.mxu0 %v901
  %2063 = vmatpush.bf16.msra.mxu0 %v898
  %2064 = vmatpush.bf16.msra.mxu0 %v895
  %2065 = vmatmul.bf16.gmra.mxu0 %v2030
  %v2066 = vpop.f32.mrf.mxu0
  %v2067 = vadd.f32 0.0, %v2066
  %v2068 = vpop.f32.mrf.mxu0
  %2069 = vdwg.mxu0
  %v2070 = vadd.f32 %v2001, %v2041
  %v2071 = vxor.u32 %v2070, 2147483648
  %v2072 = vmul.f32 %v2071, 1.442695
  %v2073 = vpow.pop %v2072
  %v2074 = vadd.f32 %v2073, 1.0
  %v2075 = vrcp.pop %v2074
  %v2076 = vmul.f32 %v2074, %v2075
  %v2077 = vsub.f32 1.0, %v2076
  %v2078 = vmul.f32 %v2075, %v2077
  %v2079 = vadd.f32 %v2075, %v2078
  %vm2080 = vweird.f32 %v2074
  %vm2081 = vweird.f32 %v2075
  %vm2082 = vmor %vm2080, %vm2081
  %v2083 = vsel %vm2082, %v2075, %v2079
  %v2084 = vand.u32 2147483647, %v2074
  %vm2085 = vcmp.eq.f32.partialorder %v2084, 8.507059e+37
  %v2086 = vand.u32 %v2074, 2147483648
  %v2087 = vor.u32 1.1754944e-38, %v2086
  %v2088 = vsel %vm2085, %v2087, %v2083
  %v2089 = vmul.f32 1.0, %v2088
  %v2090 = vadd.f32 %v2014, %v2054
  %v2091 = vxor.u32 %v2090, 2147483648
  %v2092 = vmul.f32 %v2091, 1.442695
  %v2093 = vpow.pop %v2092
  %v2094 = vadd.f32 %v2093, 1.0
  %v2095 = vrcp.pop %v2094
  %v2096 = vmul.f32 %v2094, %v2095
  %v2097 = vsub.f32 1.0, %v2096
  %v2098 = vmul.f32 %v2095, %v2097
  %v2099 = vadd.f32 %v2095, %v2098
  %vm2100 = vweird.f32 %v2094
  %vm2101 = vweird.f32 %v2095
  %vm2102 = vmor %vm2100, %vm2101
  %v2103 = vsel %vm2102, %v2095, %v2099
  %v2104 = vand.u32 2147483647, %v2094
  %vm2105 = vcmp.eq.f32.partialorder %v2104, 8.507059e+37
  %v2106 = vand.u32 %v2094, 2147483648
  %v2107 = vor.u32 1.1754944e-38, %v2106
  %v2108 = vsel %vm2105, %v2107, %v2103
  %v2109 = vmul.f32 1.0, %v2108
  %v2110 = vadd.f32 %v2067, %v239
  %v2111 = vmul.f32 %v2089, %v2110
  %v2112 = vadd.f32 %v2027, %v2111
  %v2113 = vtanh.pop %v2112
  %v2114 = vsub.f32 1.0, %v2109
  %v2115 = vmul.f32 %v2114, %v2113
  %v2116 = vmul.f32 %v2109, %v1899
  %v2117 = vadd.f32 %v2115, %v2116
  %v2118 = vld [vmem:[#allocation2 + $0xa8] sm:$0xff]
  %v2119 = vld [vmem:[#allocation2 + $0xb0] sm:$0xff]
  %v2120 = vld [vmem:[#allocation2 + $0xb8] sm:$0xff]
  %v2121 = vpack.c.bf16 %v1990, %v1990
  %2122 = vmatpush.bf16.msra.mxu0 %v377
  %2123 = vmatpush.bf16.msra.mxu0 %v374
  %2124 = vmatpush.bf16.msra.mxu0 %v371
  %2125 = vmatpush.bf16.msra.mxu0 %v368
  %2126 = vmatpush.bf16.msra.mxu0 %v365
  %2127 = vmatpush.bf16.msra.mxu0 %v362
  %2128 = vmatpush.bf16.msra.mxu0 %v359
  %2129 = vmatpush.bf16.msra.mxu0 %v356
  %2130 = vmatmul.bf16.gmra.mxu0 %v2121
  %v2131 = vpop.f32.mrf.mxu0
  %v2132 = vadd.f32 0.0, %v2131
  %v2133 = vpop.f32.mrf.mxu0
  %2134 = vdwg.mxu0
  %2135 = vmatpush.bf16.msra.mxu0 %v378
  %2136 = vmatpush.bf16.msra.mxu0 %v375
  %2137 = vmatpush.bf16.msra.mxu0 %v372
  %2138 = vmatpush.bf16.msra.mxu0 %v369
  %2139 = vmatpush.bf16.msra.mxu0 %v366
  %2140 = vmatpush.bf16.msra.mxu0 %v363
  %2141 = vmatpush.bf16.msra.mxu0 %v360
  %2142 = vmatpush.bf16.msra.mxu0 %v357
  %2143 = vmatmul.bf16.gmra.mxu0 %v2121
  %v2144 = vpop.f32.mrf.mxu0
  %v2145 = vadd.f32 0.0, %v2144
  %v2146 = vpop.f32.mrf.mxu0
  %2147 = vdwg.mxu0
  %2148 = vmatpush.bf16.msra.mxu0 %v379
  %2149 = vmatpush.bf16.msra.mxu0 %v376
  %2150 = vmatpush.bf16.msra.mxu0 %v373
  %2151 = vmatpush.bf16.msra.mxu0 %v370
  %2152 = vmatpush.bf16.msra.mxu0 %v367
  %2153 = vmatpush.bf16.msra.mxu0 %v364
  %2154 = vmatpush.bf16.msra.mxu0 %v361
  %2155 = vmatpush.bf16.msra.mxu0 %v358
  %2156 = vmatmul.bf16.gmra.mxu0 %v2121
  %v2157 = vpop.f32.mrf.mxu0
  %v2158 = vadd.f32 0.0, %v2157
  %v2159 = vpop.f32.mrf.mxu0
  %2160 = vdwg.mxu0
  %v2161 = vadd.f32 %v2118, %v2132
  %v2162 = vxor.u32 %v2161, 2147483648
  %v2163 = vmul.f32 %v2162, 1.442695
  %v2164 = vpow.pop %v2163
  %v2165 = vadd.f32 %v2164, 1.0
  %v2166 = vrcp.pop %v2165
  %v2167 = vmul.f32 %v2165, %v2166
  %v2168 = vsub.f32 1.0, %v2167
  %v2169 = vmul.f32 %v2166, %v2168
  %v2170 = vadd.f32 %v2166, %v2169
  %vm2171 = vweird.f32 %v2165
  %vm2172 = vweird.f32 %v2166
  %vm2173 = vmor %vm2171, %vm2172
  %v2174 = vsel %vm2173, %v2166, %v2170
  %v2175 = vand.u32 2147483647, %v2165
  %vm2176 = vcmp.eq.f32.partialorder %v2175, 8.507059e+37
  %v2177 = vand.u32 %v2165, 2147483648
  %v2178 = vor.u32 1.1754944e-38, %v2177
  %v2179 = vsel %vm2176, %v2178, %v2174
  %v2180 = vmul.f32 1.0, %v2179
  %v2181 = vadd.f32 %v2119, %v2145
  %v2182 = vxor.u32 %v2181, 2147483648
  %v2183 = vmul.f32 %v2182, 1.442695
  %v2184 = vpow.pop %v2183
  %v2185 = vadd.f32 %v2184, 1.0
  %v2186 = vrcp.pop %v2185
  %v2187 = vmul.f32 %v2185, %v2186
  %v2188 = vsub.f32 1.0, %v2187
  %v2189 = vmul.f32 %v2186, %v2188
  %v2190 = vadd.f32 %v2186, %v2189
  %vm2191 = vweird.f32 %v2185
  %vm2192 = vweird.f32 %v2186
  %vm2193 = vmor %vm2191, %vm2192
  %v2194 = vsel %vm2193, %v2186, %v2190
  %v2195 = vand.u32 2147483647, %v2185
  %vm2196 = vcmp.eq.f32.partialorder %v2195, 8.507059e+37
  %v2197 = vand.u32 %v2185, 2147483648
  %v2198 = vor.u32 1.1754944e-38, %v2197
  %v2199 = vsel %vm2196, %v2198, %v2194
  %v2200 = vmul.f32 1.0, %v2199
  %v2201 = vadd.f32 %v2158, %v235
  %v2202 = vmul.f32 %v2180, %v2201
  %v2203 = vadd.f32 %v2120, %v2202
  %v2204 = vtanh.pop %v2203
  %v2205 = vsub.f32 1.0, %v2200
  %v2206 = vmul.f32 %v2205, %v2204
  %v2207 = vmul.f32 %v2200, %v1990
  %v2208 = vadd.f32 %v2206, %v2207
  %2209 = vmatpush.bf16.msra.mxu0 %v715
  %2210 = vmatpush.bf16.msra.mxu0 %v712
  %2211 = vmatpush.bf16.msra.mxu0 %v709
  %2212 = vmatpush.bf16.msra.mxu0 %v706
  %2213 = vmatpush.bf16.msra.mxu0 %v703
  %2214 = vmatpush.bf16.msra.mxu0 %v700
  %2215 = vmatpush.bf16.msra.mxu0 %v697
  %2216 = vmatpush.bf16.msra.mxu0 %v694
  %2217 = vmatmul.bf16.gmra.mxu0 %v2121
  %v2218 = vpop.f32.mrf.mxu0
  %v2219 = vadd.f32 %v227, %v2218
  %v2220 = vpop.f32.mrf.mxu0
  %2221 = vdwg.mxu0
  %2222 = vmatpush.bf16.msra.mxu0 %v716
  %2223 = vmatpush.bf16.msra.mxu0 %v713
  %2224 = vmatpush.bf16.msra.mxu0 %v710
  %2225 = vmatpush.bf16.msra.mxu0 %v707
  %2226 = vmatpush.bf16.msra.mxu0 %v704
  %2227 = vmatpush.bf16.msra.mxu0 %v701
  %2228 = vmatpush.bf16.msra.mxu0 %v698
  %2229 = vmatpush.bf16.msra.mxu0 %v695
  %2230 = vmatmul.bf16.gmra.mxu0 %v2121
  %v2231 = vpop.f32.mrf.mxu0
  %v2232 = vadd.f32 %v228, %v2231
  %v2233 = vpop.f32.mrf.mxu0
  %2234 = vdwg.mxu0
  %2235 = vmatpush.bf16.msra.mxu0 %v717
  %2236 = vmatpush.bf16.msra.mxu0 %v714
  %2237 = vmatpush.bf16.msra.mxu0 %v711
  %2238 = vmatpush.bf16.msra.mxu0 %v708
  %2239 = vmatpush.bf16.msra.mxu0 %v705
  %2240 = vmatpush.bf16.msra.mxu0 %v702
  %2241 = vmatpush.bf16.msra.mxu0 %v699
  %2242 = vmatpush.bf16.msra.mxu0 %v696
  %2243 = vmatmul.bf16.gmra.mxu0 %v2121
  %v2244 = vpop.f32.mrf.mxu0
  %v2245 = vadd.f32 %v229, %v2244
  %v2246 = vpop.f32.mrf.mxu0
  %2247 = vdwg.mxu0
  %v2248 = vpack.c.bf16 %v2117, %v2117
  %2249 = vmatpush.bf16.msra.mxu0 %v914
  %2250 = vmatpush.bf16.msra.mxu0 %v911
  %2251 = vmatpush.bf16.msra.mxu0 %v908
  %2252 = vmatpush.bf16.msra.mxu0 %v905
  %2253 = vmatpush.bf16.msra.mxu0 %v902
  %2254 = vmatpush.bf16.msra.mxu0 %v899
  %2255 = vmatpush.bf16.msra.mxu0 %v896
  %2256 = vmatpush.bf16.msra.mxu0 %v893
  %2257 = vmatmul.bf16.gmra.mxu0 %v2248
  %v2258 = vpop.f32.mrf.mxu0
  %v2259 = vadd.f32 0.0, %v2258
  %v2260 = vpop.f32.mrf.mxu0
  %2261 = vdwg.mxu0
  %2262 = vmatpush.bf16.msra.mxu0 %v915
  %2263 = vmatpush.bf16.msra.mxu0 %v912
  %2264 = vmatpush.bf16.msra.mxu0 %v909
  %2265 = vmatpush.bf16.msra.mxu0 %v906
  %2266 = vmatpush.bf16.msra.mxu0 %v903
  %2267 = vmatpush.bf16.msra.mxu0 %v900
  %2268 = vmatpush.bf16.msra.mxu0 %v897
  %2269 = vmatpush.bf16.msra.mxu0 %v894
  %2270 = vmatmul.bf16.gmra.mxu0 %v2248
  %v2271 = vpop.f32.mrf.mxu0
  %v2272 = vadd.f32 0.0, %v2271
  %v2273 = vpop.f32.mrf.mxu0
  %2274 = vdwg.mxu0
  %2275 = vmatpush.bf16.msra.mxu0 %v916
  %2276 = vmatpush.bf16.msra.mxu0 %v913
  %2277 = vmatpush.bf16.msra.mxu0 %v910
  %2278 = vmatpush.bf16.msra.mxu0 %v907
  %2279 = vmatpush.bf16.msra.mxu0 %v904
  %2280 = vmatpush.bf16.msra.mxu0 %v901
  %2281 = vmatpush.bf16.msra.mxu0 %v898
  %2282 = vmatpush.bf16.msra.mxu0 %v895
  %2283 = vmatmul.bf16.gmra.mxu0 %v2248
  %v2284 = vpop.f32.mrf.mxu0
  %v2285 = vadd.f32 0.0, %v2284
  %v2286 = vpop.f32.mrf.mxu0
  %2287 = vdwg.mxu0
  %v2288 = vadd.f32 %v2219, %v2259
  %v2289 = vxor.u32 %v2288, 2147483648
  %v2290 = vmul.f32 %v2289, 1.442695
  %v2291 = vpow.pop %v2290
  %v2292 = vadd.f32 %v2291, 1.0
  %v2293 = vrcp.pop %v2292
  %v2294 = vmul.f32 %v2292, %v2293
  %v2295 = vsub.f32 1.0, %v2294
  %v2296 = vmul.f32 %v2293, %v2295
  %v2297 = vadd.f32 %v2293, %v2296
  %vm2298 = vweird.f32 %v2292
  %vm2299 = vweird.f32 %v2293
  %vm2300 = vmor %vm2298, %vm2299
  %v2301 = vsel %vm2300, %v2293, %v2297
  %v2302 = vand.u32 2147483647, %v2292
  %vm2303 = vcmp.eq.f32.partialorder %v2302, 8.507059e+37
  %v2304 = vand.u32 %v2292, 2147483648
  %v2305 = vor.u32 1.1754944e-38, %v2304
  %v2306 = vsel %vm2303, %v2305, %v2301
  %v2307 = vmul.f32 1.0, %v2306
  %v2308 = vadd.f32 %v2232, %v2272
  %v2309 = vxor.u32 %v2308, 2147483648
  %v2310 = vmul.f32 %v2309, 1.442695
  %v2311 = vpow.pop %v2310
  %v2312 = vadd.f32 %v2311, 1.0
  %v2313 = vrcp.pop %v2312
  %v2314 = vmul.f32 %v2312, %v2313
  %v2315 = vsub.f32 1.0, %v2314
  %v2316 = vmul.f32 %v2313, %v2315
  %v2317 = vadd.f32 %v2313, %v2316
  %vm2318 = vweird.f32 %v2312
  %vm2319 = vweird.f32 %v2313
  %vm2320 = vmor %vm2318, %vm2319
  %v2321 = vsel %vm2320, %v2313, %v2317
  %v2322 = vand.u32 2147483647, %v2312
  %vm2323 = vcmp.eq.f32.partialorder %v2322, 8.507059e+37
  %v2324 = vand.u32 %v2312, 2147483648
  %v2325 = vor.u32 1.1754944e-38, %v2324
  %v2326 = vsel %vm2323, %v2325, %v2321
  %v2327 = vmul.f32 1.0, %v2326
  %v2328 = vadd.f32 %v2285, %v239
  %v2329 = vmul.f32 %v2307, %v2328
  %v2330 = vadd.f32 %v2245, %v2329
  %v2331 = vtanh.pop %v2330
  %v2332 = vsub.f32 1.0, %v2327
  %v2333 = vmul.f32 %v2332, %v2331
  %v2334 = vmul.f32 %v2327, %v2117
  %v2335 = vadd.f32 %v2333, %v2334
  %v2336 = vpack.c.bf16 %v2208, %v2208
  %2337 = vmatpush.bf16.msra.mxu0 %v715
  %2338 = vmatpush.bf16.msra.mxu0 %v712
  %2339 = vmatpush.bf16.msra.mxu0 %v709
  %2340 = vmatpush.bf16.msra.mxu0 %v706
  %2341 = vmatpush.bf16.msra.mxu0 %v703
  %2342 = vmatpush.bf16.msra.mxu0 %v700
  %2343 = vmatpush.bf16.msra.mxu0 %v697
  %2344 = vmatpush.bf16.msra.mxu0 %v694
  %2345 = vmatmul.bf16.gmra.mxu0 %v2336
  %v2346 = vpop.f32.mrf.mxu0
  %v2347 = vadd.f32 %v227, %v2346
  %v2348 = vpop.f32.mrf.mxu0
  %2349 = vdwg.mxu0
  %2350 = vmatpush.bf16.msra.mxu0 %v716
  %2351 = vmatpush.bf16.msra.mxu0 %v713
  %2352 = vmatpush.bf16.msra.mxu0 %v710
  %2353 = vmatpush.bf16.msra.mxu0 %v707
  %2354 = vmatpush.bf16.msra.mxu0 %v704
  %2355 = vmatpush.bf16.msra.mxu0 %v701
  %2356 = vmatpush.bf16.msra.mxu0 %v698
  %2357 = vmatpush.bf16.msra.mxu0 %v695
  %2358 = vmatmul.bf16.gmra.mxu0 %v2336
  %v2359 = vpop.f32.mrf.mxu0
  %v2360 = vadd.f32 %v228, %v2359
  %v2361 = vpop.f32.mrf.mxu0
  %2362 = vdwg.mxu0
  %2363 = vmatpush.bf16.msra.mxu0 %v717
  %2364 = vmatpush.bf16.msra.mxu0 %v714
  %2365 = vmatpush.bf16.msra.mxu0 %v711
  %2366 = vmatpush.bf16.msra.mxu0 %v708
  %2367 = vmatpush.bf16.msra.mxu0 %v705
  %2368 = vmatpush.bf16.msra.mxu0 %v702
  %2369 = vmatpush.bf16.msra.mxu0 %v699
  %2370 = vmatpush.bf16.msra.mxu0 %v696
  %2371 = vmatmul.bf16.gmra.mxu0 %v2336
  %v2372 = vpop.f32.mrf.mxu0
  %v2373 = vadd.f32 %v229, %v2372
  %v2374 = vpop.f32.mrf.mxu0
  %2375 = vdwg.mxu0
  %v2376 = vpack.c.bf16 %v2335, %v2335
  %2377 = vmatpush.bf16.msra.mxu0 %v914
  %2378 = vmatpush.bf16.msra.mxu0 %v911
  %2379 = vmatpush.bf16.msra.mxu0 %v908
  %2380 = vmatpush.bf16.msra.mxu0 %v905
  %2381 = vmatpush.bf16.msra.mxu0 %v902
  %2382 = vmatpush.bf16.msra.mxu0 %v899
  %2383 = vmatpush.bf16.msra.mxu0 %v896
  %2384 = vmatpush.bf16.msra.mxu0 %v893
  %2385 = vmatmul.bf16.gmra.mxu0 %v2376
  %v2386 = vpop.f32.mrf.mxu0
  %v2387 = vadd.f32 0.0, %v2386
  %v2388 = vpop.f32.mrf.mxu0
  %2389 = vdwg.mxu0
  %2390 = vmatpush.bf16.msra.mxu0 %v915
  %2391 = vmatpush.bf16.msra.mxu0 %v912
  %2392 = vmatpush.bf16.msra.mxu0 %v909
  %2393 = vmatpush.bf16.msra.mxu0 %v906
  %2394 = vmatpush.bf16.msra.mxu0 %v903
  %2395 = vmatpush.bf16.msra.mxu0 %v900
  %2396 = vmatpush.bf16.msra.mxu0 %v897
  %2397 = vmatpush.bf16.msra.mxu0 %v894
  %2398 = vmatmul.bf16.gmra.mxu0 %v2376
  %v2399 = vpop.f32.mrf.mxu0
  %v2400 = vadd.f32 0.0, %v2399
  %v2401 = vpop.f32.mrf.mxu0
  %2402 = vdwg.mxu0
  %2403 = vmatpush.bf16.msra.mxu0 %v916
  %2404 = vmatpush.bf16.msra.mxu0 %v913
  %2405 = vmatpush.bf16.msra.mxu0 %v910
  %2406 = vmatpush.bf16.msra.mxu0 %v907
  %2407 = vmatpush.bf16.msra.mxu0 %v904
  %2408 = vmatpush.bf16.msra.mxu0 %v901
  %2409 = vmatpush.bf16.msra.mxu0 %v898
  %2410 = vmatpush.bf16.msra.mxu0 %v895
  %2411 = vmatmul.bf16.gmra.mxu0 %v2376
  %v2412 = vpop.f32.mrf.mxu0
  %v2413 = vadd.f32 0.0, %v2412
  %v2414 = vpop.f32.mrf.mxu0
  %2415 = vdwg.mxu0
  %v2416 = vadd.f32 %v2347, %v2387
  %v2417 = vxor.u32 %v2416, 2147483648
  %v2418 = vmul.f32 %v2417, 1.442695
  %v2419 = vpow.pop %v2418
  %v2420 = vadd.f32 %v2419, 1.0
  %v2421 = vrcp.pop %v2420
  %v2422 = vmul.f32 %v2420, %v2421
  %v2423 = vsub.f32 1.0, %v2422
  %v2424 = vmul.f32 %v2421, %v2423
  %v2425 = vadd.f32 %v2421, %v2424
  %vm2426 = vweird.f32 %v2420
  %vm2427 = vweird.f32 %v2421
  %vm2428 = vmor %vm2426, %vm2427
  %v2429 = vsel %vm2428, %v2421, %v2425
  %v2430 = vand.u32 2147483647, %v2420
  %vm2431 = vcmp.eq.f32.partialorder %v2430, 8.507059e+37
  %v2432 = vand.u32 %v2420, 2147483648
  %v2433 = vor.u32 1.1754944e-38, %v2432
  %v2434 = vsel %vm2431, %v2433, %v2429
  %v2435 = vmul.f32 1.0, %v2434
  %v2436 = vadd.f32 %v2360, %v2400
  %v2437 = vxor.u32 %v2436, 2147483648
  %v2438 = vmul.f32 %v2437, 1.442695
  %v2439 = vpow.pop %v2438
  %v2440 = vadd.f32 %v2439, 1.0
  %v2441 = vrcp.pop %v2440
  %v2442 = vmul.f32 %v2440, %v2441
  %v2443 = vsub.f32 1.0, %v2442
  %v2444 = vmul.f32 %v2441, %v2443
  %v2445 = vadd.f32 %v2441, %v2444
  %vm2446 = vweird.f32 %v2440
  %vm2447 = vweird.f32 %v2441
  %vm2448 = vmor %vm2446, %vm2447
  %v2449 = vsel %vm2448, %v2441, %v2445
  %v2450 = vand.u32 2147483647, %v2440
  %vm2451 = vcmp.eq.f32.partialorder %v2450, 8.507059e+37
  %v2452 = vand.u32 %v2440, 2147483648
  %v2453 = vor.u32 1.1754944e-38, %v2452
  %v2454 = vsel %vm2451, %v2453, %v2449
  %v2455 = vmul.f32 1.0, %v2454
  %v2456 = vadd.f32 %v2413, %v239
  %v2457 = vmul.f32 %v2435, %v2456
  %v2458 = vadd.f32 %v2373, %v2457
  %v2459 = vtanh.pop %v2458
  %v2460 = vsub.f32 1.0, %v2455
  %v2461 = vmul.f32 %v2460, %v2459
  %v2462 = vmul.f32 %v2455, %v2335
  %v2463 = vadd.f32 %v2461, %v2462
  %v2464 = vpack.c.bf16 %v2463, %v2463
  %v2465 = vld [vmem:[%s9] sm:$0xf]
  %v2466 = vld [vmem:[%s9 + $0x4] sm:$0xf]
  %v2467 = vld [vmem:[%s9 + $0x8] sm:$0xf]
  %v2468 = vld [vmem:[%s9 + $0xc] sm:$0xf]
  %v2469 = vld [vmem:[%s9 + $0x10] sm:$0xf]
  %v2470 = vld [vmem:[%s9 + $0x14] sm:$0xf]
  %v2471 = vld [vmem:[%s9 + $0x18] sm:$0xf]
  %v2472 = vld [vmem:[%s9 + $0x1c] sm:$0xf]
  %v2473 = vld [vmem:[%s9 + $0x20] sm:$0xf]
  %v2474 = vld [vmem:[%s9 + $0x24] sm:$0xf]
  %v2475 = vld [vmem:[%s9 + $0x28] sm:$0xf]
  %v2476 = vld [vmem:[%s9 + $0x2c] sm:$0xf]
  %v2477 = vld [vmem:[%s9 + $0x30] sm:$0xf]
  %v2478 = vld [vmem:[%s9 + $0x34] sm:$0xf]
  %v2479 = vld [vmem:[%s9 + $0x38] sm:$0xf]
  %v2480 = vld [vmem:[%s9 + $0x3c] sm:$0xf]
  %v2481 = vld [vmem:[%s10] sm:$0x1]
  %v2483 = vperm.slane %v2481, 0
  %v2501 = vunpack.c.l.b16 %v2465
  %v2502 = vunpack.c.l.b16 %v2466
  %v2503 = vunpack.c.l.b16 %v2467
  %v2504 = vunpack.c.l.b16 %v2468
  %v2505 = vunpack.c.l.b16 %v2469
  %v2506 = vunpack.c.l.b16 %v2470
  %v2507 = vunpack.c.l.b16 %v2471
  %v2508 = vunpack.c.l.b16 %v2472
  %v2509 = vunpack.c.l.b16 %v2473
  %v2510 = vunpack.c.l.b16 %v2474
  %v2511 = vunpack.c.l.b16 %v2475
  %v2512 = vunpack.c.l.b16 %v2476
  %v2513 = vunpack.c.l.b16 %v2477
  %v2514 = vunpack.c.l.b16 %v2478
  %v2515 = vunpack.c.l.b16 %v2479
  %v2516 = vunpack.c.l.b16 %v2480
  %v2517 = vpack.c.b16 %v2502, %v2501
  %v2518 = vpack.c.b16 %v2504, %v2503
  %v2519 = vpack.c.b16 %v2506, %v2505
  %v2520 = vpack.c.b16 %v2508, %v2507
  %v2521 = vpack.c.b16 %v2510, %v2509
  %v2522 = vpack.c.b16 %v2512, %v2511
  %v2523 = vpack.c.b16 %v2514, %v2513
  %v2524 = vpack.c.b16 %v2516, %v2515
  %2533 = vmatpush.bf16.msra.mxu0 %v2524
  %2534 = vmatpush.bf16.msra.mxu0 %v2523
  %2535 = vmatpush.bf16.msra.mxu0 %v2522
  %2536 = vmatpush.bf16.msra.mxu0 %v2521
  %2537 = vmatpush.bf16.msra.mxu0 %v2520
  %2538 = vmatpush.bf16.msra.mxu0 %v2519
  %2539 = vmatpush.bf16.msra.mxu0 %v2518
  %2540 = vmatpush.bf16.msra.mxu0 %v2517
  %2541 = vmatmul.bf16.gmra.mxu0 %v2464
  %v2542 = vpop.f32.mrf.mxu0
  %v2543 = vadd.f32 %v2483, %v2542
  %v2544 = vpop.f32.mrf.mxu0
  %2545 = vdwg.mxu0
  %v2546 = vmax.f32 %v2543, 0.0
  %v2547 = vpack.c.bf16 %v2546, %v2546
  %v2548 = vld [vmem:[%s11] sm:$0xf]
  %v2549 = vld [vmem:[%s11 + $0x4] sm:$0xf]
  %v2550 = vld [vmem:[%s11 + $0x8] sm:$0xf]
  %v2551 = vld [vmem:[%s11 + $0xc] sm:$0xf]
  %v2552 = vld [vmem:[%s11 + $0x10] sm:$0xf]
  %v2553 = vld [vmem:[%s11 + $0x14] sm:$0xf]
  %v2554 = vld [vmem:[%s11 + $0x18] sm:$0xf]
  %v2555 = vld [vmem:[%s11 + $0x1c] sm:$0xf]
  %v2556 = vld [vmem:[%s11 + $0x20] sm:$0xf]
  %v2557 = vld [vmem:[%s11 + $0x24] sm:$0xf]
  %v2558 = vld [vmem:[%s11 + $0x28] sm:$0xf]
  %v2559 = vld [vmem:[%s11 + $0x2c] sm:$0xf]
  %v2560 = vld [vmem:[%s11 + $0x30] sm:$0xf]
  %v2561 = vld [vmem:[%s11 + $0x34] sm:$0xf]
  %v2562 = vld [vmem:[%s11 + $0x38] sm:$0xf]
  %v2563 = vld [vmem:[%s11 + $0x3c] sm:$0xf]
  %v2564 = vld [vmem:[%s12] sm:$0x1]
  %v2566 = vperm.slane %v2564, 0
  %v2584 = vunpack.c.l.b16 %v2548
  %v2585 = vunpack.c.l.b16 %v2549
  %v2586 = vunpack.c.l.b16 %v2550
  %v2587 = vunpack.c.l.b16 %v2551
  %v2588 = vunpack.c.l.b16 %v2552
  %v2589 = vunpack.c.l.b16 %v2553
  %v2590 = vunpack.c.l.b16 %v2554
  %v2591 = vunpack.c.l.b16 %v2555
  %v2592 = vunpack.c.l.b16 %v2556
  %v2593 = vunpack.c.l.b16 %v2557
  %v2594 = vunpack.c.l.b16 %v2558
  %v2595 = vunpack.c.l.b16 %v2559
  %v2596 = vunpack.c.l.b16 %v2560
  %v2597 = vunpack.c.l.b16 %v2561
  %v2598 = vunpack.c.l.b16 %v2562
  %v2599 = vunpack.c.l.b16 %v2563
  %v2600 = vpack.c.b16 %v2585, %v2584
  %v2601 = vpack.c.b16 %v2587, %v2586
  %v2602 = vpack.c.b16 %v2589, %v2588
  %v2603 = vpack.c.b16 %v2591, %v2590
  %v2604 = vpack.c.b16 %v2593, %v2592
  %v2605 = vpack.c.b16 %v2595, %v2594
  %v2606 = vpack.c.b16 %v2597, %v2596
  %v2607 = vpack.c.b16 %v2599, %v2598
  %2616 = vmatpush.bf16.msra.mxu0 %v2607
  %2617 = vmatpush.bf16.msra.mxu0 %v2606
  %2618 = vmatpush.bf16.msra.mxu0 %v2605
  %2619 = vmatpush.bf16.msra.mxu0 %v2604
  %2620 = vmatpush.bf16.msra.mxu0 %v2603
  %2621 = vmatpush.bf16.msra.mxu0 %v2602
  %2622 = vmatpush.bf16.msra.mxu0 %v2601
  %2623 = vmatpush.bf16.msra.mxu0 %v2600
  %2624 = vmatmul.bf16.gmra.mxu0 %v2547
  %v2625 = vpop.f32.mrf.mxu0
  %v2626 = vadd.f32 %v2566, %v2625
  %v2627 = vpop.f32.mrf.mxu0
  %2628 = vdwg.mxu0
  %2629 = vst [vmem:[%s13] sm:$0xff] %v2626
  // Predicated region
  $region54: #{gru_forward.1} parent=0 // pred_check
    _
  $region55: #{gru_forward.1} parent=0 // pred_check_branch
    %2631 = sbr.rel (0) target = $region57
  $region56: #{gru_forward.1} parent=0 // pred_region
    _
  $region57: #{gru_forward.1} parent=0 // pred_fallthru
    _
  // Predicated region
  $region58: #{gru_forward.1} parent=0 // pred_check
    _
  $region59: #{gru_forward.1} parent=0 // pred_check_branch
    %2633 = sbr.rel (0) target = $region61
  $region60: #{gru_forward.1} parent=0 // pred_region
    _
  $region61: #{gru_forward.1} parent=0 // pred_fallthru
    _

</llo_original>
